<compile_context>
chip_gen: v7x
topology: tpu7x:2x2x1
jax: 0.10.0
libtpu: 0.0.40
codegen_flags: <defaults>
</compile_context>

<pallas_src>
import functools

import jax
import jax.numpy as jnp
from jax.experimental import pallas as pl
from jax.experimental.pallas import tpu as pltpu

# ----------------------------- model hyperparams (small, consistent) ---------
N_EMBD = 32
N_HEAD = 4
N_LAYER = 2
BLOCK_SIZE = 16          # max context length
VOCAB_SIZE = 65
VOCAB_PAD = 128          # lane-dense padded vocab for the LM head output
LN_EPS = 1e-5            # torch.nn.LayerNorm default
NEG_BIG = -1e30          # finite "-inf" for masking (NaN-safe)


def _layernorm(v, w, b):
    mu = jnp.mean(v, axis=-1, keepdims=True)
    var = jnp.mean((v - mu) ** 2, axis=-1, keepdims=True)
    return (v - mu) * jax.lax.rsqrt(var + LN_EPS) * w + b


# ----------------------------- fused Pallas kernel ----------------------------
def fused_transformer_kernel(n_layer, n_head,
                             idx_ref, tok_tbl_ref, pos_tbl_ref, *rest):
    layer_refs = rest[:11 * n_layer]
    lnf_w_ref, lnf_b_ref, wlm_ref, blm_ref, o_ref = rest[11 * n_layer:]

    N = idx_ref.shape[0]                 # N = B*T flattened tokens
    T, C = pos_tbl_ref.shape
    B = N // T
    V_pad = tok_tbl_ref.shape[0]
    hs = C // n_head
    scale = C ** (-0.5)                  # NanoGPT scales by full embedding dim
    bf16 = jnp.bfloat16

    # ---- token embedding: gather == one-hot matmul (MXU, fully fused) -------
    idx_col = idx_ref[...]                                           # (N,1) i32
    v_iota = jax.lax.broadcasted_iota(jnp.int32, (N, V_pad), 1)
    tok_oh = (idx_col == v_iota).astype(jnp.float32)                 # (N,V_pad)
    tok_emb = jnp.dot(tok_oh, tok_tbl_ref[...],
                      preferred_element_type=jnp.float32)            # (N, C)

    # ---- position embedding: rows repeat every T tokens -> broadcast add ----
    x = (tok_emb.reshape(B, T, C) + pos_tbl_ref[...][None, :, :]).reshape(N, C)

    # ---- additive causal mask (T, T), built once, shared everywhere ---------
    row = jax.lax.broadcasted_iota(jnp.int32, (T, T), 0)
    col = jax.lax.broadcasted_iota(jnp.int32, (T, T), 1)
    mask_add = jnp.where(row >= col, 0.0, NEG_BIG).astype(jnp.float32)

    for li in range(n_layer):
        (ln1_w, ln1_b, wqkv, wproj, bproj,
         ln2_w, ln2_b, w1, b1, w2, b2) = layer_refs[11 * li:11 * (li + 1)]

        # ---- x = x + MultiHeadAttention(LayerNorm1(x)) ----
        h = _layernorm(x, ln1_w[...], ln1_b[...])                    # f32
        qkv = jnp.dot(h.astype(bf16), wqkv[...],
                      preferred_element_type=jnp.float32)            # (N, 3C)
        q_bf = qkv[:, :C].astype(bf16)
        k_bf = qkv[:, C:2 * C].astype(bf16)
        v_bf = qkv[:, 2 * C:].astype(bf16)
        wproj_v = wproj[...]                                         # (C,C) bf16

        attn = jnp.zeros((N, C), jnp.float32)
        for hh in range(n_head):                    # static unroll over heads
            sl = slice(hh * hs, (hh + 1) * hs)
            qh = q_bf[:, sl].reshape(B, T, hs)
            kh = k_bf[:, sl].reshape(B, T, hs)
            vh = v_bf[:, sl].reshape(B, T, hs)
            s = jnp.einsum('bqd,bkd->bqk', qh, kh,
                           preferred_element_type=jnp.float32)
            s = s * scale + mask_add[None]                           # fused mask
            s = s - jnp.max(s, axis=-1, keepdims=True)
            p = jnp.exp(s)
            p = p * pl.reciprocal(jnp.sum(p, axis=-1, keepdims=True),
                                  approx=True)
            oh = jnp.einsum('bqk,bkd->bqd', p.astype(bf16), vh,
                            preferred_element_type=jnp.float32)      # (B,T,hs)
            # accumulate through the per-head row slice of the output proj
            attn = attn + jnp.dot(oh.reshape(N, hs).astype(bf16),
                                  wproj_v[sl, :],
                                  preferred_element_type=jnp.float32)
        x = x + attn + bproj[...]

        # ---- x = x + FeedForward(LayerNorm2(x)) ----
        h2 = _layernorm(x, ln2_w[...], ln2_b[...])
        f = jnp.dot(h2.astype(bf16), w1[...],
                    preferred_element_type=jnp.float32) + b1[...]
        f = jnp.maximum(f, 0.0)
        f = jnp.dot(f.astype(bf16), w2[...],
                    preferred_element_type=jnp.float32) + b2[...]
        x = x + f

    # ---- final LayerNorm + LM head (lane-dense padded vocab output) ----
    hf = _layernorm(x, lnf_w_ref[...], lnf_b_ref[...])
    o_ref[...] = jnp.dot(hf.astype(bf16), wlm_ref[...],
                         preferred_element_type=jnp.float32) + blm_ref[...]


# ----------------------------- wrapper ----------------------------------------
def _full_spec(shape):
    ndim = len(shape)
    return pl.BlockSpec(shape, lambda *_: (0,) * ndim)


_LAYER_KEYS = ("ln1_w", "ln1_b", "wqkv", "wproj", "bproj",
               "ln2_w", "ln2_b", "w1", "b1", "w2", "b2")


def decoder_only_transformer_forward(idx, params):
    """idx: int32 [B, T] token ids.  Returns logits [B, T, vocab_size]."""
    B, T = idx.shape
    N = B * T
    idx_col = idx.reshape(N, 1).astype(jnp.int32)
    pos_tbl = params["pos_table"][:T]                       # (T, C)

    inputs = [idx_col, params["tok_table"], pos_tbl]
    for blk in params["blocks"]:
        inputs += [blk[k] for k in _LAYER_KEYS]
    inputs += [params["lnf_w"], params["lnf_b"], params["wlm"], params["blm"]]

    kernel = functools.partial(fused_transformer_kernel, N_LAYER, N_HEAD)
    logits_pad = pl.pallas_call(
        kernel,
        out_shape=jax.ShapeDtypeStruct((N, VOCAB_PAD), jnp.float32),
        grid=(1,),
        in_specs=[_full_spec(a.shape) for a in inputs],
        out_specs=_full_spec((N, VOCAB_PAD)),
        compiler_params=pltpu.CompilerParams(
            dimension_semantics=("arbitrary",),
            vmem_limit_bytes=16 * 1024 * 1024),
    )(*inputs)

    # slice off vocab padding (columns >= VOCAB_SIZE are exact zeros)
    # TODO(synk): cross-entropy loss branch (targets != None) not implemented;
    # reference forward with targets=None returns (logits, None).
    return logits_pad[:, :VOCAB_SIZE].reshape(B, T, VOCAB_SIZE)


# ----------------------------- deterministic init -----------------------------
def init_params(key):
    C, V, H = N_EMBD, VOCAB_SIZE, 4 * N_EMBD

    def nrm(k, shape, scale=0.02):
        return (scale * jax.random.normal(k, shape)).astype(jnp.float32)

    keys = jax.random.split(key, 4 + N_LAYER)
    tok = nrm(keys[0], (V, C))
    tok_pad = jnp.zeros((VOCAB_PAD, C), jnp.float32).at[:V].set(tok)
    wlm = nrm(keys[2], (C, V))
    wlm_pad = jnp.zeros((C, VOCAB_PAD), jnp.float32).at[:, :V].set(wlm)

    params = {
        "tok_table": tok_pad,                                 # (128, C) f32
        "pos_table": nrm(keys[1], (BLOCK_SIZE, C)),           # (16, C)  f32
        "lnf_w": jnp.ones((1, C), jnp.float32),
        "lnf_b": jnp.zeros((1, C), jnp.float32),
        "wlm": wlm_pad.astype(jnp.bfloat16),                  # (C, 128) bf16
        "blm": jnp.zeros((1, VOCAB_PAD), jnp.float32),
        "blocks": [],
    }
    for li in range(N_LAYER):
        ks = jax.random.split(keys[4 + li], 8)
        wq, wk, wv = nrm(ks[0], (C, C)), nrm(ks[1], (C, C)), nrm(ks[2], (C, C))
        params["blocks"].append({
            "ln1_w": jnp.ones((1, C), jnp.float32),
            "ln1_b": jnp.zeros((1, C), jnp.float32),
            "wqkv": jnp.concatenate([wq, wk, wv], axis=1).astype(jnp.bfloat16),
            "wproj": nrm(ks[3], (C, C)).astype(jnp.bfloat16),
            "bproj": jnp.zeros((1, C), jnp.float32),
            "ln2_w": jnp.ones((1, C), jnp.float32),
            "ln2_b": jnp.zeros((1, C), jnp.float32),
            "w1": nrm(ks[4], (C, H)).astype(jnp.bfloat16),
            "b1": jnp.zeros((1, H), jnp.float32),
            "w2": nrm(ks[5], (H, C)).astype(jnp.bfloat16),
            "b2": jnp.zeros((1, C), jnp.float32),
        })
    return params


# ----------------------------- pure-JAX reference (sanity check) --------------
def reference_forward(idx, params):
    B, T = idx.shape
    C = N_EMBD
    hs = C // N_HEAD
    x = params["tok_table"][idx] + params["pos_table"][:T][None]
    causal = jnp.tril(jnp.ones((T, T), bool))
    for blk in params["blocks"]:
        h = _layernorm(x, blk["ln1_w"], blk["ln1_b"])
        qkv = h @ blk["wqkv"].astype(jnp.float32)
        q, k, v = qkv[..., :C], qkv[..., C:2 * C], qkv[..., 2 * C:]
        outs = []
        for hh in range(N_HEAD):
            sl = slice(hh * hs, (hh + 1) * hs)
            wei = jnp.einsum('btd,bsd->bts', q[..., sl], k[..., sl]) * C ** (-0.5)
            wei = jnp.where(causal[None], wei, NEG_BIG)
            p = jax.nn.softmax(wei, axis=-1)
            outs.append(jnp.einsum('bts,bsd->btd', p, v[..., sl]))
        attn = jnp.concatenate(outs, axis=-1)
        x = x + attn @ blk["wproj"].astype(jnp.float32) + blk["bproj"]
        h2 = _layernorm(x, blk["ln2_w"], blk["ln2_b"])
        f = jnp.maximum(h2 @ blk["w1"].astype(jnp.float32) + blk["b1"], 0.0)
        x = x + f @ blk["w2"].astype(jnp.float32) + blk["b2"]
    hf = _layernorm(x, params["lnf_w"], params["lnf_b"])
    logits = hf @ params["wlm"].astype(jnp.float32) + params["blm"]
    return logits[..., :VOCAB_SIZE]


if __name__ == "__main__":
    key = jax.random.PRNGKey(0)
    params = init_params(key)

    B, T = 2, 8
    idx = jax.random.randint(jax.random.PRNGKey(1), (B, T), 0, VOCAB_SIZE,
                             dtype=jnp.int32)

    logits = decoder_only_transformer_forward(idx, params)
    logits = jax.block_until_ready(logits)
    assert logits.shape == (B, T, VOCAB_SIZE)
    assert bool(jnp.all(jnp.isfinite(logits)))

    ref = reference_forward(idx, params)
    err = float(jnp.max(jnp.abs(logits - ref)))
    assert err < 5e-2, f"max abs err vs reference: {err}"
    print("KERNEL_OK")
</pallas_src>

<mosaic_0001>
module attributes {stable_mosaic.version = 11 : i64} {
  func.func @fused_transformer_kernel(%arg0: i32, %arg1: memref<16x1xi32, #tpu.memory_space<vmem>>, %arg2: memref<128x32xf32, #tpu.memory_space<vmem>>, %arg3: memref<8x32xf32, #tpu.memory_space<vmem>>, %arg4: memref<1x32xf32, #tpu.memory_space<vmem>>, %arg5: memref<1x32xf32, #tpu.memory_space<vmem>>, %arg6: memref<32x96xbf16, #tpu.memory_space<vmem>>, %arg7: memref<32x32xbf16, #tpu.memory_space<vmem>>, %arg8: memref<1x32xf32, #tpu.memory_space<vmem>>, %arg9: memref<1x32xf32, #tpu.memory_space<vmem>>, %arg10: memref<1x32xf32, #tpu.memory_space<vmem>>, %arg11: memref<32x128xbf16, #tpu.memory_space<vmem>>, %arg12: memref<1x128xf32, #tpu.memory_space<vmem>>, %arg13: memref<128x32xbf16, #tpu.memory_space<vmem>>, %arg14: memref<1x32xf32, #tpu.memory_space<vmem>>, %arg15: memref<1x32xf32, #tpu.memory_space<vmem>>, %arg16: memref<1x32xf32, #tpu.memory_space<vmem>>, %arg17: memref<32x96xbf16, #tpu.memory_space<vmem>>, %arg18: memref<32x32xbf16, #tpu.memory_space<vmem>>, %arg19: memref<1x32xf32, #tpu.memory_space<vmem>>, %arg20: memref<1x32xf32, #tpu.memory_space<vmem>>, %arg21: memref<1x32xf32, #tpu.memory_space<vmem>>, %arg22: memref<32x128xbf16, #tpu.memory_space<vmem>>, %arg23: memref<1x128xf32, #tpu.memory_space<vmem>>, %arg24: memref<128x32xbf16, #tpu.memory_space<vmem>>, %arg25: memref<1x32xf32, #tpu.memory_space<vmem>>, %arg26: memref<1x32xf32, #tpu.memory_space<vmem>>, %arg27: memref<1x32xf32, #tpu.memory_space<vmem>>, %arg28: memref<32x128xbf16, #tpu.memory_space<vmem>>, %arg29: memref<1x128xf32, #tpu.memory_space<vmem>>, %arg30: memref<16x128xf32, #tpu.memory_space<vmem>>) attributes {dimension_semantics = [#tpu.dimension_semantics<arbitrary>], iteration_bounds = array<i64: 1>, scalar_prefetch = 0 : i64, scratch_operands = 0 : i64, tpu.core_type = #tpu.core_type<tc>, window_params = [{pipeline_mode = #tpu.pipeline_mode<synchronous>, transform_indices = @transform_0, window_bounds = array<i64: 16, 1>}, {pipeline_mode = #tpu.pipeline_mode<synchronous>, transform_indices = @transform_1, window_bounds = array<i64: 128, 32>}, {pipeline_mode = #tpu.pipeline_mode<synchronous>, transform_indices = @transform_2, window_bounds = array<i64: 8, 32>}, {pipeline_mode = #tpu.pipeline_mode<synchronous>, transform_indices = @transform_3, window_bounds = array<i64: 1, 32>}, {pipeline_mode = #tpu.pipeline_mode<synchronous>, transform_indices = @transform_4, window_bounds = array<i64: 1, 32>}, {pipeline_mode = #tpu.pipeline_mode<synchronous>, transform_indices = @transform_5, window_bounds = array<i64: 32, 96>}, {pipeline_mode = #tpu.pipeline_mode<synchronous>, transform_indices = @transform_6, window_bounds = array<i64: 32, 32>}, {pipeline_mode = #tpu.pipeline_mode<synchronous>, transform_indices = @transform_7, window_bounds = array<i64: 1, 32>}, {pipeline_mode = #tpu.pipeline_mode<synchronous>, transform_indices = @transform_8, window_bounds = array<i64: 1, 32>}, {pipeline_mode = #tpu.pipeline_mode<synchronous>, transform_indices = @transform_9, window_bounds = array<i64: 1, 32>}, {pipeline_mode = #tpu.pipeline_mode<synchronous>, transform_indices = @transform_10, window_bounds = array<i64: 32, 128>}, {pipeline_mode = #tpu.pipeline_mode<synchronous>, transform_indices = @transform_11, window_bounds = array<i64: 1, 128>}, {pipeline_mode = #tpu.pipeline_mode<synchronous>, transform_indices = @transform_12, window_bounds = array<i64: 128, 32>}, {pipeline_mode = #tpu.pipeline_mode<synchronous>, transform_indices = @transform_13, window_bounds = array<i64: 1, 32>}, {pipeline_mode = #tpu.pipeline_mode<synchronous>, transform_indices = @transform_14, window_bounds = array<i64: 1, 32>}, {pipeline_mode = #tpu.pipeline_mode<synchronous>, transform_indices = @transform_15, window_bounds = array<i64: 1, 32>}, {pipeline_mode = #tpu.pipeline_mode<synchronous>, transform_indices = @transform_16, window_bounds = array<i64: 32, 96>}, {pipeline_mode = #tpu.pipeline_mode<synchronous>, transform_indices = @transform_17, window_bounds = array<i64: 32, 32>}, {pipeline_mode = #tpu.pipeline_mode<synchronous>, transform_indices = @transform_18, window_bounds = array<i64: 1, 32>}, {pipeline_mode = #tpu.pipeline_mode<synchronous>, transform_indices = @transform_19, window_bounds = array<i64: 1, 32>}, {pipeline_mode = #tpu.pipeline_mode<synchronous>, transform_indices = @transform_20, window_bounds = array<i64: 1, 32>}, {pipeline_mode = #tpu.pipeline_mode<synchronous>, transform_indices = @transform_21, window_bounds = array<i64: 32, 128>}, {pipeline_mode = #tpu.pipeline_mode<synchronous>, transform_indices = @transform_22, window_bounds = array<i64: 1, 128>}, {pipeline_mode = #tpu.pipeline_mode<synchronous>, transform_indices = @transform_23, window_bounds = array<i64: 128, 32>}, {pipeline_mode = #tpu.pipeline_mode<synchronous>, transform_indices = @transform_24, window_bounds = array<i64: 1, 32>}, {pipeline_mode = #tpu.pipeline_mode<synchronous>, transform_indices = @transform_25, window_bounds = array<i64: 1, 32>}, {pipeline_mode = #tpu.pipeline_mode<synchronous>, transform_indices = @transform_26, window_bounds = array<i64: 1, 32>}, {pipeline_mode = #tpu.pipeline_mode<synchronous>, transform_indices = @transform_27, window_bounds = array<i64: 32, 128>}, {pipeline_mode = #tpu.pipeline_mode<synchronous>, transform_indices = @transform_28, window_bounds = array<i64: 1, 128>}, {pipeline_mode = #tpu.pipeline_mode<synchronous>, transform_indices = @transform_29, window_bounds = array<i64: 16, 128>}]} {
    %c0 = arith.constant 0 : index
    %c0_0 = arith.constant 0 : index
    %0 = vector.load %arg1[%c0, %c0_0] : memref<16x1xi32, #tpu.memory_space<vmem>>, vector<16x1xi32>
    %1 = tpu.iota {dimensions = array<i32: 1>} : vector<16x128xi32>
    %2 = vector.broadcast %0 : vector<16x1xi32> to vector<16x128xi32>
    %3 = arith.cmpi eq, %2, %1 : vector<16x128xi32>
    %4 = arith.extui %3 : vector<16x128xi1> to vector<16x128xi32>
    %5 = arith.sitofp %4 : vector<16x128xi32> to vector<16x128xf32>
    %c0_1 = arith.constant 0 : index
    %c0_2 = arith.constant 0 : index
    %6 = vector.load %arg2[%c0_1, %c0_2] : memref<128x32xf32, #tpu.memory_space<vmem>>, vector<128x32xf32>
    %cst = arith.constant dense<0.000000e+00> : vector<16x32xf32>
    %7 = tpu.matmul %5, %6, %cst {dimension_numbers = #tpu.dot_dimension_numbers<[1], [0], [0], [1], [0, 0, 1, 1], [], []>} : vector<16x128xf32>, vector<128x32xf32>, vector<16x32xf32> -> vector<16x32xf32>
    %8 = vector.shape_cast %7 : vector<16x32xf32> to vector<2x8x32xf32>
    %c0_3 = arith.constant 0 : index
    %c0_4 = arith.constant 0 : index
    %9 = vector.load %arg3[%c0_3, %c0_4] : memref<8x32xf32, #tpu.memory_space<vmem>>, vector<8x32xf32>
    %10 = vector.shape_cast %9 : vector<8x32xf32> to vector<1x8x32xf32>
    %11 = vector.broadcast %10 : vector<1x8x32xf32> to vector<2x8x32xf32>
    %12 = arith.addf %8, %11 : vector<2x8x32xf32>
    %13 = vector.shape_cast %12 : vector<2x8x32xf32> to vector<16x32xf32>
    %14 = tpu.iota {dimensions = array<i32: 0>} : vector<8x8xi32>
    %15 = tpu.iota {dimensions = array<i32: 1>} : vector<8x8xi32>
    %16 = arith.cmpi sge, %14, %15 : vector<8x8xi32>
    %cst_5 = arith.constant 0.000000e+00 : f32
    %cst_6 = arith.constant -1.000000e+30 : f32
    %17 = vector.broadcast %cst_5 : f32 to vector<8x8xf32>
    %18 = vector.broadcast %cst_6 : f32 to vector<8x8xf32>
    %19 = arith.select %16, %17, %18 : vector<8x8xi1>, vector<8x8xf32>
    %c0_7 = arith.constant 0 : index
    %c0_8 = arith.constant 0 : index
    %20 = vector.load %arg4[%c0_7, %c0_8] : memref<1x32xf32, #tpu.memory_space<vmem>>, vector<1x32xf32>
    %c0_9 = arith.constant 0 : index
    %c0_10 = arith.constant 0 : index
    %21 = vector.load %arg5[%c0_9, %c0_10] : memref<1x32xf32, #tpu.memory_space<vmem>>, vector<1x32xf32>
    %cst_11 = arith.constant dense<0.000000e+00> : vector<16xf32>
    %22 = vector.multi_reduction <add>, %13, %cst_11 [1] : vector<16x32xf32> to vector<16xf32>
    %23 = vector.shape_cast %22 : vector<16xf32> to vector<16x1xf32>
    %cst_12 = arith.constant 3.200000e+01 : f32
    %24 = vector.broadcast %cst_12 : f32 to vector<16x1xf32>
    %25 = arith.divf %23, %24 : vector<16x1xf32>
    %26 = vector.broadcast %25 : vector<16x1xf32> to vector<16x32xf32>
    %27 = arith.subf %13, %26 : vector<16x32xf32>
    %28 = arith.mulf %27, %27 : vector<16x32xf32>
    %cst_13 = arith.constant dense<0.000000e+00> : vector<16xf32>
    %29 = vector.multi_reduction <add>, %28, %cst_13 [1] : vector<16x32xf32> to vector<16xf32>
    %30 = vector.shape_cast %29 : vector<16xf32> to vector<16x1xf32>
    %cst_14 = arith.constant 3.200000e+01 : f32
    %31 = vector.broadcast %cst_14 : f32 to vector<16x1xf32>
    %32 = arith.divf %30, %31 : vector<16x1xf32>
    %33 = vector.broadcast %25 : vector<16x1xf32> to vector<16x32xf32>
    %34 = arith.subf %13, %33 : vector<16x32xf32>
    %cst_15 = arith.constant 9.99999974E-6 : f32
    %35 = vector.broadcast %cst_15 : f32 to vector<16x1xf32>
    %36 = arith.addf %32, %35 : vector<16x1xf32>
    %37 = math.rsqrt %36 : vector<16x1xf32>
    %38 = vector.broadcast %37 : vector<16x1xf32> to vector<16x32xf32>
    %39 = arith.mulf %34, %38 : vector<16x32xf32>
    %40 = vector.broadcast %20 : vector<1x32xf32> to vector<16x32xf32>
    %41 = arith.mulf %39, %40 : vector<16x32xf32>
    %42 = vector.broadcast %21 : vector<1x32xf32> to vector<16x32xf32>
    %43 = arith.addf %41, %42 : vector<16x32xf32>
    %44 = arith.truncf %43 : vector<16x32xf32> to vector<16x32xbf16>
    %c0_16 = arith.constant 0 : index
    %c0_17 = arith.constant 0 : index
    %45 = vector.load %arg6[%c0_16, %c0_17] : memref<32x96xbf16, #tpu.memory_space<vmem>>, vector<32x96xbf16>
    %cst_18 = arith.constant dense<0.000000e+00> : vector<16x96xf32>
    %46 = tpu.matmul %44, %45, %cst_18 {dimension_numbers = #tpu.dot_dimension_numbers<[1], [0], [0], [1], [0, 0, 1, 1], [], []>} : vector<16x32xbf16>, vector<32x96xbf16>, vector<16x96xf32> -> vector<16x96xf32>
    %47 = vector.extract_strided_slice %46 {offsets = [0, 0], sizes = [16, 32], strides = [1, 1]} : vector<16x96xf32> to vector<16x32xf32>
    %48 = arith.truncf %47 : vector<16x32xf32> to vector<16x32xbf16>
    %49 = vector.extract_strided_slice %46 {offsets = [0, 32], sizes = [16, 32], strides = [1, 1]} : vector<16x96xf32> to vector<16x32xf32>
    %50 = arith.truncf %49 : vector<16x32xf32> to vector<16x32xbf16>
    %51 = vector.extract_strided_slice %46 {offsets = [0, 64], sizes = [16, 32], strides = [1, 1]} : vector<16x96xf32> to vector<16x32xf32>
    %52 = arith.truncf %51 : vector<16x32xf32> to vector<16x32xbf16>
    %c0_19 = arith.constant 0 : index
    %c0_20 = arith.constant 0 : index
    %53 = vector.load %arg7[%c0_19, %c0_20] : memref<32x32xbf16, #tpu.memory_space<vmem>>, vector<32x32xbf16>
    %cst_21 = arith.constant 0.000000e+00 : f32
    %54 = vector.broadcast %cst_21 : f32 to vector<16x32xf32>
    %55 = vector.extract_strided_slice %48 {offsets = [0, 0], sizes = [16, 8], strides = [1, 1]} : vector<16x32xbf16> to vector<16x8xbf16>
    %56 = vector.shape_cast %55 : vector<16x8xbf16> to vector<2x8x8xbf16>
    %57 = vector.extract_strided_slice %50 {offsets = [0, 0], sizes = [16, 8], strides = [1, 1]} : vector<16x32xbf16> to vector<16x8xbf16>
    %58 = vector.shape_cast %57 : vector<16x8xbf16> to vector<2x8x8xbf16>
    %59 = vector.extract_strided_slice %52 {offsets = [0, 0], sizes = [16, 8], strides = [1, 1]} : vector<16x32xbf16> to vector<16x8xbf16>
    %60 = vector.shape_cast %59 : vector<16x8xbf16> to vector<2x8x8xbf16>
    "tpu.trace_start"() <{level = 10 : i32, message = "bqd,bkd->bqk"}> : () -> ()
    %cst_22 = arith.constant dense<0.000000e+00> : vector<2x8x8xf32>
    %61 = tpu.matmul %56, %58, %cst_22 {dimension_numbers = #tpu.dot_dimension_numbers<[2], [2], [1], [1], [0, 0, 0, 1, 1, 1], [0], [0]>} : vector<2x8x8xbf16>, vector<2x8x8xbf16>, vector<2x8x8xf32> -> vector<2x8x8xf32>
    "tpu.trace_stop"() : () -> ()
    %cst_23 = arith.constant 0.176776692 : f32
    %62 = vector.broadcast %cst_23 : f32 to vector<2x8x8xf32>
    %63 = arith.mulf %61, %62 : vector<2x8x8xf32>
    %64 = vector.shape_cast %19 : vector<8x8xf32> to vector<1x8x8xf32>
    %65 = vector.broadcast %64 : vector<1x8x8xf32> to vector<2x8x8xf32>
    %66 = arith.addf %63, %65 : vector<2x8x8xf32>
    %cst_24 = arith.constant dense<0xFF800000> : vector<2x8xf32>
    %67 = vector.multi_reduction <maximumf>, %66, %cst_24 [2] : vector<2x8x8xf32> to vector<2x8xf32>
    %68 = vector.shape_cast %67 : vector<2x8xf32> to vector<2x8x1xf32>
    %69 = vector.broadcast %68 : vector<2x8x1xf32> to vector<2x8x8xf32>
    %70 = arith.subf %66, %69 : vector<2x8x8xf32>
    %71 = math.exp %70 : vector<2x8x8xf32>
    %cst_25 = arith.constant dense<0.000000e+00> : vector<2x8xf32>
    %72 = vector.multi_reduction <add>, %71, %cst_25 [2] : vector<2x8x8xf32> to vector<2x8xf32>
    %73 = vector.shape_cast %72 : vector<2x8xf32> to vector<2x8x1xf32>
    %74 = tpu.reciprocal %73 {approx = true} : vector<2x8x1xf32> -> vector<2x8x1xf32>
    %75 = vector.broadcast %74 : vector<2x8x1xf32> to vector<2x8x8xf32>
    %76 = arith.mulf %71, %75 : vector<2x8x8xf32>
    %77 = arith.truncf %76 : vector<2x8x8xf32> to vector<2x8x8xbf16>
    "tpu.trace_start"() <{level = 10 : i32, message = "bqk,bkd->bqd"}> : () -> ()
    %cst_26 = arith.constant dense<0.000000e+00> : vector<2x8x8xf32>
    %78 = tpu.matmul %77, %60, %cst_26 {dimension_numbers = #tpu.dot_dimension_numbers<[2], [1], [1], [2], [0, 0, 0, 1, 1, 2], [0], [0]>} : vector<2x8x8xbf16>, vector<2x8x8xbf16>, vector<2x8x8xf32> -> vector<2x8x8xf32>
    "tpu.trace_stop"() : () -> ()
    %79 = vector.shape_cast %78 : vector<2x8x8xf32> to vector<16x8xf32>
    %80 = arith.truncf %79 : vector<16x8xf32> to vector<16x8xbf16>
    %81 = vector.extract_strided_slice %53 {offsets = [0, 0], sizes = [8, 32], strides = [1, 1]} : vector<32x32xbf16> to vector<8x32xbf16>
    %cst_27 = arith.constant dense<0.000000e+00> : vector<16x32xf32>
    %82 = tpu.matmul %80, %81, %cst_27 {dimension_numbers = #tpu.dot_dimension_numbers<[1], [0], [0], [1], [0, 0, 1, 1], [], []>} : vector<16x8xbf16>, vector<8x32xbf16>, vector<16x32xf32> -> vector<16x32xf32>
    %83 = arith.addf %54, %82 : vector<16x32xf32>
    %84 = vector.extract_strided_slice %48 {offsets = [0, 8], sizes = [16, 8], strides = [1, 1]} : vector<16x32xbf16> to vector<16x8xbf16>
    %85 = vector.shape_cast %84 : vector<16x8xbf16> to vector<2x8x8xbf16>
    %86 = vector.extract_strided_slice %50 {offsets = [0, 8], sizes = [16, 8], strides = [1, 1]} : vector<16x32xbf16> to vector<16x8xbf16>
    %87 = vector.shape_cast %86 : vector<16x8xbf16> to vector<2x8x8xbf16>
    %88 = vector.extract_strided_slice %52 {offsets = [0, 8], sizes = [16, 8], strides = [1, 1]} : vector<16x32xbf16> to vector<16x8xbf16>
    %89 = vector.shape_cast %88 : vector<16x8xbf16> to vector<2x8x8xbf16>
    "tpu.trace_start"() <{level = 10 : i32, message = "bqd,bkd->bqk"}> : () -> ()
    %cst_28 = arith.constant dense<0.000000e+00> : vector<2x8x8xf32>
    %90 = tpu.matmul %85, %87, %cst_28 {dimension_numbers = #tpu.dot_dimension_numbers<[2], [2], [1], [1], [0, 0, 0, 1, 1, 1], [0], [0]>} : vector<2x8x8xbf16>, vector<2x8x8xbf16>, vector<2x8x8xf32> -> vector<2x8x8xf32>
    "tpu.trace_stop"() : () -> ()
    %cst_29 = arith.constant 0.176776692 : f32
    %91 = vector.broadcast %cst_29 : f32 to vector<2x8x8xf32>
    %92 = arith.mulf %90, %91 : vector<2x8x8xf32>
    %93 = vector.shape_cast %19 : vector<8x8xf32> to vector<1x8x8xf32>
    %94 = vector.broadcast %93 : vector<1x8x8xf32> to vector<2x8x8xf32>
    %95 = arith.addf %92, %94 : vector<2x8x8xf32>
    %cst_30 = arith.constant dense<0xFF800000> : vector<2x8xf32>
    %96 = vector.multi_reduction <maximumf>, %95, %cst_30 [2] : vector<2x8x8xf32> to vector<2x8xf32>
    %97 = vector.shape_cast %96 : vector<2x8xf32> to vector<2x8x1xf32>
    %98 = vector.broadcast %97 : vector<2x8x1xf32> to vector<2x8x8xf32>
    %99 = arith.subf %95, %98 : vector<2x8x8xf32>
    %100 = math.exp %99 : vector<2x8x8xf32>
    %cst_31 = arith.constant dense<0.000000e+00> : vector<2x8xf32>
    %101 = vector.multi_reduction <add>, %100, %cst_31 [2] : vector<2x8x8xf32> to vector<2x8xf32>
    %102 = vector.shape_cast %101 : vector<2x8xf32> to vector<2x8x1xf32>
    %103 = tpu.reciprocal %102 {approx = true} : vector<2x8x1xf32> -> vector<2x8x1xf32>
    %104 = vector.broadcast %103 : vector<2x8x1xf32> to vector<2x8x8xf32>
    %105 = arith.mulf %100, %104 : vector<2x8x8xf32>
    %106 = arith.truncf %105 : vector<2x8x8xf32> to vector<2x8x8xbf16>
    "tpu.trace_start"() <{level = 10 : i32, message = "bqk,bkd->bqd"}> : () -> ()
    %cst_32 = arith.constant dense<0.000000e+00> : vector<2x8x8xf32>
    %107 = tpu.matmul %106, %89, %cst_32 {dimension_numbers = #tpu.dot_dimension_numbers<[2], [1], [1], [2], [0, 0, 0, 1, 1, 2], [0], [0]>} : vector<2x8x8xbf16>, vector<2x8x8xbf16>, vector<2x8x8xf32> -> vector<2x8x8xf32>
    "tpu.trace_stop"() : () -> ()
    %108 = vector.shape_cast %107 : vector<2x8x8xf32> to vector<16x8xf32>
    %109 = arith.truncf %108 : vector<16x8xf32> to vector<16x8xbf16>
    %110 = vector.extract_strided_slice %53 {offsets = [8, 0], sizes = [8, 32], strides = [1, 1]} : vector<32x32xbf16> to vector<8x32xbf16>
    %cst_33 = arith.constant dense<0.000000e+00> : vector<16x32xf32>
    %111 = tpu.matmul %109, %110, %cst_33 {dimension_numbers = #tpu.dot_dimension_numbers<[1], [0], [0], [1], [0, 0, 1, 1], [], []>} : vector<16x8xbf16>, vector<8x32xbf16>, vector<16x32xf32> -> vector<16x32xf32>
    %112 = arith.addf %83, %111 : vector<16x32xf32>
    %113 = vector.extract_strided_slice %48 {offsets = [0, 16], sizes = [16, 8], strides = [1, 1]} : vector<16x32xbf16> to vector<16x8xbf16>
    %114 = vector.shape_cast %113 : vector<16x8xbf16> to vector<2x8x8xbf16>
    %115 = vector.extract_strided_slice %50 {offsets = [0, 16], sizes = [16, 8], strides = [1, 1]} : vector<16x32xbf16> to vector<16x8xbf16>
    %116 = vector.shape_cast %115 : vector<16x8xbf16> to vector<2x8x8xbf16>
    %117 = vector.extract_strided_slice %52 {offsets = [0, 16], sizes = [16, 8], strides = [1, 1]} : vector<16x32xbf16> to vector<16x8xbf16>
    %118 = vector.shape_cast %117 : vector<16x8xbf16> to vector<2x8x8xbf16>
    "tpu.trace_start"() <{level = 10 : i32, message = "bqd,bkd->bqk"}> : () -> ()
    %cst_34 = arith.constant dense<0.000000e+00> : vector<2x8x8xf32>
    %119 = tpu.matmul %114, %116, %cst_34 {dimension_numbers = #tpu.dot_dimension_numbers<[2], [2], [1], [1], [0, 0, 0, 1, 1, 1], [0], [0]>} : vector<2x8x8xbf16>, vector<2x8x8xbf16>, vector<2x8x8xf32> -> vector<2x8x8xf32>
    "tpu.trace_stop"() : () -> ()
    %cst_35 = arith.constant 0.176776692 : f32
    %120 = vector.broadcast %cst_35 : f32 to vector<2x8x8xf32>
    %121 = arith.mulf %119, %120 : vector<2x8x8xf32>
    %122 = vector.shape_cast %19 : vector<8x8xf32> to vector<1x8x8xf32>
    %123 = vector.broadcast %122 : vector<1x8x8xf32> to vector<2x8x8xf32>
    %124 = arith.addf %121, %123 : vector<2x8x8xf32>
    %cst_36 = arith.constant dense<0xFF800000> : vector<2x8xf32>
    %125 = vector.multi_reduction <maximumf>, %124, %cst_36 [2] : vector<2x8x8xf32> to vector<2x8xf32>
    %126 = vector.shape_cast %125 : vector<2x8xf32> to vector<2x8x1xf32>
    %127 = vector.broadcast %126 : vector<2x8x1xf32> to vector<2x8x8xf32>
    %128 = arith.subf %124, %127 : vector<2x8x8xf32>
    %129 = math.exp %128 : vector<2x8x8xf32>
    %cst_37 = arith.constant dense<0.000000e+00> : vector<2x8xf32>
    %130 = vector.multi_reduction <add>, %129, %cst_37 [2] : vector<2x8x8xf32> to vector<2x8xf32>
    %131 = vector.shape_cast %130 : vector<2x8xf32> to vector<2x8x1xf32>
    %132 = tpu.reciprocal %131 {approx = true} : vector<2x8x1xf32> -> vector<2x8x1xf32>
    %133 = vector.broadcast %132 : vector<2x8x1xf32> to vector<2x8x8xf32>
    %134 = arith.mulf %129, %133 : vector<2x8x8xf32>
    %135 = arith.truncf %134 : vector<2x8x8xf32> to vector<2x8x8xbf16>
    "tpu.trace_start"() <{level = 10 : i32, message = "bqk,bkd->bqd"}> : () -> ()
    %cst_38 = arith.constant dense<0.000000e+00> : vector<2x8x8xf32>
    %136 = tpu.matmul %135, %118, %cst_38 {dimension_numbers = #tpu.dot_dimension_numbers<[2], [1], [1], [2], [0, 0, 0, 1, 1, 2], [0], [0]>} : vector<2x8x8xbf16>, vector<2x8x8xbf16>, vector<2x8x8xf32> -> vector<2x8x8xf32>
    "tpu.trace_stop"() : () -> ()
    %137 = vector.shape_cast %136 : vector<2x8x8xf32> to vector<16x8xf32>
    %138 = arith.truncf %137 : vector<16x8xf32> to vector<16x8xbf16>
    %139 = vector.extract_strided_slice %53 {offsets = [16, 0], sizes = [8, 32], strides = [1, 1]} : vector<32x32xbf16> to vector<8x32xbf16>
    %cst_39 = arith.constant dense<0.000000e+00> : vector<16x32xf32>
    %140 = tpu.matmul %138, %139, %cst_39 {dimension_numbers = #tpu.dot_dimension_numbers<[1], [0], [0], [1], [0, 0, 1, 1], [], []>} : vector<16x8xbf16>, vector<8x32xbf16>, vector<16x32xf32> -> vector<16x32xf32>
    %141 = arith.addf %112, %140 : vector<16x32xf32>
    %142 = vector.extract_strided_slice %48 {offsets = [0, 24], sizes = [16, 8], strides = [1, 1]} : vector<16x32xbf16> to vector<16x8xbf16>
    %143 = vector.shape_cast %142 : vector<16x8xbf16> to vector<2x8x8xbf16>
    %144 = vector.extract_strided_slice %50 {offsets = [0, 24], sizes = [16, 8], strides = [1, 1]} : vector<16x32xbf16> to vector<16x8xbf16>
    %145 = vector.shape_cast %144 : vector<16x8xbf16> to vector<2x8x8xbf16>
    %146 = vector.extract_strided_slice %52 {offsets = [0, 24], sizes = [16, 8], strides = [1, 1]} : vector<16x32xbf16> to vector<16x8xbf16>
    %147 = vector.shape_cast %146 : vector<16x8xbf16> to vector<2x8x8xbf16>
    "tpu.trace_start"() <{level = 10 : i32, message = "bqd,bkd->bqk"}> : () -> ()
    %cst_40 = arith.constant dense<0.000000e+00> : vector<2x8x8xf32>
    %148 = tpu.matmul %143, %145, %cst_40 {dimension_numbers = #tpu.dot_dimension_numbers<[2], [2], [1], [1], [0, 0, 0, 1, 1, 1], [0], [0]>} : vector<2x8x8xbf16>, vector<2x8x8xbf16>, vector<2x8x8xf32> -> vector<2x8x8xf32>
    "tpu.trace_stop"() : () -> ()
    %cst_41 = arith.constant 0.176776692 : f32
    %149 = vector.broadcast %cst_41 : f32 to vector<2x8x8xf32>
    %150 = arith.mulf %148, %149 : vector<2x8x8xf32>
    %151 = vector.shape_cast %19 : vector<8x8xf32> to vector<1x8x8xf32>
    %152 = vector.broadcast %151 : vector<1x8x8xf32> to vector<2x8x8xf32>
    %153 = arith.addf %150, %152 : vector<2x8x8xf32>
    %cst_42 = arith.constant dense<0xFF800000> : vector<2x8xf32>
    %154 = vector.multi_reduction <maximumf>, %153, %cst_42 [2] : vector<2x8x8xf32> to vector<2x8xf32>
    %155 = vector.shape_cast %154 : vector<2x8xf32> to vector<2x8x1xf32>
    %156 = vector.broadcast %155 : vector<2x8x1xf32> to vector<2x8x8xf32>
    %157 = arith.subf %153, %156 : vector<2x8x8xf32>
    %158 = math.exp %157 : vector<2x8x8xf32>
    %cst_43 = arith.constant dense<0.000000e+00> : vector<2x8xf32>
    %159 = vector.multi_reduction <add>, %158, %cst_43 [2] : vector<2x8x8xf32> to vector<2x8xf32>
    %160 = vector.shape_cast %159 : vector<2x8xf32> to vector<2x8x1xf32>
    %161 = tpu.reciprocal %160 {approx = true} : vector<2x8x1xf32> -> vector<2x8x1xf32>
    %162 = vector.broadcast %161 : vector<2x8x1xf32> to vector<2x8x8xf32>
    %163 = arith.mulf %158, %162 : vector<2x8x8xf32>
    %164 = arith.truncf %163 : vector<2x8x8xf32> to vector<2x8x8xbf16>
    "tpu.trace_start"() <{level = 10 : i32, message = "bqk,bkd->bqd"}> : () -> ()
    %cst_44 = arith.constant dense<0.000000e+00> : vector<2x8x8xf32>
    %165 = tpu.matmul %164, %147, %cst_44 {dimension_numbers = #tpu.dot_dimension_numbers<[2], [1], [1], [2], [0, 0, 0, 1, 1, 2], [0], [0]>} : vector<2x8x8xbf16>, vector<2x8x8xbf16>, vector<2x8x8xf32> -> vector<2x8x8xf32>
    "tpu.trace_stop"() : () -> ()
    %166 = vector.shape_cast %165 : vector<2x8x8xf32> to vector<16x8xf32>
    %167 = arith.truncf %166 : vector<16x8xf32> to vector<16x8xbf16>
    %168 = vector.extract_strided_slice %53 {offsets = [24, 0], sizes = [8, 32], strides = [1, 1]} : vector<32x32xbf16> to vector<8x32xbf16>
    %cst_45 = arith.constant dense<0.000000e+00> : vector<16x32xf32>
    %169 = tpu.matmul %167, %168, %cst_45 {dimension_numbers = #tpu.dot_dimension_numbers<[1], [0], [0], [1], [0, 0, 1, 1], [], []>} : vector<16x8xbf16>, vector<8x32xbf16>, vector<16x32xf32> -> vector<16x32xf32>
    %170 = arith.addf %141, %169 : vector<16x32xf32>
    %171 = arith.addf %13, %170 : vector<16x32xf32>
    %c0_46 = arith.constant 0 : index
    %c0_47 = arith.constant 0 : index
    %172 = vector.load %arg8[%c0_46, %c0_47] : memref<1x32xf32, #tpu.memory_space<vmem>>, vector<1x32xf32>
    %173 = vector.broadcast %172 : vector<1x32xf32> to vector<16x32xf32>
    %174 = arith.addf %171, %173 : vector<16x32xf32>
    %c0_48 = arith.constant 0 : index
    %c0_49 = arith.constant 0 : index
    %175 = vector.load %arg9[%c0_48, %c0_49] : memref<1x32xf32, #tpu.memory_space<vmem>>, vector<1x32xf32>
    %c0_50 = arith.constant 0 : index
    %c0_51 = arith.constant 0 : index
    %176 = vector.load %arg10[%c0_50, %c0_51] : memref<1x32xf32, #tpu.memory_space<vmem>>, vector<1x32xf32>
    %cst_52 = arith.constant dense<0.000000e+00> : vector<16xf32>
    %177 = vector.multi_reduction <add>, %174, %cst_52 [1] : vector<16x32xf32> to vector<16xf32>
    %178 = vector.shape_cast %177 : vector<16xf32> to vector<16x1xf32>
    %cst_53 = arith.constant 3.200000e+01 : f32
    %179 = vector.broadcast %cst_53 : f32 to vector<16x1xf32>
    %180 = arith.divf %178, %179 : vector<16x1xf32>
    %181 = vector.broadcast %180 : vector<16x1xf32> to vector<16x32xf32>
    %182 = arith.subf %174, %181 : vector<16x32xf32>
    %183 = arith.mulf %182, %182 : vector<16x32xf32>
    %cst_54 = arith.constant dense<0.000000e+00> : vector<16xf32>
    %184 = vector.multi_reduction <add>, %183, %cst_54 [1] : vector<16x32xf32> to vector<16xf32>
    %185 = vector.shape_cast %184 : vector<16xf32> to vector<16x1xf32>
    %cst_55 = arith.constant 3.200000e+01 : f32
    %186 = vector.broadcast %cst_55 : f32 to vector<16x1xf32>
    %187 = arith.divf %185, %186 : vector<16x1xf32>
    %188 = vector.broadcast %180 : vector<16x1xf32> to vector<16x32xf32>
    %189 = arith.subf %174, %188 : vector<16x32xf32>
    %cst_56 = arith.constant 9.99999974E-6 : f32
    %190 = vector.broadcast %cst_56 : f32 to vector<16x1xf32>
    %191 = arith.addf %187, %190 : vector<16x1xf32>
    %192 = math.rsqrt %191 : vector<16x1xf32>
    %193 = vector.broadcast %192 : vector<16x1xf32> to vector<16x32xf32>
    %194 = arith.mulf %189, %193 : vector<16x32xf32>
    %195 = vector.broadcast %175 : vector<1x32xf32> to vector<16x32xf32>
    %196 = arith.mulf %194, %195 : vector<16x32xf32>
    %197 = vector.broadcast %176 : vector<1x32xf32> to vector<16x32xf32>
    %198 = arith.addf %196, %197 : vector<16x32xf32>
    %199 = arith.truncf %198 : vector<16x32xf32> to vector<16x32xbf16>
    %c0_57 = arith.constant 0 : index
    %c0_58 = arith.constant 0 : index
    %200 = vector.load %arg11[%c0_57, %c0_58] : memref<32x128xbf16, #tpu.memory_space<vmem>>, vector<32x128xbf16>
    %cst_59 = arith.constant dense<0.000000e+00> : vector<16x128xf32>
    %201 = tpu.matmul %199, %200, %cst_59 {dimension_numbers = #tpu.dot_dimension_numbers<[1], [0], [0], [1], [0, 0, 1, 1], [], []>} : vector<16x32xbf16>, vector<32x128xbf16>, vector<16x128xf32> -> vector<16x128xf32>
    %c0_60 = arith.constant 0 : index
    %c0_61 = arith.constant 0 : index
    %202 = vector.load %arg12[%c0_60, %c0_61] : memref<1x128xf32, #tpu.memory_space<vmem>>, vector<1x128xf32>
    %203 = vector.broadcast %202 : vector<1x128xf32> to vector<16x128xf32>
    %204 = arith.addf %201, %203 : vector<16x128xf32>
    %cst_62 = arith.constant 0.000000e+00 : f32
    %205 = vector.broadcast %cst_62 : f32 to vector<16x128xf32>
    %206 = arith.maximumf %204, %205 : vector<16x128xf32>
    %207 = arith.truncf %206 : vector<16x128xf32> to vector<16x128xbf16>
    %c0_63 = arith.constant 0 : index
    %c0_64 = arith.constant 0 : index
    %208 = vector.load %arg13[%c0_63, %c0_64] : memref<128x32xbf16, #tpu.memory_space<vmem>>, vector<128x32xbf16>
    %cst_65 = arith.constant dense<0.000000e+00> : vector<16x32xf32>
    %209 = tpu.matmul %207, %208, %cst_65 {dimension_numbers = #tpu.dot_dimension_numbers<[1], [0], [0], [1], [0, 0, 1, 1], [], []>} : vector<16x128xbf16>, vector<128x32xbf16>, vector<16x32xf32> -> vector<16x32xf32>
    %c0_66 = arith.constant 0 : index
    %c0_67 = arith.constant 0 : index
    %210 = vector.load %arg14[%c0_66, %c0_67] : memref<1x32xf32, #tpu.memory_space<vmem>>, vector<1x32xf32>
    %211 = vector.broadcast %210 : vector<1x32xf32> to vector<16x32xf32>
    %212 = arith.addf %209, %211 : vector<16x32xf32>
    %213 = arith.addf %174, %212 : vector<16x32xf32>
    %c0_68 = arith.constant 0 : index
    %c0_69 = arith.constant 0 : index
    %214 = vector.load %arg15[%c0_68, %c0_69] : memref<1x32xf32, #tpu.memory_space<vmem>>, vector<1x32xf32>
    %c0_70 = arith.constant 0 : index
    %c0_71 = arith.constant 0 : index
    %215 = vector.load %arg16[%c0_70, %c0_71] : memref<1x32xf32, #tpu.memory_space<vmem>>, vector<1x32xf32>
    %cst_72 = arith.constant dense<0.000000e+00> : vector<16xf32>
    %216 = vector.multi_reduction <add>, %213, %cst_72 [1] : vector<16x32xf32> to vector<16xf32>
    %217 = vector.shape_cast %216 : vector<16xf32> to vector<16x1xf32>
    %cst_73 = arith.constant 3.200000e+01 : f32
    %218 = vector.broadcast %cst_73 : f32 to vector<16x1xf32>
    %219 = arith.divf %217, %218 : vector<16x1xf32>
    %220 = vector.broadcast %219 : vector<16x1xf32> to vector<16x32xf32>
    %221 = arith.subf %213, %220 : vector<16x32xf32>
    %222 = arith.mulf %221, %221 : vector<16x32xf32>
    %cst_74 = arith.constant dense<0.000000e+00> : vector<16xf32>
    %223 = vector.multi_reduction <add>, %222, %cst_74 [1] : vector<16x32xf32> to vector<16xf32>
    %224 = vector.shape_cast %223 : vector<16xf32> to vector<16x1xf32>
    %cst_75 = arith.constant 3.200000e+01 : f32
    %225 = vector.broadcast %cst_75 : f32 to vector<16x1xf32>
    %226 = arith.divf %224, %225 : vector<16x1xf32>
    %227 = vector.broadcast %219 : vector<16x1xf32> to vector<16x32xf32>
    %228 = arith.subf %213, %227 : vector<16x32xf32>
    %cst_76 = arith.constant 9.99999974E-6 : f32
    %229 = vector.broadcast %cst_76 : f32 to vector<16x1xf32>
    %230 = arith.addf %226, %229 : vector<16x1xf32>
    %231 = math.rsqrt %230 : vector<16x1xf32>
    %232 = vector.broadcast %231 : vector<16x1xf32> to vector<16x32xf32>
    %233 = arith.mulf %228, %232 : vector<16x32xf32>
    %234 = vector.broadcast %214 : vector<1x32xf32> to vector<16x32xf32>
    %235 = arith.mulf %233, %234 : vector<16x32xf32>
    %236 = vector.broadcast %215 : vector<1x32xf32> to vector<16x32xf32>
    %237 = arith.addf %235, %236 : vector<16x32xf32>
    %238 = arith.truncf %237 : vector<16x32xf32> to vector<16x32xbf16>
    %c0_77 = arith.constant 0 : index
    %c0_78 = arith.constant 0 : index
    %239 = vector.load %arg17[%c0_77, %c0_78] : memref<32x96xbf16, #tpu.memory_space<vmem>>, vector<32x96xbf16>
    %cst_79 = arith.constant dense<0.000000e+00> : vector<16x96xf32>
    %240 = tpu.matmul %238, %239, %cst_79 {dimension_numbers = #tpu.dot_dimension_numbers<[1], [0], [0], [1], [0, 0, 1, 1], [], []>} : vector<16x32xbf16>, vector<32x96xbf16>, vector<16x96xf32> -> vector<16x96xf32>
    %241 = vector.extract_strided_slice %240 {offsets = [0, 0], sizes = [16, 32], strides = [1, 1]} : vector<16x96xf32> to vector<16x32xf32>
    %242 = arith.truncf %241 : vector<16x32xf32> to vector<16x32xbf16>
    %243 = vector.extract_strided_slice %240 {offsets = [0, 32], sizes = [16, 32], strides = [1, 1]} : vector<16x96xf32> to vector<16x32xf32>
    %244 = arith.truncf %243 : vector<16x32xf32> to vector<16x32xbf16>
    %245 = vector.extract_strided_slice %240 {offsets = [0, 64], sizes = [16, 32], strides = [1, 1]} : vector<16x96xf32> to vector<16x32xf32>
    %246 = arith.truncf %245 : vector<16x32xf32> to vector<16x32xbf16>
    %c0_80 = arith.constant 0 : index
    %c0_81 = arith.constant 0 : index
    %247 = vector.load %arg18[%c0_80, %c0_81] : memref<32x32xbf16, #tpu.memory_space<vmem>>, vector<32x32xbf16>
    %cst_82 = arith.constant 0.000000e+00 : f32
    %248 = vector.broadcast %cst_82 : f32 to vector<16x32xf32>
    %249 = vector.extract_strided_slice %242 {offsets = [0, 0], sizes = [16, 8], strides = [1, 1]} : vector<16x32xbf16> to vector<16x8xbf16>
    %250 = vector.shape_cast %249 : vector<16x8xbf16> to vector<2x8x8xbf16>
    %251 = vector.extract_strided_slice %244 {offsets = [0, 0], sizes = [16, 8], strides = [1, 1]} : vector<16x32xbf16> to vector<16x8xbf16>
    %252 = vector.shape_cast %251 : vector<16x8xbf16> to vector<2x8x8xbf16>
    %253 = vector.extract_strided_slice %246 {offsets = [0, 0], sizes = [16, 8], strides = [1, 1]} : vector<16x32xbf16> to vector<16x8xbf16>
    %254 = vector.shape_cast %253 : vector<16x8xbf16> to vector<2x8x8xbf16>
    "tpu.trace_start"() <{level = 10 : i32, message = "bqd,bkd->bqk"}> : () -> ()
    %cst_83 = arith.constant dense<0.000000e+00> : vector<2x8x8xf32>
    %255 = tpu.matmul %250, %252, %cst_83 {dimension_numbers = #tpu.dot_dimension_numbers<[2], [2], [1], [1], [0, 0, 0, 1, 1, 1], [0], [0]>} : vector<2x8x8xbf16>, vector<2x8x8xbf16>, vector<2x8x8xf32> -> vector<2x8x8xf32>
    "tpu.trace_stop"() : () -> ()
    %cst_84 = arith.constant 0.176776692 : f32
    %256 = vector.broadcast %cst_84 : f32 to vector<2x8x8xf32>
    %257 = arith.mulf %255, %256 : vector<2x8x8xf32>
    %258 = vector.shape_cast %19 : vector<8x8xf32> to vector<1x8x8xf32>
    %259 = vector.broadcast %258 : vector<1x8x8xf32> to vector<2x8x8xf32>
    %260 = arith.addf %257, %259 : vector<2x8x8xf32>
    %cst_85 = arith.constant dense<0xFF800000> : vector<2x8xf32>
    %261 = vector.multi_reduction <maximumf>, %260, %cst_85 [2] : vector<2x8x8xf32> to vector<2x8xf32>
    %262 = vector.shape_cast %261 : vector<2x8xf32> to vector<2x8x1xf32>
    %263 = vector.broadcast %262 : vector<2x8x1xf32> to vector<2x8x8xf32>
    %264 = arith.subf %260, %263 : vector<2x8x8xf32>
    %265 = math.exp %264 : vector<2x8x8xf32>
    %cst_86 = arith.constant dense<0.000000e+00> : vector<2x8xf32>
    %266 = vector.multi_reduction <add>, %265, %cst_86 [2] : vector<2x8x8xf32> to vector<2x8xf32>
    %267 = vector.shape_cast %266 : vector<2x8xf32> to vector<2x8x1xf32>
    %268 = tpu.reciprocal %267 {approx = true} : vector<2x8x1xf32> -> vector<2x8x1xf32>
    %269 = vector.broadcast %268 : vector<2x8x1xf32> to vector<2x8x8xf32>
    %270 = arith.mulf %265, %269 : vector<2x8x8xf32>
    %271 = arith.truncf %270 : vector<2x8x8xf32> to vector<2x8x8xbf16>
    "tpu.trace_start"() <{level = 10 : i32, message = "bqk,bkd->bqd"}> : () -> ()
    %cst_87 = arith.constant dense<0.000000e+00> : vector<2x8x8xf32>
    %272 = tpu.matmul %271, %254, %cst_87 {dimension_numbers = #tpu.dot_dimension_numbers<[2], [1], [1], [2], [0, 0, 0, 1, 1, 2], [0], [0]>} : vector<2x8x8xbf16>, vector<2x8x8xbf16>, vector<2x8x8xf32> -> vector<2x8x8xf32>
    "tpu.trace_stop"() : () -> ()
    %273 = vector.shape_cast %272 : vector<2x8x8xf32> to vector<16x8xf32>
    %274 = arith.truncf %273 : vector<16x8xf32> to vector<16x8xbf16>
    %275 = vector.extract_strided_slice %247 {offsets = [0, 0], sizes = [8, 32], strides = [1, 1]} : vector<32x32xbf16> to vector<8x32xbf16>
    %cst_88 = arith.constant dense<0.000000e+00> : vector<16x32xf32>
    %276 = tpu.matmul %274, %275, %cst_88 {dimension_numbers = #tpu.dot_dimension_numbers<[1], [0], [0], [1], [0, 0, 1, 1], [], []>} : vector<16x8xbf16>, vector<8x32xbf16>, vector<16x32xf32> -> vector<16x32xf32>
    %277 = arith.addf %248, %276 : vector<16x32xf32>
    %278 = vector.extract_strided_slice %242 {offsets = [0, 8], sizes = [16, 8], strides = [1, 1]} : vector<16x32xbf16> to vector<16x8xbf16>
    %279 = vector.shape_cast %278 : vector<16x8xbf16> to vector<2x8x8xbf16>
    %280 = vector.extract_strided_slice %244 {offsets = [0, 8], sizes = [16, 8], strides = [1, 1]} : vector<16x32xbf16> to vector<16x8xbf16>
    %281 = vector.shape_cast %280 : vector<16x8xbf16> to vector<2x8x8xbf16>
    %282 = vector.extract_strided_slice %246 {offsets = [0, 8], sizes = [16, 8], strides = [1, 1]} : vector<16x32xbf16> to vector<16x8xbf16>
    %283 = vector.shape_cast %282 : vector<16x8xbf16> to vector<2x8x8xbf16>
    "tpu.trace_start"() <{level = 10 : i32, message = "bqd,bkd->bqk"}> : () -> ()
    %cst_89 = arith.constant dense<0.000000e+00> : vector<2x8x8xf32>
    %284 = tpu.matmul %279, %281, %cst_89 {dimension_numbers = #tpu.dot_dimension_numbers<[2], [2], [1], [1], [0, 0, 0, 1, 1, 1], [0], [0]>} : vector<2x8x8xbf16>, vector<2x8x8xbf16>, vector<2x8x8xf32> -> vector<2x8x8xf32>
    "tpu.trace_stop"() : () -> ()
    %cst_90 = arith.constant 0.176776692 : f32
    %285 = vector.broadcast %cst_90 : f32 to vector<2x8x8xf32>
    %286 = arith.mulf %284, %285 : vector<2x8x8xf32>
    %287 = vector.shape_cast %19 : vector<8x8xf32> to vector<1x8x8xf32>
    %288 = vector.broadcast %287 : vector<1x8x8xf32> to vector<2x8x8xf32>
    %289 = arith.addf %286, %288 : vector<2x8x8xf32>
    %cst_91 = arith.constant dense<0xFF800000> : vector<2x8xf32>
    %290 = vector.multi_reduction <maximumf>, %289, %cst_91 [2] : vector<2x8x8xf32> to vector<2x8xf32>
    %291 = vector.shape_cast %290 : vector<2x8xf32> to vector<2x8x1xf32>
    %292 = vector.broadcast %291 : vector<2x8x1xf32> to vector<2x8x8xf32>
    %293 = arith.subf %289, %292 : vector<2x8x8xf32>
    %294 = math.exp %293 : vector<2x8x8xf32>
    %cst_92 = arith.constant dense<0.000000e+00> : vector<2x8xf32>
    %295 = vector.multi_reduction <add>, %294, %cst_92 [2] : vector<2x8x8xf32> to vector<2x8xf32>
    %296 = vector.shape_cast %295 : vector<2x8xf32> to vector<2x8x1xf32>
    %297 = tpu.reciprocal %296 {approx = true} : vector<2x8x1xf32> -> vector<2x8x1xf32>
    %298 = vector.broadcast %297 : vector<2x8x1xf32> to vector<2x8x8xf32>
    %299 = arith.mulf %294, %298 : vector<2x8x8xf32>
    %300 = arith.truncf %299 : vector<2x8x8xf32> to vector<2x8x8xbf16>
    "tpu.trace_start"() <{level = 10 : i32, message = "bqk,bkd->bqd"}> : () -> ()
    %cst_93 = arith.constant dense<0.000000e+00> : vector<2x8x8xf32>
    %301 = tpu.matmul %300, %283, %cst_93 {dimension_numbers = #tpu.dot_dimension_numbers<[2], [1], [1], [2], [0, 0, 0, 1, 1, 2], [0], [0]>} : vector<2x8x8xbf16>, vector<2x8x8xbf16>, vector<2x8x8xf32> -> vector<2x8x8xf32>
    "tpu.trace_stop"() : () -> ()
    %302 = vector.shape_cast %301 : vector<2x8x8xf32> to vector<16x8xf32>
    %303 = arith.truncf %302 : vector<16x8xf32> to vector<16x8xbf16>
    %304 = vector.extract_strided_slice %247 {offsets = [8, 0], sizes = [8, 32], strides = [1, 1]} : vector<32x32xbf16> to vector<8x32xbf16>
    %cst_94 = arith.constant dense<0.000000e+00> : vector<16x32xf32>
    %305 = tpu.matmul %303, %304, %cst_94 {dimension_numbers = #tpu.dot_dimension_numbers<[1], [0], [0], [1], [0, 0, 1, 1], [], []>} : vector<16x8xbf16>, vector<8x32xbf16>, vector<16x32xf32> -> vector<16x32xf32>
    %306 = arith.addf %277, %305 : vector<16x32xf32>
    %307 = vector.extract_strided_slice %242 {offsets = [0, 16], sizes = [16, 8], strides = [1, 1]} : vector<16x32xbf16> to vector<16x8xbf16>
    %308 = vector.shape_cast %307 : vector<16x8xbf16> to vector<2x8x8xbf16>
    %309 = vector.extract_strided_slice %244 {offsets = [0, 16], sizes = [16, 8], strides = [1, 1]} : vector<16x32xbf16> to vector<16x8xbf16>
    %310 = vector.shape_cast %309 : vector<16x8xbf16> to vector<2x8x8xbf16>
    %311 = vector.extract_strided_slice %246 {offsets = [0, 16], sizes = [16, 8], strides = [1, 1]} : vector<16x32xbf16> to vector<16x8xbf16>
    %312 = vector.shape_cast %311 : vector<16x8xbf16> to vector<2x8x8xbf16>
    "tpu.trace_start"() <{level = 10 : i32, message = "bqd,bkd->bqk"}> : () -> ()
    %cst_95 = arith.constant dense<0.000000e+00> : vector<2x8x8xf32>
    %313 = tpu.matmul %308, %310, %cst_95 {dimension_numbers = #tpu.dot_dimension_numbers<[2], [2], [1], [1], [0, 0, 0, 1, 1, 1], [0], [0]>} : vector<2x8x8xbf16>, vector<2x8x8xbf16>, vector<2x8x8xf32> -> vector<2x8x8xf32>
    "tpu.trace_stop"() : () -> ()
    %cst_96 = arith.constant 0.176776692 : f32
    %314 = vector.broadcast %cst_96 : f32 to vector<2x8x8xf32>
    %315 = arith.mulf %313, %314 : vector<2x8x8xf32>
    %316 = vector.shape_cast %19 : vector<8x8xf32> to vector<1x8x8xf32>
    %317 = vector.broadcast %316 : vector<1x8x8xf32> to vector<2x8x8xf32>
    %318 = arith.addf %315, %317 : vector<2x8x8xf32>
    %cst_97 = arith.constant dense<0xFF800000> : vector<2x8xf32>
    %319 = vector.multi_reduction <maximumf>, %318, %cst_97 [2] : vector<2x8x8xf32> to vector<2x8xf32>
    %320 = vector.shape_cast %319 : vector<2x8xf32> to vector<2x8x1xf32>
    %321 = vector.broadcast %320 : vector<2x8x1xf32> to vector<2x8x8xf32>
    %322 = arith.subf %318, %321 : vector<2x8x8xf32>
    %323 = math.exp %322 : vector<2x8x8xf32>
    %cst_98 = arith.constant dense<0.000000e+00> : vector<2x8xf32>
    %324 = vector.multi_reduction <add>, %323, %cst_98 [2] : vector<2x8x8xf32> to vector<2x8xf32>
    %325 = vector.shape_cast %324 : vector<2x8xf32> to vector<2x8x1xf32>
    %326 = tpu.reciprocal %325 {approx = true} : vector<2x8x1xf32> -> vector<2x8x1xf32>
    %327 = vector.broadcast %326 : vector<2x8x1xf32> to vector<2x8x8xf32>
    %328 = arith.mulf %323, %327 : vector<2x8x8xf32>
    %329 = arith.truncf %328 : vector<2x8x8xf32> to vector<2x8x8xbf16>
    "tpu.trace_start"() <{level = 10 : i32, message = "bqk,bkd->bqd"}> : () -> ()
    %cst_99 = arith.constant dense<0.000000e+00> : vector<2x8x8xf32>
    %330 = tpu.matmul %329, %312, %cst_99 {dimension_numbers = #tpu.dot_dimension_numbers<[2], [1], [1], [2], [0, 0, 0, 1, 1, 2], [0], [0]>} : vector<2x8x8xbf16>, vector<2x8x8xbf16>, vector<2x8x8xf32> -> vector<2x8x8xf32>
    "tpu.trace_stop"() : () -> ()
    %331 = vector.shape_cast %330 : vector<2x8x8xf32> to vector<16x8xf32>
    %332 = arith.truncf %331 : vector<16x8xf32> to vector<16x8xbf16>
    %333 = vector.extract_strided_slice %247 {offsets = [16, 0], sizes = [8, 32], strides = [1, 1]} : vector<32x32xbf16> to vector<8x32xbf16>
    %cst_100 = arith.constant dense<0.000000e+00> : vector<16x32xf32>
    %334 = tpu.matmul %332, %333, %cst_100 {dimension_numbers = #tpu.dot_dimension_numbers<[1], [0], [0], [1], [0, 0, 1, 1], [], []>} : vector<16x8xbf16>, vector<8x32xbf16>, vector<16x32xf32> -> vector<16x32xf32>
    %335 = arith.addf %306, %334 : vector<16x32xf32>
    %336 = vector.extract_strided_slice %242 {offsets = [0, 24], sizes = [16, 8], strides = [1, 1]} : vector<16x32xbf16> to vector<16x8xbf16>
    %337 = vector.shape_cast %336 : vector<16x8xbf16> to vector<2x8x8xbf16>
    %338 = vector.extract_strided_slice %244 {offsets = [0, 24], sizes = [16, 8], strides = [1, 1]} : vector<16x32xbf16> to vector<16x8xbf16>
    %339 = vector.shape_cast %338 : vector<16x8xbf16> to vector<2x8x8xbf16>
    %340 = vector.extract_strided_slice %246 {offsets = [0, 24], sizes = [16, 8], strides = [1, 1]} : vector<16x32xbf16> to vector<16x8xbf16>
    %341 = vector.shape_cast %340 : vector<16x8xbf16> to vector<2x8x8xbf16>
    "tpu.trace_start"() <{level = 10 : i32, message = "bqd,bkd->bqk"}> : () -> ()
    %cst_101 = arith.constant dense<0.000000e+00> : vector<2x8x8xf32>
    %342 = tpu.matmul %337, %339, %cst_101 {dimension_numbers = #tpu.dot_dimension_numbers<[2], [2], [1], [1], [0, 0, 0, 1, 1, 1], [0], [0]>} : vector<2x8x8xbf16>, vector<2x8x8xbf16>, vector<2x8x8xf32> -> vector<2x8x8xf32>
    "tpu.trace_stop"() : () -> ()
    %cst_102 = arith.constant 0.176776692 : f32
    %343 = vector.broadcast %cst_102 : f32 to vector<2x8x8xf32>
    %344 = arith.mulf %342, %343 : vector<2x8x8xf32>
    %345 = vector.shape_cast %19 : vector<8x8xf32> to vector<1x8x8xf32>
    %346 = vector.broadcast %345 : vector<1x8x8xf32> to vector<2x8x8xf32>
    %347 = arith.addf %344, %346 : vector<2x8x8xf32>
    %cst_103 = arith.constant dense<0xFF800000> : vector<2x8xf32>
    %348 = vector.multi_reduction <maximumf>, %347, %cst_103 [2] : vector<2x8x8xf32> to vector<2x8xf32>
    %349 = vector.shape_cast %348 : vector<2x8xf32> to vector<2x8x1xf32>
    %350 = vector.broadcast %349 : vector<2x8x1xf32> to vector<2x8x8xf32>
    %351 = arith.subf %347, %350 : vector<2x8x8xf32>
    %352 = math.exp %351 : vector<2x8x8xf32>
    %cst_104 = arith.constant dense<0.000000e+00> : vector<2x8xf32>
    %353 = vector.multi_reduction <add>, %352, %cst_104 [2] : vector<2x8x8xf32> to vector<2x8xf32>
    %354 = vector.shape_cast %353 : vector<2x8xf32> to vector<2x8x1xf32>
    %355 = tpu.reciprocal %354 {approx = true} : vector<2x8x1xf32> -> vector<2x8x1xf32>
    %356 = vector.broadcast %355 : vector<2x8x1xf32> to vector<2x8x8xf32>
    %357 = arith.mulf %352, %356 : vector<2x8x8xf32>
    %358 = arith.truncf %357 : vector<2x8x8xf32> to vector<2x8x8xbf16>
    "tpu.trace_start"() <{level = 10 : i32, message = "bqk,bkd->bqd"}> : () -> ()
    %cst_105 = arith.constant dense<0.000000e+00> : vector<2x8x8xf32>
    %359 = tpu.matmul %358, %341, %cst_105 {dimension_numbers = #tpu.dot_dimension_numbers<[2], [1], [1], [2], [0, 0, 0, 1, 1, 2], [0], [0]>} : vector<2x8x8xbf16>, vector<2x8x8xbf16>, vector<2x8x8xf32> -> vector<2x8x8xf32>
    "tpu.trace_stop"() : () -> ()
    %360 = vector.shape_cast %359 : vector<2x8x8xf32> to vector<16x8xf32>
    %361 = arith.truncf %360 : vector<16x8xf32> to vector<16x8xbf16>
    %362 = vector.extract_strided_slice %247 {offsets = [24, 0], sizes = [8, 32], strides = [1, 1]} : vector<32x32xbf16> to vector<8x32xbf16>
    %cst_106 = arith.constant dense<0.000000e+00> : vector<16x32xf32>
    %363 = tpu.matmul %361, %362, %cst_106 {dimension_numbers = #tpu.dot_dimension_numbers<[1], [0], [0], [1], [0, 0, 1, 1], [], []>} : vector<16x8xbf16>, vector<8x32xbf16>, vector<16x32xf32> -> vector<16x32xf32>
    %364 = arith.addf %335, %363 : vector<16x32xf32>
    %365 = arith.addf %213, %364 : vector<16x32xf32>
    %c0_107 = arith.constant 0 : index
    %c0_108 = arith.constant 0 : index
    %366 = vector.load %arg19[%c0_107, %c0_108] : memref<1x32xf32, #tpu.memory_space<vmem>>, vector<1x32xf32>
    %367 = vector.broadcast %366 : vector<1x32xf32> to vector<16x32xf32>
    %368 = arith.addf %365, %367 : vector<16x32xf32>
    %c0_109 = arith.constant 0 : index
    %c0_110 = arith.constant 0 : index
    %369 = vector.load %arg20[%c0_109, %c0_110] : memref<1x32xf32, #tpu.memory_space<vmem>>, vector<1x32xf32>
    %c0_111 = arith.constant 0 : index
    %c0_112 = arith.constant 0 : index
    %370 = vector.load %arg21[%c0_111, %c0_112] : memref<1x32xf32, #tpu.memory_space<vmem>>, vector<1x32xf32>
    %cst_113 = arith.constant dense<0.000000e+00> : vector<16xf32>
    %371 = vector.multi_reduction <add>, %368, %cst_113 [1] : vector<16x32xf32> to vector<16xf32>
    %372 = vector.shape_cast %371 : vector<16xf32> to vector<16x1xf32>
    %cst_114 = arith.constant 3.200000e+01 : f32
    %373 = vector.broadcast %cst_114 : f32 to vector<16x1xf32>
    %374 = arith.divf %372, %373 : vector<16x1xf32>
    %375 = vector.broadcast %374 : vector<16x1xf32> to vector<16x32xf32>
    %376 = arith.subf %368, %375 : vector<16x32xf32>
    %377 = arith.mulf %376, %376 : vector<16x32xf32>
    %cst_115 = arith.constant dense<0.000000e+00> : vector<16xf32>
    %378 = vector.multi_reduction <add>, %377, %cst_115 [1] : vector<16x32xf32> to vector<16xf32>
    %379 = vector.shape_cast %378 : vector<16xf32> to vector<16x1xf32>
    %cst_116 = arith.constant 3.200000e+01 : f32
    %380 = vector.broadcast %cst_116 : f32 to vector<16x1xf32>
    %381 = arith.divf %379, %380 : vector<16x1xf32>
    %382 = vector.broadcast %374 : vector<16x1xf32> to vector<16x32xf32>
    %383 = arith.subf %368, %382 : vector<16x32xf32>
    %cst_117 = arith.constant 9.99999974E-6 : f32
    %384 = vector.broadcast %cst_117 : f32 to vector<16x1xf32>
    %385 = arith.addf %381, %384 : vector<16x1xf32>
    %386 = math.rsqrt %385 : vector<16x1xf32>
    %387 = vector.broadcast %386 : vector<16x1xf32> to vector<16x32xf32>
    %388 = arith.mulf %383, %387 : vector<16x32xf32>
    %389 = vector.broadcast %369 : vector<1x32xf32> to vector<16x32xf32>
    %390 = arith.mulf %388, %389 : vector<16x32xf32>
    %391 = vector.broadcast %370 : vector<1x32xf32> to vector<16x32xf32>
    %392 = arith.addf %390, %391 : vector<16x32xf32>
    %393 = arith.truncf %392 : vector<16x32xf32> to vector<16x32xbf16>
    %c0_118 = arith.constant 0 : index
    %c0_119 = arith.constant 0 : index
    %394 = vector.load %arg22[%c0_118, %c0_119] : memref<32x128xbf16, #tpu.memory_space<vmem>>, vector<32x128xbf16>
    %cst_120 = arith.constant dense<0.000000e+00> : vector<16x128xf32>
    %395 = tpu.matmul %393, %394, %cst_120 {dimension_numbers = #tpu.dot_dimension_numbers<[1], [0], [0], [1], [0, 0, 1, 1], [], []>} : vector<16x32xbf16>, vector<32x128xbf16>, vector<16x128xf32> -> vector<16x128xf32>
    %c0_121 = arith.constant 0 : index
    %c0_122 = arith.constant 0 : index
    %396 = vector.load %arg23[%c0_121, %c0_122] : memref<1x128xf32, #tpu.memory_space<vmem>>, vector<1x128xf32>
    %397 = vector.broadcast %396 : vector<1x128xf32> to vector<16x128xf32>
    %398 = arith.addf %395, %397 : vector<16x128xf32>
    %cst_123 = arith.constant 0.000000e+00 : f32
    %399 = vector.broadcast %cst_123 : f32 to vector<16x128xf32>
    %400 = arith.maximumf %398, %399 : vector<16x128xf32>
    %401 = arith.truncf %400 : vector<16x128xf32> to vector<16x128xbf16>
    %c0_124 = arith.constant 0 : index
    %c0_125 = arith.constant 0 : index
    %402 = vector.load %arg24[%c0_124, %c0_125] : memref<128x32xbf16, #tpu.memory_space<vmem>>, vector<128x32xbf16>
    %cst_126 = arith.constant dense<0.000000e+00> : vector<16x32xf32>
    %403 = tpu.matmul %401, %402, %cst_126 {dimension_numbers = #tpu.dot_dimension_numbers<[1], [0], [0], [1], [0, 0, 1, 1], [], []>} : vector<16x128xbf16>, vector<128x32xbf16>, vector<16x32xf32> -> vector<16x32xf32>
    %c0_127 = arith.constant 0 : index
    %c0_128 = arith.constant 0 : index
    %404 = vector.load %arg25[%c0_127, %c0_128] : memref<1x32xf32, #tpu.memory_space<vmem>>, vector<1x32xf32>
    %405 = vector.broadcast %404 : vector<1x32xf32> to vector<16x32xf32>
    %406 = arith.addf %403, %405 : vector<16x32xf32>
    %407 = arith.addf %368, %406 : vector<16x32xf32>
    %c0_129 = arith.constant 0 : index
    %c0_130 = arith.constant 0 : index
    %408 = vector.load %arg26[%c0_129, %c0_130] : memref<1x32xf32, #tpu.memory_space<vmem>>, vector<1x32xf32>
    %c0_131 = arith.constant 0 : index
    %c0_132 = arith.constant 0 : index
    %409 = vector.load %arg27[%c0_131, %c0_132] : memref<1x32xf32, #tpu.memory_space<vmem>>, vector<1x32xf32>
    %cst_133 = arith.constant dense<0.000000e+00> : vector<16xf32>
    %410 = vector.multi_reduction <add>, %407, %cst_133 [1] : vector<16x32xf32> to vector<16xf32>
    %411 = vector.shape_cast %410 : vector<16xf32> to vector<16x1xf32>
    %cst_134 = arith.constant 3.200000e+01 : f32
    %412 = vector.broadcast %cst_134 : f32 to vector<16x1xf32>
    %413 = arith.divf %411, %412 : vector<16x1xf32>
    %414 = vector.broadcast %413 : vector<16x1xf32> to vector<16x32xf32>
    %415 = arith.subf %407, %414 : vector<16x32xf32>
    %416 = arith.mulf %415, %415 : vector<16x32xf32>
    %cst_135 = arith.constant dense<0.000000e+00> : vector<16xf32>
    %417 = vector.multi_reduction <add>, %416, %cst_135 [1] : vector<16x32xf32> to vector<16xf32>
    %418 = vector.shape_cast %417 : vector<16xf32> to vector<16x1xf32>
    %cst_136 = arith.constant 3.200000e+01 : f32
    %419 = vector.broadcast %cst_136 : f32 to vector<16x1xf32>
    %420 = arith.divf %418, %419 : vector<16x1xf32>
    %421 = vector.broadcast %413 : vector<16x1xf32> to vector<16x32xf32>
    %422 = arith.subf %407, %421 : vector<16x32xf32>
    %cst_137 = arith.constant 9.99999974E-6 : f32
    %423 = vector.broadcast %cst_137 : f32 to vector<16x1xf32>
    %424 = arith.addf %420, %423 : vector<16x1xf32>
    %425 = math.rsqrt %424 : vector<16x1xf32>
    %426 = vector.broadcast %425 : vector<16x1xf32> to vector<16x32xf32>
    %427 = arith.mulf %422, %426 : vector<16x32xf32>
    %428 = vector.broadcast %408 : vector<1x32xf32> to vector<16x32xf32>
    %429 = arith.mulf %427, %428 : vector<16x32xf32>
    %430 = vector.broadcast %409 : vector<1x32xf32> to vector<16x32xf32>
    %431 = arith.addf %429, %430 : vector<16x32xf32>
    %432 = arith.truncf %431 : vector<16x32xf32> to vector<16x32xbf16>
    %c0_138 = arith.constant 0 : index
    %c0_139 = arith.constant 0 : index
    %433 = vector.load %arg28[%c0_138, %c0_139] : memref<32x128xbf16, #tpu.memory_space<vmem>>, vector<32x128xbf16>
    %cst_140 = arith.constant dense<0.000000e+00> : vector<16x128xf32>
    %434 = tpu.matmul %432, %433, %cst_140 {dimension_numbers = #tpu.dot_dimension_numbers<[1], [0], [0], [1], [0, 0, 1, 1], [], []>} : vector<16x32xbf16>, vector<32x128xbf16>, vector<16x128xf32> -> vector<16x128xf32>
    %c0_141 = arith.constant 0 : index
    %c0_142 = arith.constant 0 : index
    %435 = vector.load %arg29[%c0_141, %c0_142] : memref<1x128xf32, #tpu.memory_space<vmem>>, vector<1x128xf32>
    %436 = vector.broadcast %435 : vector<1x128xf32> to vector<16x128xf32>
    %437 = arith.addf %434, %436 : vector<16x128xf32>
    %c0_143 = arith.constant 0 : index
    %c0_144 = arith.constant 0 : index
    %438 = vector.load %arg30[%c0_143, %c0_144] : memref<16x128xf32, #tpu.memory_space<vmem>>, vector<16x128xf32>
    tpu.vector_store %arg30[%c0_143, %c0_144], %437 {strides = array<i32>} : memref<16x128xf32, #tpu.memory_space<vmem>>, vector<16x128xf32>,
    return
  }
  func.func @transform_0(%arg0: i32) -> (i32, i32) {
    %c0_i32 = arith.constant 0 : i32
    %c0_i32_0 = arith.constant 0 : i32
    %c0_i32_1 = arith.constant 0 : i32
    return %c0_i32, %c0_i32_0 : i32, i32
  }
  func.func @transform_1(%arg0: i32) -> (i32, i32) {
    %c0_i32 = arith.constant 0 : i32
    %c0_i32_0 = arith.constant 0 : i32
    %c0_i32_1 = arith.constant 0 : i32
    return %c0_i32, %c0_i32_0 : i32, i32
  }
  func.func @transform_2(%arg0: i32) -> (i32, i32) {
    %c0_i32 = arith.constant 0 : i32
    %c0_i32_0 = arith.constant 0 : i32
    %c0_i32_1 = arith.constant 0 : i32
    return %c0_i32, %c0_i32_0 : i32, i32
  }
  func.func @transform_3(%arg0: i32) -> (i32, i32) {
    %c0_i32 = arith.constant 0 : i32
    %c0_i32_0 = arith.constant 0 : i32
    %c0_i32_1 = arith.constant 0 : i32
    return %c0_i32, %c0_i32_0 : i32, i32
  }
  func.func @transform_4(%arg0: i32) -> (i32, i32) {
    %c0_i32 = arith.constant 0 : i32
    %c0_i32_0 = arith.constant 0 : i32
    %c0_i32_1 = arith.constant 0 : i32
    return %c0_i32, %c0_i32_0 : i32, i32
  }
  func.func @transform_5(%arg0: i32) -> (i32, i32) {
    %c0_i32 = arith.constant 0 : i32
    %c0_i32_0 = arith.constant 0 : i32
    %c0_i32_1 = arith.constant 0 : i32
    return %c0_i32, %c0_i32_0 : i32, i32
  }
  func.func @transform_6(%arg0: i32) -> (i32, i32) {
    %c0_i32 = arith.constant 0 : i32
    %c0_i32_0 = arith.constant 0 : i32
    %c0_i32_1 = arith.constant 0 : i32
    return %c0_i32, %c0_i32_0 : i32, i32
  }
  func.func @transform_7(%arg0: i32) -> (i32, i32) {
    %c0_i32 = arith.constant 0 : i32
    %c0_i32_0 = arith.constant 0 : i32
    %c0_i32_1 = arith.constant 0 : i32
    return %c0_i32, %c0_i32_0 : i32, i32
  }
  func.func @transform_8(%arg0: i32) -> (i32, i32) {
    %c0_i32 = arith.constant 0 : i32
    %c0_i32_0 = arith.constant 0 : i32
    %c0_i32_1 = arith.constant 0 : i32
    return %c0_i32, %c0_i32_0 : i32, i32
  }
  func.func @transform_9(%arg0: i32) -> (i32, i32) {
    %c0_i32 = arith.constant 0 : i32
    %c0_i32_0 = arith.constant 0 : i32
    %c0_i32_1 = arith.constant 0 : i32
    return %c0_i32, %c0_i32_0 : i32, i32
  }
  func.func @transform_10(%arg0: i32) -> (i32, i32) {
    %c0_i32 = arith.constant 0 : i32
    %c0_i32_0 = arith.constant 0 : i32
    %c0_i32_1 = arith.constant 0 : i32
    return %c0_i32, %c0_i32_0 : i32, i32
  }
  func.func @transform_11(%arg0: i32) -> (i32, i32) {
    %c0_i32 = arith.constant 0 : i32
    %c0_i32_0 = arith.constant 0 : i32
    %c0_i32_1 = arith.constant 0 : i32
    return %c0_i32, %c0_i32_0 : i32, i32
  }
  func.func @transform_12(%arg0: i32) -> (i32, i32) {
    %c0_i32 = arith.constant 0 : i32
    %c0_i32_0 = arith.constant 0 : i32
    %c0_i32_1 = arith.constant 0 : i32
    return %c0_i32, %c0_i32_0 : i32, i32
  }
  func.func @transform_13(%arg0: i32) -> (i32, i32) {
    %c0_i32 = arith.constant 0 : i32
    %c0_i32_0 = arith.constant 0 : i32
    %c0_i32_1 = arith.constant 0 : i32
    return %c0_i32, %c0_i32_0 : i32, i32
  }
  func.func @transform_14(%arg0: i32) -> (i32, i32) {
    %c0_i32 = arith.constant 0 : i32
    %c0_i32_0 = arith.constant 0 : i32
    %c0_i32_1 = arith.constant 0 : i32
    return %c0_i32, %c0_i32_0 : i32, i32
  }
  func.func @transform_15(%arg0: i32) -> (i32, i32) {
    %c0_i32 = arith.constant 0 : i32
    %c0_i32_0 = arith.constant 0 : i32
    %c0_i32_1 = arith.constant 0 : i32
    return %c0_i32, %c0_i32_0 : i32, i32
  }
  func.func @transform_16(%arg0: i32) -> (i32, i32) {
    %c0_i32 = arith.constant 0 : i32
    %c0_i32_0 = arith.constant 0 : i32
    %c0_i32_1 = arith.constant 0 : i32
    return %c0_i32, %c0_i32_0 : i32, i32
  }
  func.func @transform_17(%arg0: i32) -> (i32, i32) {
    %c0_i32 = arith.constant 0 : i32
    %c0_i32_0 = arith.constant 0 : i32
    %c0_i32_1 = arith.constant 0 : i32
    return %c0_i32, %c0_i32_0 : i32, i32
  }
  func.func @transform_18(%arg0: i32) -> (i32, i32) {
    %c0_i32 = arith.constant 0 : i32
    %c0_i32_0 = arith.constant 0 : i32
    %c0_i32_1 = arith.constant 0 : i32
    return %c0_i32, %c0_i32_0 : i32, i32
  }
  func.func @transform_19(%arg0: i32) -> (i32, i32) {
    %c0_i32 = arith.constant 0 : i32
    %c0_i32_0 = arith.constant 0 : i32
    %c0_i32_1 = arith.constant 0 : i32
    return %c0_i32, %c0_i32_0 : i32, i32
  }
  func.func @transform_20(%arg0: i32) -> (i32, i32) {
    %c0_i32 = arith.constant 0 : i32
    %c0_i32_0 = arith.constant 0 : i32
    %c0_i32_1 = arith.constant 0 : i32
    return %c0_i32, %c0_i32_0 : i32, i32
  }
  func.func @transform_21(%arg0: i32) -> (i32, i32) {
    %c0_i32 = arith.constant 0 : i32
    %c0_i32_0 = arith.constant 0 : i32
    %c0_i32_1 = arith.constant 0 : i32
    return %c0_i32, %c0_i32_0 : i32, i32
  }
  func.func @transform_22(%arg0: i32) -> (i32, i32) {
    %c0_i32 = arith.constant 0 : i32
    %c0_i32_0 = arith.constant 0 : i32
    %c0_i32_1 = arith.constant 0 : i32
    return %c0_i32, %c0_i32_0 : i32, i32
  }
  func.func @transform_23(%arg0: i32) -> (i32, i32) {
    %c0_i32 = arith.constant 0 : i32
    %c0_i32_0 = arith.constant 0 : i32
    %c0_i32_1 = arith.constant 0 : i32
    return %c0_i32, %c0_i32_0 : i32, i32
  }
  func.func @transform_24(%arg0: i32) -> (i32, i32) {
    %c0_i32 = arith.constant 0 : i32
    %c0_i32_0 = arith.constant 0 : i32
    %c0_i32_1 = arith.constant 0 : i32
    return %c0_i32, %c0_i32_0 : i32, i32
  }
  func.func @transform_25(%arg0: i32) -> (i32, i32) {
    %c0_i32 = arith.constant 0 : i32
    %c0_i32_0 = arith.constant 0 : i32
    %c0_i32_1 = arith.constant 0 : i32
    return %c0_i32, %c0_i32_0 : i32, i32
  }
  func.func @transform_26(%arg0: i32) -> (i32, i32) {
    %c0_i32 = arith.constant 0 : i32
    %c0_i32_0 = arith.constant 0 : i32
    %c0_i32_1 = arith.constant 0 : i32
    return %c0_i32, %c0_i32_0 : i32, i32
  }
  func.func @transform_27(%arg0: i32) -> (i32, i32) {
    %c0_i32 = arith.constant 0 : i32
    %c0_i32_0 = arith.constant 0 : i32
    %c0_i32_1 = arith.constant 0 : i32
    return %c0_i32, %c0_i32_0 : i32, i32
  }
  func.func @transform_28(%arg0: i32) -> (i32, i32) {
    %c0_i32 = arith.constant 0 : i32
    %c0_i32_0 = arith.constant 0 : i32
    %c0_i32_1 = arith.constant 0 : i32
    return %c0_i32, %c0_i32_0 : i32, i32
  }
  func.func @transform_29(%arg0: i32) -> (i32, i32) {
    %c0_i32 = arith.constant 0 : i32
    %c0_i32_0 = arith.constant 0 : i32
    %c0_i32_1 = arith.constant 0 : i32
    return %c0_i32, %c0_i32_0 : i32, i32
  }
}

</mosaic_0001>

<llo_original>
// kernel: tpu_custom_call.1
$region0: #{tpu_custom_call.1}
  #allocation0 [shape = 'u32[]', space=smem, size = 0x4, offset = 0x4, fixed_abs, tag = 'smem constant byte address 0x4 - core index']
  #allocation1 [shape = 'u32[144,128]{1,0:T(1,128)}', space=vmem, size = 0x12000, scoped, tag = 'internal scratch']
  %s0 = inlined_call_operand.smem [shape: u32[30], index: -1, kind: input, shape index: {}]
  %s1 = sld [smem:[%s0]]
  %s2 = scalar_lea.smem %s0, 1
  %s3 = sld [smem:[%s2]]
  %s4 = scalar_lea.smem %s0, 2
  %s5 = sld [smem:[%s4]]
  %s6 = scalar_lea.smem %s0, 3
  %s7 = sld [smem:[%s6]]
  %s8 = scalar_lea.smem %s0, 4
  %s9 = sld [smem:[%s8]]
  %s10 = scalar_lea.smem %s0, 5
  %s11 = sld [smem:[%s10]]
  %s12 = scalar_lea.smem %s0, 6
  %s13 = sld [smem:[%s12]]
  %s14 = scalar_lea.smem %s0, 7
  %s15 = sld [smem:[%s14]]
  %s16 = scalar_lea.smem %s0, 8
  %s17 = sld [smem:[%s16]]
  %s18 = scalar_lea.smem %s0, 9
  %s19 = sld [smem:[%s18]]
  %s20 = scalar_lea.smem %s0, 10
  %s21 = sld [smem:[%s20]]
  %s22 = scalar_lea.smem %s0, 11
  %s23 = sld [smem:[%s22]]
  %s24 = scalar_lea.smem %s0, 12
  %s25 = sld [smem:[%s24]]
  %s26 = scalar_lea.smem %s0, 13
  %s27 = sld [smem:[%s26]]
  %s28 = scalar_lea.smem %s0, 14
  %s29 = sld [smem:[%s28]]
  %s30 = scalar_lea.smem %s0, 15
  %s31 = sld [smem:[%s30]]
  %s32 = scalar_lea.smem %s0, 16
  %s33 = sld [smem:[%s32]]
  %s34 = scalar_lea.smem %s0, 17
  %s35 = sld [smem:[%s34]]
  %s36 = scalar_lea.smem %s0, 18
  %s37 = sld [smem:[%s36]]
  %s38 = scalar_lea.smem %s0, 19
  %s39 = sld [smem:[%s38]]
  %s40 = scalar_lea.smem %s0, 20
  %s41 = sld [smem:[%s40]]
  %s42 = scalar_lea.smem %s0, 21
  %s43 = sld [smem:[%s42]]
  %s44 = scalar_lea.smem %s0, 22
  %s45 = sld [smem:[%s44]]
  %s46 = scalar_lea.smem %s0, 23
  %s47 = sld [smem:[%s46]]
  %s48 = scalar_lea.smem %s0, 24
  %s49 = sld [smem:[%s48]]
  %s50 = scalar_lea.smem %s0, 25
  %s51 = sld [smem:[%s50]]
  %s52 = scalar_lea.smem %s0, 26
  %s53 = sld [smem:[%s52]]
  %s54 = scalar_lea.smem %s0, 27
  %s55 = sld [smem:[%s54]]
  %s56 = scalar_lea.smem %s0, 28
  %s57 = sld [smem:[%s56]]
  %s58 = scalar_lea.smem %s0, 29
  %s59 = sld [smem:[%s58]]
  %s60 = sld [smem:[#allocation0]]
  $region126: #{tpu_custom_call.1} parent=0
    _
  %s62 = ssub.s32 1, %s60
  %s63 = scalar_select 0, %s62, %s60
  $region1: #{tpu_custom_call.1} parent=0
    #allocation2 [shape = 'u8[8192]{0}', space=vmem, size = 0x2000, scoped, tag = 'output window, operand 0, single buffered']
    #allocation3 [shape = 's32[1]{0}', space=sflag, size = 0x4, scoped, tag = 'scoped memory for tpu_custom_call.1']
    %64 = vsyncpa [#allocation3], 0
    // Predicated region
    $region2: #{tpu_custom_call.1} parent=1 // pred_check
      _
    $region3: #{tpu_custom_call.1} parent=1 // pred_check_branch
      %66 = sbr.rel (0) target = $region5
    $region4: #{tpu_custom_call.1} parent=1 // pred_region
      _
    $region5: #{tpu_custom_call.1} parent=1 // pred_fallthru
      _
    // Predicated region
    $region6: #{tpu_custom_call.1} parent=1 // pred_check
      _
    $region7: #{tpu_custom_call.1} parent=1 // pred_check_branch
      %68 = sbr.rel (0) target = $region9
    $region8: #{tpu_custom_call.1} parent=1 // pred_region
      _
    $region9: #{tpu_custom_call.1} parent=1 // pred_fallthru
      _
    // Predicated region
    $region10: #{tpu_custom_call.1} parent=1 // pred_check
      _
    $region11: #{tpu_custom_call.1} parent=1 // pred_check_branch
      %70 = sbr.rel (0) target = $region13
    $region12: #{tpu_custom_call.1} parent=1 // pred_region
      _
    $region13: #{tpu_custom_call.1} parent=1 // pred_fallthru
      _
    // Predicated region
    $region14: #{tpu_custom_call.1} parent=1 // pred_check
      _
    $region15: #{tpu_custom_call.1} parent=1 // pred_check_branch
      %72 = sbr.rel (0) target = $region17
    $region16: #{tpu_custom_call.1} parent=1 // pred_region
      _
    $region17: #{tpu_custom_call.1} parent=1 // pred_fallthru
      _
    // Predicated region
    $region18: #{tpu_custom_call.1} parent=1 // pred_check
      _
    $region19: #{tpu_custom_call.1} parent=1 // pred_check_branch
      %74 = sbr.rel (0) target = $region21
    $region20: #{tpu_custom_call.1} parent=1 // pred_region
      _
    $region21: #{tpu_custom_call.1} parent=1 // pred_fallthru
      _
    // Predicated region
    $region22: #{tpu_custom_call.1} parent=1 // pred_check
      _
    $region23: #{tpu_custom_call.1} parent=1 // pred_check_branch
      %76 = sbr.rel (0) target = $region25
    $region24: #{tpu_custom_call.1} parent=1 // pred_region
      _
    $region25: #{tpu_custom_call.1} parent=1 // pred_fallthru
      _
    // Predicated region
    $region26: #{tpu_custom_call.1} parent=1 // pred_check
      _
    $region27: #{tpu_custom_call.1} parent=1 // pred_check_branch
      %78 = sbr.rel (0) target = $region29
    $region28: #{tpu_custom_call.1} parent=1 // pred_region
      _
    $region29: #{tpu_custom_call.1} parent=1 // pred_fallthru
      _
    // Predicated region
    $region30: #{tpu_custom_call.1} parent=1 // pred_check
      _
    $region31: #{tpu_custom_call.1} parent=1 // pred_check_branch
      %80 = sbr.rel (0) target = $region33
    $region32: #{tpu_custom_call.1} parent=1 // pred_region
      _
    $region33: #{tpu_custom_call.1} parent=1 // pred_fallthru
      _
    // Predicated region
    $region34: #{tpu_custom_call.1} parent=1 // pred_check
      _
    $region35: #{tpu_custom_call.1} parent=1 // pred_check_branch
      %82 = sbr.rel (0) target = $region37
    $region36: #{tpu_custom_call.1} parent=1 // pred_region
      _
    $region37: #{tpu_custom_call.1} parent=1 // pred_fallthru
      _
    // Predicated region
    $region38: #{tpu_custom_call.1} parent=1 // pred_check
      _
    $region39: #{tpu_custom_call.1} parent=1 // pred_check_branch
      %84 = sbr.rel (0) target = $region41
    $region40: #{tpu_custom_call.1} parent=1 // pred_region
      _
    $region41: #{tpu_custom_call.1} parent=1 // pred_fallthru
      _
    // Predicated region
    $region42: #{tpu_custom_call.1} parent=1 // pred_check
      _
    $region43: #{tpu_custom_call.1} parent=1 // pred_check_branch
      %86 = sbr.rel (0) target = $region45
    $region44: #{tpu_custom_call.1} parent=1 // pred_region
      _
    $region45: #{tpu_custom_call.1} parent=1 // pred_fallthru
      _
    // Predicated region
    $region46: #{tpu_custom_call.1} parent=1 // pred_check
      _
    $region47: #{tpu_custom_call.1} parent=1 // pred_check_branch
      %88 = sbr.rel (0) target = $region49
    $region48: #{tpu_custom_call.1} parent=1 // pred_region
      _
    $region49: #{tpu_custom_call.1} parent=1 // pred_fallthru
      _
    // Predicated region
    $region50: #{tpu_custom_call.1} parent=1 // pred_check
      _
    $region51: #{tpu_custom_call.1} parent=1 // pred_check_branch
      %90 = sbr.rel (0) target = $region53
    $region52: #{tpu_custom_call.1} parent=1 // pred_region
      _
    $region53: #{tpu_custom_call.1} parent=1 // pred_fallthru
      _
    // Predicated region
    $region54: #{tpu_custom_call.1} parent=1 // pred_check
      _
    $region55: #{tpu_custom_call.1} parent=1 // pred_check_branch
      %92 = sbr.rel (0) target = $region57
    $region56: #{tpu_custom_call.1} parent=1 // pred_region
      _
    $region57: #{tpu_custom_call.1} parent=1 // pred_fallthru
      _
    // Predicated region
    $region58: #{tpu_custom_call.1} parent=1 // pred_check
      _
    $region59: #{tpu_custom_call.1} parent=1 // pred_check_branch
      %94 = sbr.rel (0) target = $region61
    $region60: #{tpu_custom_call.1} parent=1 // pred_region
      _
    $region61: #{tpu_custom_call.1} parent=1 // pred_fallthru
      _
    // Predicated region
    $region62: #{tpu_custom_call.1} parent=1 // pred_check
      _
    $region63: #{tpu_custom_call.1} parent=1 // pred_check_branch
      %96 = sbr.rel (0) target = $region65
    $region64: #{tpu_custom_call.1} parent=1 // pred_region
      _
    $region65: #{tpu_custom_call.1} parent=1 // pred_fallthru
      _
    // Predicated region
    $region66: #{tpu_custom_call.1} parent=1 // pred_check
      _
    $region67: #{tpu_custom_call.1} parent=1 // pred_check_branch
      %98 = sbr.rel (0) target = $region69
    $region68: #{tpu_custom_call.1} parent=1 // pred_region
      _
    $region69: #{tpu_custom_call.1} parent=1 // pred_fallthru
      _
    // Predicated region
    $region70: #{tpu_custom_call.1} parent=1 // pred_check
      _
    $region71: #{tpu_custom_call.1} parent=1 // pred_check_branch
      %100 = sbr.rel (0) target = $region73
    $region72: #{tpu_custom_call.1} parent=1 // pred_region
      _
    $region73: #{tpu_custom_call.1} parent=1 // pred_fallthru
      _
    // Predicated region
    $region74: #{tpu_custom_call.1} parent=1 // pred_check
      _
    $region75: #{tpu_custom_call.1} parent=1 // pred_check_branch
      %102 = sbr.rel (0) target = $region77
    $region76: #{tpu_custom_call.1} parent=1 // pred_region
      _
    $region77: #{tpu_custom_call.1} parent=1 // pred_fallthru
      _
    // Predicated region
    $region78: #{tpu_custom_call.1} parent=1 // pred_check
      _
    $region79: #{tpu_custom_call.1} parent=1 // pred_check_branch
      %104 = sbr.rel (0) target = $region81
    $region80: #{tpu_custom_call.1} parent=1 // pred_region
      _
    $region81: #{tpu_custom_call.1} parent=1 // pred_fallthru
      _
    // Predicated region
    $region82: #{tpu_custom_call.1} parent=1 // pred_check
      _
    $region83: #{tpu_custom_call.1} parent=1 // pred_check_branch
      %106 = sbr.rel (0) target = $region85
    $region84: #{tpu_custom_call.1} parent=1 // pred_region
      _
    $region85: #{tpu_custom_call.1} parent=1 // pred_fallthru
      _
    // Predicated region
    $region86: #{tpu_custom_call.1} parent=1 // pred_check
      _
    $region87: #{tpu_custom_call.1} parent=1 // pred_check_branch
      %108 = sbr.rel (0) target = $region89
    $region88: #{tpu_custom_call.1} parent=1 // pred_region
      _
    $region89: #{tpu_custom_call.1} parent=1 // pred_fallthru
      _
    // Predicated region
    $region90: #{tpu_custom_call.1} parent=1 // pred_check
      _
    $region91: #{tpu_custom_call.1} parent=1 // pred_check_branch
      %110 = sbr.rel (0) target = $region93
    $region92: #{tpu_custom_call.1} parent=1 // pred_region
      _
    $region93: #{tpu_custom_call.1} parent=1 // pred_fallthru
      _
    // Predicated region
    $region94: #{tpu_custom_call.1} parent=1 // pred_check
      _
    $region95: #{tpu_custom_call.1} parent=1 // pred_check_branch
      %112 = sbr.rel (0) target = $region97
    $region96: #{tpu_custom_call.1} parent=1 // pred_region
      _
    $region97: #{tpu_custom_call.1} parent=1 // pred_fallthru
      _
    // Predicated region
    $region98: #{tpu_custom_call.1} parent=1 // pred_check
      _
    $region99: #{tpu_custom_call.1} parent=1 // pred_check_branch
      %114 = sbr.rel (0) target = $region101
    $region100: #{tpu_custom_call.1} parent=1 // pred_region
      _
    $region101: #{tpu_custom_call.1} parent=1 // pred_fallthru
      _
    // Predicated region
    $region102: #{tpu_custom_call.1} parent=1 // pred_check
      _
    $region103: #{tpu_custom_call.1} parent=1 // pred_check_branch
      %116 = sbr.rel (0) target = $region105
    $region104: #{tpu_custom_call.1} parent=1 // pred_region
      _
    $region105: #{tpu_custom_call.1} parent=1 // pred_fallthru
      _
    // Predicated region
    $region106: #{tpu_custom_call.1} parent=1 // pred_check
      _
    $region107: #{tpu_custom_call.1} parent=1 // pred_check_branch
      %118 = sbr.rel (0) target = $region109
    $region108: #{tpu_custom_call.1} parent=1 // pred_region
      _
    $region109: #{tpu_custom_call.1} parent=1 // pred_fallthru
      _
    // Predicated region
    $region110: #{tpu_custom_call.1} parent=1 // pred_check
      _
    $region111: #{tpu_custom_call.1} parent=1 // pred_check_branch
      %120 = sbr.rel (0) target = $region113
    $region112: #{tpu_custom_call.1} parent=1 // pred_region
      _
    $region113: #{tpu_custom_call.1} parent=1 // pred_fallthru
      _
    // Predicated region
    $region114: #{tpu_custom_call.1} parent=1 // pred_check
      _
    $region115: #{tpu_custom_call.1} parent=1 // pred_check_branch
      %122 = sbr.rel (0) target = $region117
    $region116: #{tpu_custom_call.1} parent=1 // pred_region
      _
    $region117: #{tpu_custom_call.1} parent=1 // pred_fallthru
      _
    %v124 = vld [vmem:[%s1] sm:$0xff]
    %v125 = vld [vmem:[%s1 + $0x8] sm:$0xff]
    %v126 = vlaneseq
    %v127 = vand.u32 %v126, 127
    %128 = vset.pattern.permute.xlu0 0
    %129 = vperm.xlu0 %128, %v124
    %v130 = vpop.permute.xlu0 %129
    %131 = vset.pattern.permute.xlu0 0
    %132 = vperm.xlu0 %131, %v125
    %v133 = vpop.permute.xlu0 %132
    %vm134 = vcmp.eq.s32.totalorder %v130, %v127
    %vm135 = vcmp.eq.s32.totalorder %v133, %v127
    %v136 = vsel %vm134, 1, 0
    %v137 = vsel %vm135, 1, 0
    %v138 = vcvt.s32.f32 %v136
    %v139 = vcvt.s32.f32 %v137
    %v140 = vld [vmem:[%s3] sm:$0xff]
    %v141 = vld [vmem:[%s3 + $0x8] sm:$0xff]
    %v142 = vld [vmem:[%s3 + $0x10] sm:$0xff]
    %v143 = vld [vmem:[%s3 + $0x18] sm:$0xff]
    %v144 = vld [vmem:[%s3 + $0x20] sm:$0xff]
    %v145 = vld [vmem:[%s3 + $0x28] sm:$0xff]
    %v146 = vld [vmem:[%s3 + $0x30] sm:$0xff]
    %v147 = vld [vmem:[%s3 + $0x38] sm:$0xff]
    %v148 = vld [vmem:[%s3 + $0x40] sm:$0xff]
    %v149 = vld [vmem:[%s3 + $0x48] sm:$0xff]
    %v150 = vld [vmem:[%s3 + $0x50] sm:$0xff]
    %v151 = vld [vmem:[%s3 + $0x58] sm:$0xff]
    %v152 = vld [vmem:[%s3 + $0x60] sm:$0xff]
    %v153 = vld [vmem:[%s3 + $0x68] sm:$0xff]
    %v154 = vld [vmem:[%s3 + $0x70] sm:$0xff]
    %v155 = vld [vmem:[%s3 + $0x78] sm:$0xff]
    %156 = vmatprep.subr.mxu0 0.0
    %157 = vmatpush1.msra.mxu0 %v140
    %158 = vmatprep.subr.mxu0 0.0
    %159 = vmatpush1.msra.mxu0 %v141
    %160 = vmatprep.subr.mxu0 0.0
    %161 = vmatpush1.msra.mxu0 %v142
    %162 = vmatprep.subr.mxu0 0.0
    %163 = vmatpush1.msra.mxu0 %v143
    %164 = vmatprep.subr.mxu0 0.0
    %165 = vmatpush1.msra.mxu0 %v144
    %166 = vmatprep.subr.mxu0 0.0
    %167 = vmatpush1.msra.mxu0 %v145
    %168 = vmatprep.subr.mxu0 0.0
    %169 = vmatpush1.msra.mxu0 %v146
    %170 = vmatprep.subr.mxu0 0.0
    %171 = vmatpush1.msra.mxu0 %v147
    %172 = vmatprep.subr.mxu0 0.0
    %173 = vmatpush1.msra.mxu0 %v148
    %174 = vmatprep.subr.mxu0 0.0
    %175 = vmatpush1.msra.mxu0 %v149
    %176 = vmatprep.subr.mxu0 0.0
    %177 = vmatpush1.msra.mxu0 %v150
    %178 = vmatprep.subr.mxu0 0.0
    %179 = vmatpush1.msra.mxu0 %v151
    %180 = vmatprep.subr.mxu0 0.0
    %181 = vmatpush1.msra.mxu0 %v152
    %182 = vmatprep.subr.mxu0 0.0
    %183 = vmatpush1.msra.mxu0 %v153
    %184 = vmatprep.subr.mxu0 0.0
    %185 = vmatpush1.msra.mxu0 %v154
    %186 = vmatprep.subr.mxu0 0.0
    %187 = vmatpush1.msra.mxu0 %v155
    %188 = vmatprep.subr.mxu0 0.0
    %189 = vmatpush1.msra.mxu0 0.0
    %190 = vmatprep.subr.mxu0 0.0
    %191 = vmatpush1.msra.mxu0 0.0
    %192 = vmatprep.subr.mxu0 0.0
    %193 = vmatpush1.msra.mxu0 0.0
    %194 = vmatprep.subr.mxu0 0.0
    %195 = vmatpush1.msra.mxu0 0.0
    %196 = vmatprep.subr.mxu0 0.0
    %197 = vmatpush1.msra.mxu0 0.0
    %198 = vmatprep.subr.mxu0 0.0
    %199 = vmatpush1.msra.mxu0 0.0
    %200 = vmatprep.subr.mxu0 0.0
    %201 = vmatpush1.msra.mxu0 0.0
    %202 = vmatprep.subr.mxu0 0.0
    %203 = vmatpush1.msra.mxu0 0.0
    %204 = vmatprep.subr.mxu0 0.0
    %205 = vmatpush1.msra.mxu0 0.0
    %206 = vmatprep.subr.mxu0 0.0
    %207 = vmatpush1.msra.mxu0 0.0
    %208 = vmatprep.subr.mxu0 0.0
    %209 = vmatpush1.msra.mxu0 0.0
    %210 = vmatprep.subr.mxu0 0.0
    %211 = vmatpush1.msra.mxu0 0.0
    %212 = vmatprep.subr.mxu0 0.0
    %213 = vmatpush1.msra.mxu0 0.0
    %214 = vmatprep.subr.mxu0 0.0
    %215 = vmatpush1.msra.mxu0 0.0
    %216 = vmatprep.subr.mxu0 0.0
    %217 = vmatpush1.msra.mxu0 0.0
    %218 = vmatprep.subr.mxu0 0.0
    %219 = vmatpush1.msra.mxu0 0.0
    %220 = vmatprep.mubr.f32.mxu0 0.0
    %221 = vmatmul.mubr.f32.gmra.mrb[0].mxu0 %v138
    %v222 = vpop.f32.mrb[0].mxu0
    %v223 = vadd.f32 0.0, %v222
    %v224 = vpop.f32.mrb[0].mxu0
    %225 = vmatprep.mubr.f32.mxu0 0.0
    %226 = vmatmul.mubr.f32.gmra.mrb[0].mxu0 %v139
    %v227 = vpop.f32.mrb[0].mxu0
    %v228 = vadd.f32 0.0, %v227
    %v229 = vpop.f32.mrb[0].mxu0
    %230 = vdwg.mxu0
    %v231 = vld [vmem:[%s5] sm:$0xff]
    %v232 = vadd.f32 %v223, %v231
    %v233 = vadd.f32 %v228, %v231
    %v234 = vlaneseq
    %v235 = vshrl.u32 %v234, 7
    %vm236 = vcmp.ge.s32.totalorder %v235, %v127
    %v237 = vsel %vm236, 0.0, -1e+30
    %v238 = vld [vmem:[%s7] sm:$0x1]
    %v239 = vld [vmem:[%s9] sm:$0x1]
    %vm240 = vcmask 261120
    %v241 = vsel %vm240, %v232, 0.0
    %242 = vadd.xlane.f32.xlu0 %v241
    %v243 = vpop.xlane.xlu0 %242
    %v244 = vsel %vm240, %v233, 0.0
    %245 = vadd.xlane.f32.xlu0 %v244
    %v246 = vpop.xlane.xlu0 %245
    %v247 = vrcp.pop 32.0
    %v248 = vmul.f32 %v243, %v247
    %v249 = vmul.f32 %v246, %v247
    %v250 = vsub.f32 %v232, %v248
    %v251 = vsub.f32 %v233, %v249
    %v252 = vmul.f32 %v250, %v250
    %v253 = vmul.f32 %v251, %v251
    %v254 = vsel %vm240, %v252, 0.0
    %255 = vadd.xlane.f32.xlu0 %v254
    %v256 = vpop.xlane.xlu0 %255
    %v257 = vsel %vm240, %v253, 0.0
    %258 = vadd.xlane.f32.xlu0 %v257
    %v259 = vpop.xlane.xlu0 %258
    %v260 = vmul.f32 %v256, %v247
    %v261 = vmul.f32 %v259, %v247
    %v262 = vadd.f32 %v260, 1e-05
    %v263 = vadd.f32 %v261, 1e-05
    %v264 = vrsqrt.pop %v262
    %v265 = vrsqrt.pop %v263
    %v266 = vmul.f32 %v250, %v264
    %v267 = vmul.f32 %v251, %v265
    %v269 = vlaneseq
    %v270 = vshrl.u32 %v269, 7
    %v271 = vsub.s32 0, %v270
    %v272 = vrot.slane %v238, %v271
    %v274 = vmul.f32 %v266, %v272
    %v275 = vmul.f32 %v267, %v272
    %v277 = vlaneseq
    %v278 = vshrl.u32 %v277, 7
    %v279 = vsub.s32 0, %v278
    %v280 = vrot.slane %v239, %v279
    %v282 = vadd.f32 %v274, %v280
    %v283 = vadd.f32 %v275, %v280
    %v284 = vpack.c.bf16 %v283, %v282
    %v285 = vld [vmem:[%s11] sm:$0xf]
    %v286 = vld [vmem:[%s11 + $0x4] sm:$0xf]
    %v287 = vld [vmem:[%s11 + $0x8] sm:$0xf]
    %v288 = vld [vmem:[%s11 + $0xc] sm:$0xf]
    %v293 = vunpack.c.l.b16 %v285
    %v294 = vunpack.c.l.b16 %v286
    %v295 = vunpack.c.l.b16 %v287
    %v296 = vunpack.c.l.b16 %v288
    %v297 = vpack.c.b16 %v294, %v293
    %v298 = vpack.c.b16 %v296, %v295
    %v302 = vsel %vm240, %v284, 0
    %304 = vmatprep.subr.bf16.mxu0 0
    %305 = vmatpush1.bf16.msra.mxu0 %v297
    %306 = vmatprep.subr.bf16.mxu0 0
    %307 = vmatpush1.bf16.msra.mxu0 %v298
    %308 = vmatprep.subr.bf16.mxu0 0
    %309 = vmatpush1.bf16.msra.mxu0 0
    %310 = vmatprep.subr.bf16.mxu0 0
    %311 = vmatpush1.bf16.msra.mxu0 0
    %312 = vmatprep.subr.bf16.mxu0 0
    %313 = vmatpush1.bf16.msra.mxu0 0
    %314 = vmatprep.subr.bf16.mxu0 0
    %315 = vmatpush1.bf16.msra.mxu0 0
    %316 = vmatprep.subr.bf16.mxu0 0
    %317 = vmatpush1.bf16.msra.mxu0 0
    %318 = vmatprep.subr.bf16.mxu0 0
    %319 = vmatpush1.bf16.msra.mxu0 0
    %320 = vmatprep.subr.bf16.mxu0 0
    %321 = vmatpush1.bf16.msra.mxu0 0
    %322 = vmatprep.subr.bf16.mxu0 0
    %323 = vmatpush1.bf16.msra.mxu0 0
    %324 = vmatprep.subr.bf16.mxu0 0
    %325 = vmatpush1.bf16.msra.mxu0 0
    %326 = vmatprep.subr.bf16.mxu0 0
    %327 = vmatpush1.bf16.msra.mxu0 0
    %328 = vmatprep.subr.bf16.mxu0 0
    %329 = vmatpush1.bf16.msra.mxu0 0
    %330 = vmatprep.subr.bf16.mxu0 0
    %331 = vmatpush1.bf16.msra.mxu0 0
    %332 = vmatprep.subr.bf16.mxu0 0
    %333 = vmatpush1.bf16.msra.mxu0 0
    %334 = vmatprep.subr.bf16.mxu0 0
    %335 = vmatpush1.bf16.msra.mxu0 0
    %336 = vmatprep.mubr.bf16.mxu0 0
    %337 = vmatmul.mubr.bf16.gmra.mrb[0].mxu0 %v302
    %v338 = vpop.f32.mrb[0].mxu0
    %v339 = vadd.f32 0.0, %v338
    %v340 = vpop.f32.mrb[0].mxu0
    %v341 = vpop.f32.mrb[0].mxu0
    %v342 = vadd.f32 0.0, %v341
    %v343 = vpop.f32.mrb[0].mxu0
    %344 = vdwg.mxu0
    %v345 = vpack.c.bf16 %v342, %v339
    %v346 = vld [vmem:[%s13] sm:$0xf]
    %v347 = vld [vmem:[%s13 + $0x4] sm:$0xf]
    %v348 = vld [vmem:[%s13 + $0x8] sm:$0xf]
    %v349 = vld [vmem:[%s13 + $0xc] sm:$0xf]
    %v351 = vunpack.c.l.b16 %v345
    %v352 = vunpack.c.h.b16 %v345
    %v353 = vpack.c.b16 %v351, %v351
    %v354 = vpack.c.b16 %v352, %v352
    %355 = vrot.lane.b32.xlu0 %v353, 96
    %v356 = vpop.permute.xlu0 %355
    %vm357 = vcmask 64512
    %v359 = vsel %vm357, %v353, 0
    %v362 = vsel %vm357, %v356, 0
    %364 = vmatprep.subr.bf16.mxu0 0
    %365 = vmatpush1.bf16.xpose.msra.mxu0 %v362
    %366 = vmatprep.subr.bf16.mxu0 0
    %367 = vmatpush1.bf16.xpose.msra.mxu0 0
    %368 = vmatprep.subr.bf16.mxu0 0
    %369 = vmatpush1.bf16.xpose.msra.mxu0 0
    %370 = vmatprep.subr.bf16.mxu0 0
    %371 = vmatpush1.bf16.xpose.msra.mxu0 0
    %372 = vmatprep.subr.bf16.mxu0 0
    %373 = vmatpush1.bf16.xpose.msra.mxu0 0
    %374 = vmatprep.subr.bf16.mxu0 0
    %375 = vmatpush1.bf16.xpose.msra.mxu0 0
    %376 = vmatprep.subr.bf16.mxu0 0
    %377 = vmatpush1.bf16.xpose.msra.mxu0 0
    %378 = vmatprep.subr.bf16.mxu0 0
    %379 = vmatpush1.bf16.xpose.msra.mxu0 0
    %380 = vmatprep.subr.bf16.mxu0 0
    %381 = vmatpush1.bf16.xpose.msra.mxu0 0
    %382 = vmatprep.subr.bf16.mxu0 0
    %383 = vmatpush1.bf16.xpose.msra.mxu0 0
    %384 = vmatprep.subr.bf16.mxu0 0
    %385 = vmatpush1.bf16.xpose.msra.mxu0 0
    %386 = vmatprep.subr.bf16.mxu0 0
    %387 = vmatpush1.bf16.xpose.msra.mxu0 0
    %388 = vmatprep.subr.bf16.mxu0 0
    %389 = vmatpush1.bf16.xpose.msra.mxu0 0
    %390 = vmatprep.subr.bf16.mxu0 0
    %391 = vmatpush1.bf16.xpose.msra.mxu0 0
    %392 = vmatprep.subr.bf16.mxu0 0
    %393 = vmatpush1.bf16.xpose.msra.mxu0 0
    %394 = vmatprep.subr.bf16.mxu0 0
    %395 = vmatpush1.bf16.xpose.msra.mxu0 0
    %396 = vmatprep.mubr.bf16.mxu0 0
    %397 = vmatmul.mubr.bf16.gmra.mrb[0].mxu0 %v359
    %v398 = vpop.f32.mrb[0].mxu0
    %v399 = vadd.f32 0.0, %v398
    %v400 = vpop.f32.mrb[0].mxu0
    %v401 = vpop.f32.mrb[0].mxu0
    %v402 = vpop.f32.mrb[0].mxu0
    %403 = vdwg.mxu0
    %404 = vrot.lane.b32.xlu0 %v354, 96
    %v405 = vpop.permute.xlu0 %404
    %v407 = vsel %vm357, %v354, 0
    %v410 = vsel %vm357, %v405, 0
    %412 = vmatprep.subr.bf16.mxu0 0
    %413 = vmatpush1.bf16.xpose.msra.mxu0 %v410
    %414 = vmatprep.subr.bf16.mxu0 0
    %415 = vmatpush1.bf16.xpose.msra.mxu0 0
    %416 = vmatprep.subr.bf16.mxu0 0
    %417 = vmatpush1.bf16.xpose.msra.mxu0 0
    %418 = vmatprep.subr.bf16.mxu0 0
    %419 = vmatpush1.bf16.xpose.msra.mxu0 0
    %420 = vmatprep.subr.bf16.mxu0 0
    %421 = vmatpush1.bf16.xpose.msra.mxu0 0
    %422 = vmatprep.subr.bf16.mxu0 0
    %423 = vmatpush1.bf16.xpose.msra.mxu0 0
    %424 = vmatprep.subr.bf16.mxu0 0
    %425 = vmatpush1.bf16.xpose.msra.mxu0 0
    %426 = vmatprep.subr.bf16.mxu0 0
    %427 = vmatpush1.bf16.xpose.msra.mxu0 0
    %428 = vmatprep.subr.bf16.mxu0 0
    %429 = vmatpush1.bf16.xpose.msra.mxu0 0
    %430 = vmatprep.subr.bf16.mxu0 0
    %431 = vmatpush1.bf16.xpose.msra.mxu0 0
    %432 = vmatprep.subr.bf16.mxu0 0
    %433 = vmatpush1.bf16.xpose.msra.mxu0 0
    %434 = vmatprep.subr.bf16.mxu0 0
    %435 = vmatpush1.bf16.xpose.msra.mxu0 0
    %436 = vmatprep.subr.bf16.mxu0 0
    %437 = vmatpush1.bf16.xpose.msra.mxu0 0
    %438 = vmatprep.subr.bf16.mxu0 0
    %439 = vmatpush1.bf16.xpose.msra.mxu0 0
    %440 = vmatprep.subr.bf16.mxu0 0
    %441 = vmatpush1.bf16.xpose.msra.mxu0 0
    %442 = vmatprep.subr.bf16.mxu0 0
    %443 = vmatpush1.bf16.xpose.msra.mxu0 0
    %444 = vmatprep.mubr.bf16.mxu0 0
    %445 = vmatmul.mubr.bf16.gmra.mrb[0].mxu0 %v407
    %v446 = vpop.f32.mrb[0].mxu0
    %v447 = vadd.f32 0.0, %v446
    %v448 = vpop.f32.mrb[0].mxu0
    %v449 = vpop.f32.mrb[0].mxu0
    %v450 = vpop.f32.mrb[0].mxu0
    %451 = vdwg.mxu0
    %v452 = vmul.f32 %v399, 0.17677669
    %v453 = vmul.f32 %v447, 0.17677669
    %v454 = vadd.f32 %v452, %v237
    %v455 = vadd.f32 %v453, %v237
    %v456 = vsel %vm357, %v454, -inf
    %457 = vmax.xlane.f32.xlu0 %v456
    %v458 = vpop.xlane.xlu0 %457
    %v459 = vsel %vm357, %v455, -inf
    %460 = vmax.xlane.f32.xlu0 %v459
    %v461 = vpop.xlane.xlu0 %460
    %v462 = vsub.f32 %v454, %v458
    %v463 = vsub.f32 %v455, %v461
    %v464 = vmul.f32 %v462, 1.442695
    %v465 = vpow.pop %v464
    %v466 = vmul.f32 %v463, 1.442695
    %v467 = vpow.pop %v466
    %v468 = vsel %vm357, %v465, 0.0
    %469 = vadd.xlane.f32.xlu0 %v468
    %v470 = vpop.xlane.xlu0 %469
    %v471 = vsel %vm357, %v467, 0.0
    %472 = vadd.xlane.f32.xlu0 %v471
    %v473 = vpop.xlane.xlu0 %472
    %v474 = vrcp.pop %v470
    %v475 = vrcp.pop %v473
    %v476 = vmul.f32 %v465, %v474
    %v477 = vmul.f32 %v467, %v475
    %v478 = vpack.c.bf16 %v476, %v476
    %v479 = vpack.c.bf16 %v477, %v477
    %480 = vrot.lane.b32.xlu0 %v353, 64
    %v481 = vpop.permute.xlu0 %480
    %v483 = vsel %vm357, %v478, 0
    %vm485 = vcmask 1043456
    %v487 = vsel %vm485, %v481, 0
    %489 = vmatprep.subr.bf16.mxu0 0
    %490 = vmatpush1.bf16.msra.mxu0 %v487
    %491 = vmatprep.subr.bf16.mxu0 0
    %492 = vmatpush1.bf16.msra.mxu0 0
    %493 = vmatprep.subr.bf16.mxu0 0
    %494 = vmatpush1.bf16.msra.mxu0 0
    %495 = vmatprep.subr.bf16.mxu0 0
    %496 = vmatpush1.bf16.msra.mxu0 0
    %497 = vmatprep.subr.bf16.mxu0 0
    %498 = vmatpush1.bf16.msra.mxu0 0
    %499 = vmatprep.subr.bf16.mxu0 0
    %500 = vmatpush1.bf16.msra.mxu0 0
    %501 = vmatprep.subr.bf16.mxu0 0
    %502 = vmatpush1.bf16.msra.mxu0 0
    %503 = vmatprep.subr.bf16.mxu0 0
    %504 = vmatpush1.bf16.msra.mxu0 0
    %505 = vmatprep.subr.bf16.mxu0 0
    %506 = vmatpush1.bf16.msra.mxu0 0
    %507 = vmatprep.subr.bf16.mxu0 0
    %508 = vmatpush1.bf16.msra.mxu0 0
    %509 = vmatprep.subr.bf16.mxu0 0
    %510 = vmatpush1.bf16.msra.mxu0 0
    %511 = vmatprep.subr.bf16.mxu0 0
    %512 = vmatpush1.bf16.msra.mxu0 0
    %513 = vmatprep.subr.bf16.mxu0 0
    %514 = vmatpush1.bf16.msra.mxu0 0
    %515 = vmatprep.subr.bf16.mxu0 0
    %516 = vmatpush1.bf16.msra.mxu0 0
    %517 = vmatprep.subr.bf16.mxu0 0
    %518 = vmatpush1.bf16.msra.mxu0 0
    %519 = vmatprep.subr.bf16.mxu0 0
    %520 = vmatpush1.bf16.msra.mxu0 0
    %521 = vmatprep.mubr.bf16.mxu0 0
    %522 = vmatmul.mubr.bf16.gmra.mrb[0].mxu0 %v483
    %v523 = vpop.f32.mrb[0].mxu0
    %v524 = vadd.f32 0.0, %v523
    %v525 = vpop.f32.mrb[0].mxu0
    %v526 = vpop.f32.mrb[0].mxu0
    %v527 = vpop.f32.mrb[0].mxu0
    %528 = vdwg.mxu0
    %529 = vrot.lane.b32.xlu0 %v354, 64
    %v530 = vpop.permute.xlu0 %529
    %v532 = vsel %vm357, %v479, 0
    %v535 = vsel %vm485, %v530, 0
    %537 = vmatprep.subr.bf16.mxu0 0
    %538 = vmatpush1.bf16.msra.mxu0 %v535
    %539 = vmatprep.subr.bf16.mxu0 0
    %540 = vmatpush1.bf16.msra.mxu0 0
    %541 = vmatprep.subr.bf16.mxu0 0
    %542 = vmatpush1.bf16.msra.mxu0 0
    %543 = vmatprep.subr.bf16.mxu0 0
    %544 = vmatpush1.bf16.msra.mxu0 0
    %545 = vmatprep.subr.bf16.mxu0 0
    %546 = vmatpush1.bf16.msra.mxu0 0
    %547 = vmatprep.subr.bf16.mxu0 0
    %548 = vmatpush1.bf16.msra.mxu0 0
    %549 = vmatprep.subr.bf16.mxu0 0
    %550 = vmatpush1.bf16.msra.mxu0 0
    %551 = vmatprep.subr.bf16.mxu0 0
    %552 = vmatpush1.bf16.msra.mxu0 0
    %553 = vmatprep.subr.bf16.mxu0 0
    %554 = vmatpush1.bf16.msra.mxu0 0
    %555 = vmatprep.subr.bf16.mxu0 0
    %556 = vmatpush1.bf16.msra.mxu0 0
    %557 = vmatprep.subr.bf16.mxu0 0
    %558 = vmatpush1.bf16.msra.mxu0 0
    %559 = vmatprep.subr.bf16.mxu0 0
    %560 = vmatpush1.bf16.msra.mxu0 0
    %561 = vmatprep.subr.bf16.mxu0 0
    %562 = vmatpush1.bf16.msra.mxu0 0
    %563 = vmatprep.subr.bf16.mxu0 0
    %564 = vmatpush1.bf16.msra.mxu0 0
    %565 = vmatprep.subr.bf16.mxu0 0
    %566 = vmatpush1.bf16.msra.mxu0 0
    %567 = vmatprep.subr.bf16.mxu0 0
    %568 = vmatpush1.bf16.msra.mxu0 0
    %569 = vmatprep.mubr.bf16.mxu0 0
    %570 = vmatmul.mubr.bf16.gmra.mrb[0].mxu0 %v532
    %v571 = vpop.f32.mrb[0].mxu0
    %v572 = vadd.f32 0.0, %v571
    %v573 = vpop.f32.mrb[0].mxu0
    %v574 = vpop.f32.mrb[0].mxu0
    %v575 = vpop.f32.mrb[0].mxu0
    %576 = vdwg.mxu0
    %v577 = vpack.c.bf16 %v572, %v524
    %578 = vrot.lane.b32.xlu0 %v353, 120
    %v579 = vpop.permute.xlu0 %578
    %580 = vrot.lane.b32.xlu0 %v353, 88
    %v581 = vpop.permute.xlu0 %580
    %v583 = vsel %vm357, %v579, 0
    %v586 = vsel %vm357, %v581, 0
    %588 = vmatprep.subr.bf16.mxu0 0
    %589 = vmatpush1.bf16.xpose.msra.mxu0 %v586
    %590 = vmatprep.subr.bf16.mxu0 0
    %591 = vmatpush1.bf16.xpose.msra.mxu0 0
    %592 = vmatprep.subr.bf16.mxu0 0
    %593 = vmatpush1.bf16.xpose.msra.mxu0 0
    %594 = vmatprep.subr.bf16.mxu0 0
    %595 = vmatpush1.bf16.xpose.msra.mxu0 0
    %596 = vmatprep.subr.bf16.mxu0 0
    %597 = vmatpush1.bf16.xpose.msra.mxu0 0
    %598 = vmatprep.subr.bf16.mxu0 0
    %599 = vmatpush1.bf16.xpose.msra.mxu0 0
    %600 = vmatprep.subr.bf16.mxu0 0
    %601 = vmatpush1.bf16.xpose.msra.mxu0 0
    %602 = vmatprep.subr.bf16.mxu0 0
    %603 = vmatpush1.bf16.xpose.msra.mxu0 0
    %604 = vmatprep.subr.bf16.mxu0 0
    %605 = vmatpush1.bf16.xpose.msra.mxu0 0
    %606 = vmatprep.subr.bf16.mxu0 0
    %607 = vmatpush1.bf16.xpose.msra.mxu0 0
    %608 = vmatprep.subr.bf16.mxu0 0
    %609 = vmatpush1.bf16.xpose.msra.mxu0 0
    %610 = vmatprep.subr.bf16.mxu0 0
    %611 = vmatpush1.bf16.xpose.msra.mxu0 0
    %612 = vmatprep.subr.bf16.mxu0 0
    %613 = vmatpush1.bf16.xpose.msra.mxu0 0
    %614 = vmatprep.subr.bf16.mxu0 0
    %615 = vmatpush1.bf16.xpose.msra.mxu0 0
    %616 = vmatprep.subr.bf16.mxu0 0
    %617 = vmatpush1.bf16.xpose.msra.mxu0 0
    %618 = vmatprep.subr.bf16.mxu0 0
    %619 = vmatpush1.bf16.xpose.msra.mxu0 0
    %620 = vmatprep.mubr.bf16.mxu0 0
    %621 = vmatmul.mubr.bf16.gmra.mrb[0].mxu0 %v583
    %v622 = vpop.f32.mrb[0].mxu0
    %v623 = vadd.f32 0.0, %v622
    %v624 = vpop.f32.mrb[0].mxu0
    %v625 = vpop.f32.mrb[0].mxu0
    %v626 = vpop.f32.mrb[0].mxu0
    %627 = vdwg.mxu0
    %628 = vrot.lane.b32.xlu0 %v354, 120
    %v629 = vpop.permute.xlu0 %628
    %630 = vrot.lane.b32.xlu0 %v354, 88
    %v631 = vpop.permute.xlu0 %630
    %v633 = vsel %vm357, %v629, 0
    %v636 = vsel %vm357, %v631, 0
    %638 = vmatprep.subr.bf16.mxu0 0
    %639 = vmatpush1.bf16.xpose.msra.mxu0 %v636
    %640 = vmatprep.subr.bf16.mxu0 0
    %641 = vmatpush1.bf16.xpose.msra.mxu0 0
    %642 = vmatprep.subr.bf16.mxu0 0
    %643 = vmatpush1.bf16.xpose.msra.mxu0 0
    %644 = vmatprep.subr.bf16.mxu0 0
    %645 = vmatpush1.bf16.xpose.msra.mxu0 0
    %646 = vmatprep.subr.bf16.mxu0 0
    %647 = vmatpush1.bf16.xpose.msra.mxu0 0
    %648 = vmatprep.subr.bf16.mxu0 0
    %649 = vmatpush1.bf16.xpose.msra.mxu0 0
    %650 = vmatprep.subr.bf16.mxu0 0
    %651 = vmatpush1.bf16.xpose.msra.mxu0 0
    %652 = vmatprep.subr.bf16.mxu0 0
    %653 = vmatpush1.bf16.xpose.msra.mxu0 0
    %654 = vmatprep.subr.bf16.mxu0 0
    %655 = vmatpush1.bf16.xpose.msra.mxu0 0
    %656 = vmatprep.subr.bf16.mxu0 0
    %657 = vmatpush1.bf16.xpose.msra.mxu0 0
    %658 = vmatprep.subr.bf16.mxu0 0
    %659 = vmatpush1.bf16.xpose.msra.mxu0 0
    %660 = vmatprep.subr.bf16.mxu0 0
    %661 = vmatpush1.bf16.xpose.msra.mxu0 0
    %662 = vmatprep.subr.bf16.mxu0 0
    %663 = vmatpush1.bf16.xpose.msra.mxu0 0
    %664 = vmatprep.subr.bf16.mxu0 0
    %665 = vmatpush1.bf16.xpose.msra.mxu0 0
    %666 = vmatprep.subr.bf16.mxu0 0
    %667 = vmatpush1.bf16.xpose.msra.mxu0 0
    %668 = vmatprep.subr.bf16.mxu0 0
    %669 = vmatpush1.bf16.xpose.msra.mxu0 0
    %670 = vmatprep.mubr.bf16.mxu0 0
    %671 = vmatmul.mubr.bf16.gmra.mrb[0].mxu0 %v633
    %v672 = vpop.f32.mrb[0].mxu0
    %v673 = vadd.f32 0.0, %v672
    %v674 = vpop.f32.mrb[0].mxu0
    %v675 = vpop.f32.mrb[0].mxu0
    %v676 = vpop.f32.mrb[0].mxu0
    %677 = vdwg.mxu0
    %v678 = vmul.f32 %v623, 0.17677669
    %v679 = vmul.f32 %v673, 0.17677669
    %v680 = vadd.f32 %v678, %v237
    %v681 = vadd.f32 %v679, %v237
    %v682 = vsel %vm357, %v680, -inf
    %683 = vmax.xlane.f32.xlu0 %v682
    %v684 = vpop.xlane.xlu0 %683
    %v685 = vsel %vm357, %v681, -inf
    %686 = vmax.xlane.f32.xlu0 %v685
    %v687 = vpop.xlane.xlu0 %686
    %v688 = vsub.f32 %v680, %v684
    %v689 = vsub.f32 %v681, %v687
    %v690 = vmul.f32 %v688, 1.442695
    %v691 = vpow.pop %v690
    %v692 = vmul.f32 %v689, 1.442695
    %v693 = vpow.pop %v692
    %v694 = vsel %vm357, %v691, 0.0
    %695 = vadd.xlane.f32.xlu0 %v694
    %v696 = vpop.xlane.xlu0 %695
    %v697 = vsel %vm357, %v693, 0.0
    %698 = vadd.xlane.f32.xlu0 %v697
    %v699 = vpop.xlane.xlu0 %698
    %v700 = vrcp.pop %v696
    %v701 = vrcp.pop %v699
    %v702 = vmul.f32 %v691, %v700
    %v703 = vmul.f32 %v693, %v701
    %v704 = vpack.c.bf16 %v702, %v702
    %v705 = vpack.c.bf16 %v703, %v703
    %706 = vrot.lane.b32.xlu0 %v353, 56
    %v707 = vpop.permute.xlu0 %706
    %v709 = vsel %vm357, %v704, 0
    %v712 = vsel %vm485, %v707, 0
    %714 = vmatprep.subr.bf16.mxu0 0
    %715 = vmatpush1.bf16.msra.mxu0 %v712
    %716 = vmatprep.subr.bf16.mxu0 0
    %717 = vmatpush1.bf16.msra.mxu0 0
    %718 = vmatprep.subr.bf16.mxu0 0
    %719 = vmatpush1.bf16.msra.mxu0 0
    %720 = vmatprep.subr.bf16.mxu0 0
    %721 = vmatpush1.bf16.msra.mxu0 0
    %722 = vmatprep.subr.bf16.mxu0 0
    %723 = vmatpush1.bf16.msra.mxu0 0
    %724 = vmatprep.subr.bf16.mxu0 0
    %725 = vmatpush1.bf16.msra.mxu0 0
    %726 = vmatprep.subr.bf16.mxu0 0
    %727 = vmatpush1.bf16.msra.mxu0 0
    %728 = vmatprep.subr.bf16.mxu0 0
    %729 = vmatpush1.bf16.msra.mxu0 0
    %730 = vmatprep.subr.bf16.mxu0 0
    %731 = vmatpush1.bf16.msra.mxu0 0
    %732 = vmatprep.subr.bf16.mxu0 0
    %733 = vmatpush1.bf16.msra.mxu0 0
    %734 = vmatprep.subr.bf16.mxu0 0
    %735 = vmatpush1.bf16.msra.mxu0 0
    %736 = vmatprep.subr.bf16.mxu0 0
    %737 = vmatpush1.bf16.msra.mxu0 0
    %738 = vmatprep.subr.bf16.mxu0 0
    %739 = vmatpush1.bf16.msra.mxu0 0
    %740 = vmatprep.subr.bf16.mxu0 0
    %741 = vmatpush1.bf16.msra.mxu0 0
    %742 = vmatprep.subr.bf16.mxu0 0
    %743 = vmatpush1.bf16.msra.mxu0 0
    %744 = vmatprep.subr.bf16.mxu0 0
    %745 = vmatpush1.bf16.msra.mxu0 0
    %746 = vmatprep.mubr.bf16.mxu0 0
    %747 = vmatmul.mubr.bf16.gmra.mrb[0].mxu0 %v709
    %v748 = vpop.f32.mrb[0].mxu0
    %v749 = vadd.f32 0.0, %v748
    %v750 = vpop.f32.mrb[0].mxu0
    %v751 = vpop.f32.mrb[0].mxu0
    %v752 = vpop.f32.mrb[0].mxu0
    %753 = vdwg.mxu0
    %754 = vrot.lane.b32.xlu0 %v354, 56
    %v755 = vpop.permute.xlu0 %754
    %v757 = vsel %vm357, %v705, 0
    %v760 = vsel %vm485, %v755, 0
    %762 = vmatprep.subr.bf16.mxu0 0
    %763 = vmatpush1.bf16.msra.mxu0 %v760
    %764 = vmatprep.subr.bf16.mxu0 0
    %765 = vmatpush1.bf16.msra.mxu0 0
    %766 = vmatprep.subr.bf16.mxu0 0
    %767 = vmatpush1.bf16.msra.mxu0 0
    %768 = vmatprep.subr.bf16.mxu0 0
    %769 = vmatpush1.bf16.msra.mxu0 0
    %770 = vmatprep.subr.bf16.mxu0 0
    %771 = vmatpush1.bf16.msra.mxu0 0
    %772 = vmatprep.subr.bf16.mxu0 0
    %773 = vmatpush1.bf16.msra.mxu0 0
    %774 = vmatprep.subr.bf16.mxu0 0
    %775 = vmatpush1.bf16.msra.mxu0 0
    %776 = vmatprep.subr.bf16.mxu0 0
    %777 = vmatpush1.bf16.msra.mxu0 0
    %778 = vmatprep.subr.bf16.mxu0 0
    %779 = vmatpush1.bf16.msra.mxu0 0
    %780 = vmatprep.subr.bf16.mxu0 0
    %781 = vmatpush1.bf16.msra.mxu0 0
    %782 = vmatprep.subr.bf16.mxu0 0
    %783 = vmatpush1.bf16.msra.mxu0 0
    %784 = vmatprep.subr.bf16.mxu0 0
    %785 = vmatpush1.bf16.msra.mxu0 0
    %786 = vmatprep.subr.bf16.mxu0 0
    %787 = vmatpush1.bf16.msra.mxu0 0
    %788 = vmatprep.subr.bf16.mxu0 0
    %789 = vmatpush1.bf16.msra.mxu0 0
    %790 = vmatprep.subr.bf16.mxu0 0
    %791 = vmatpush1.bf16.msra.mxu0 0
    %792 = vmatprep.subr.bf16.mxu0 0
    %793 = vmatpush1.bf16.msra.mxu0 0
    %794 = vmatprep.mubr.bf16.mxu0 0
    %795 = vmatmul.mubr.bf16.gmra.mrb[0].mxu0 %v757
    %v796 = vpop.f32.mrb[0].mxu0
    %v797 = vadd.f32 0.0, %v796
    %v798 = vpop.f32.mrb[0].mxu0
    %v799 = vpop.f32.mrb[0].mxu0
    %v800 = vpop.f32.mrb[0].mxu0
    %801 = vdwg.mxu0
    %v802 = vpack.c.bf16 %v797, %v749
    %v804 = vsel %vm357, %v802, 0
    %v807 = vsel %vm485, %v347, 0
    %809 = vmatprep.subr.bf16.mxu0 0
    %810 = vmatpush1.bf16.msra.mxu0 %v807
    %811 = vmatprep.subr.bf16.mxu0 0
    %812 = vmatpush1.bf16.msra.mxu0 0
    %813 = vmatprep.subr.bf16.mxu0 0
    %814 = vmatpush1.bf16.msra.mxu0 0
    %815 = vmatprep.subr.bf16.mxu0 0
    %816 = vmatpush1.bf16.msra.mxu0 0
    %817 = vmatprep.subr.bf16.mxu0 0
    %818 = vmatpush1.bf16.msra.mxu0 0
    %819 = vmatprep.subr.bf16.mxu0 0
    %820 = vmatpush1.bf16.msra.mxu0 0
    %821 = vmatprep.subr.bf16.mxu0 0
    %822 = vmatpush1.bf16.msra.mxu0 0
    %823 = vmatprep.subr.bf16.mxu0 0
    %824 = vmatpush1.bf16.msra.mxu0 0
    %825 = vmatprep.subr.bf16.mxu0 0
    %826 = vmatpush1.bf16.msra.mxu0 0
    %827 = vmatprep.subr.bf16.mxu0 0
    %828 = vmatpush1.bf16.msra.mxu0 0
    %829 = vmatprep.subr.bf16.mxu0 0
    %830 = vmatpush1.bf16.msra.mxu0 0
    %831 = vmatprep.subr.bf16.mxu0 0
    %832 = vmatpush1.bf16.msra.mxu0 0
    %833 = vmatprep.subr.bf16.mxu0 0
    %834 = vmatpush1.bf16.msra.mxu0 0
    %835 = vmatprep.subr.bf16.mxu0 0
    %836 = vmatpush1.bf16.msra.mxu0 0
    %837 = vmatprep.subr.bf16.mxu0 0
    %838 = vmatpush1.bf16.msra.mxu0 0
    %839 = vmatprep.subr.bf16.mxu0 0
    %840 = vmatpush1.bf16.msra.mxu0 0
    %841 = vmatprep.mubr.bf16.mxu0 0
    %842 = vmatmul.mubr.bf16.gmra.mrb[0].mxu0 %v804
    %v843 = vpop.f32.mrb[0].mxu0
    %v844 = vadd.f32 0.0, %v843
    %v845 = vpop.f32.mrb[0].mxu0
    %v846 = vpop.f32.mrb[0].mxu0
    %v847 = vadd.f32 0.0, %v846
    %v848 = vpop.f32.mrb[0].mxu0
    %849 = vdwg.mxu0
    %v851 = vsel %vm357, %v577, 0
    %v854 = vsel %vm485, %v346, 0
    %856 = vmatprep.subr.bf16.mxu0 0
    %857 = vmatpush1.bf16.msra.mxu0 %v854
    %858 = vmatprep.subr.bf16.mxu0 0
    %859 = vmatpush1.bf16.msra.mxu0 0
    %860 = vmatprep.subr.bf16.mxu0 0
    %861 = vmatpush1.bf16.msra.mxu0 0
    %862 = vmatprep.subr.bf16.mxu0 0
    %863 = vmatpush1.bf16.msra.mxu0 0
    %864 = vmatprep.subr.bf16.mxu0 0
    %865 = vmatpush1.bf16.msra.mxu0 0
    %866 = vmatprep.subr.bf16.mxu0 0
    %867 = vmatpush1.bf16.msra.mxu0 0
    %868 = vmatprep.subr.bf16.mxu0 0
    %869 = vmatpush1.bf16.msra.mxu0 0
    %870 = vmatprep.subr.bf16.mxu0 0
    %871 = vmatpush1.bf16.msra.mxu0 0
    %872 = vmatprep.subr.bf16.mxu0 0
    %873 = vmatpush1.bf16.msra.mxu0 0
    %874 = vmatprep.subr.bf16.mxu0 0
    %875 = vmatpush1.bf16.msra.mxu0 0
    %876 = vmatprep.subr.bf16.mxu0 0
    %877 = vmatpush1.bf16.msra.mxu0 0
    %878 = vmatprep.subr.bf16.mxu0 0
    %879 = vmatpush1.bf16.msra.mxu0 0
    %880 = vmatprep.subr.bf16.mxu0 0
    %881 = vmatpush1.bf16.msra.mxu0 0
    %882 = vmatprep.subr.bf16.mxu0 0
    %883 = vmatpush1.bf16.msra.mxu0 0
    %884 = vmatprep.subr.bf16.mxu0 0
    %885 = vmatpush1.bf16.msra.mxu0 0
    %886 = vmatprep.subr.bf16.mxu0 0
    %887 = vmatpush1.bf16.msra.mxu0 0
    %888 = vmatprep.mubr.bf16.mxu0 0
    %889 = vmatmul.mubr.bf16.gmra.mrb[0].mxu0 %v851
    %v890 = vpop.f32.mrb[0].mxu0
    %v891 = vadd.f32 %v844, %v890
    %v892 = vpop.f32.mrb[0].mxu0
    %v893 = vpop.f32.mrb[0].mxu0
    %v894 = vadd.f32 %v847, %v893
    %v895 = vpop.f32.mrb[0].mxu0
    %896 = vdwg.mxu0
    %897 = vrot.lane.b32.xlu0 %v353, 112
    %v898 = vpop.permute.xlu0 %897
    %899 = vrot.lane.b32.xlu0 %v353, 80
    %v900 = vpop.permute.xlu0 %899
    %v902 = vsel %vm357, %v898, 0
    %v905 = vsel %vm357, %v900, 0
    %907 = vmatprep.subr.bf16.mxu0 0
    %908 = vmatpush1.bf16.xpose.msra.mxu0 %v905
    %909 = vmatprep.subr.bf16.mxu0 0
    %910 = vmatpush1.bf16.xpose.msra.mxu0 0
    %911 = vmatprep.subr.bf16.mxu0 0
    %912 = vmatpush1.bf16.xpose.msra.mxu0 0
    %913 = vmatprep.subr.bf16.mxu0 0
    %914 = vmatpush1.bf16.xpose.msra.mxu0 0
    %915 = vmatprep.subr.bf16.mxu0 0
    %916 = vmatpush1.bf16.xpose.msra.mxu0 0
    %917 = vmatprep.subr.bf16.mxu0 0
    %918 = vmatpush1.bf16.xpose.msra.mxu0 0
    %919 = vmatprep.subr.bf16.mxu0 0
    %920 = vmatpush1.bf16.xpose.msra.mxu0 0
    %921 = vmatprep.subr.bf16.mxu0 0
    %922 = vmatpush1.bf16.xpose.msra.mxu0 0
    %923 = vmatprep.subr.bf16.mxu0 0
    %924 = vmatpush1.bf16.xpose.msra.mxu0 0
    %925 = vmatprep.subr.bf16.mxu0 0
    %926 = vmatpush1.bf16.xpose.msra.mxu0 0
    %927 = vmatprep.subr.bf16.mxu0 0
    %928 = vmatpush1.bf16.xpose.msra.mxu0 0
    %929 = vmatprep.subr.bf16.mxu0 0
    %930 = vmatpush1.bf16.xpose.msra.mxu0 0
    %931 = vmatprep.subr.bf16.mxu0 0
    %932 = vmatpush1.bf16.xpose.msra.mxu0 0
    %933 = vmatprep.subr.bf16.mxu0 0
    %934 = vmatpush1.bf16.xpose.msra.mxu0 0
    %935 = vmatprep.subr.bf16.mxu0 0
    %936 = vmatpush1.bf16.xpose.msra.mxu0 0
    %937 = vmatprep.subr.bf16.mxu0 0
    %938 = vmatpush1.bf16.xpose.msra.mxu0 0
    %939 = vmatprep.mubr.bf16.mxu0 0
    %940 = vmatmul.mubr.bf16.gmra.mrb[0].mxu0 %v902
    %v941 = vpop.f32.mrb[0].mxu0
    %v942 = vadd.f32 0.0, %v941
    %v943 = vpop.f32.mrb[0].mxu0
    %v944 = vpop.f32.mrb[0].mxu0
    %v945 = vpop.f32.mrb[0].mxu0
    %946 = vdwg.mxu0
    %947 = vrot.lane.b32.xlu0 %v354, 112
    %v948 = vpop.permute.xlu0 %947
    %949 = vrot.lane.b32.xlu0 %v354, 80
    %v950 = vpop.permute.xlu0 %949
    %v952 = vsel %vm357, %v948, 0
    %v955 = vsel %vm357, %v950, 0
    %957 = vmatprep.subr.bf16.mxu0 0
    %958 = vmatpush1.bf16.xpose.msra.mxu0 %v955
    %959 = vmatprep.subr.bf16.mxu0 0
    %960 = vmatpush1.bf16.xpose.msra.mxu0 0
    %961 = vmatprep.subr.bf16.mxu0 0
    %962 = vmatpush1.bf16.xpose.msra.mxu0 0
    %963 = vmatprep.subr.bf16.mxu0 0
    %964 = vmatpush1.bf16.xpose.msra.mxu0 0
    %965 = vmatprep.subr.bf16.mxu0 0
    %966 = vmatpush1.bf16.xpose.msra.mxu0 0
    %967 = vmatprep.subr.bf16.mxu0 0
    %968 = vmatpush1.bf16.xpose.msra.mxu0 0
    %969 = vmatprep.subr.bf16.mxu0 0
    %970 = vmatpush1.bf16.xpose.msra.mxu0 0
    %971 = vmatprep.subr.bf16.mxu0 0
    %972 = vmatpush1.bf16.xpose.msra.mxu0 0
    %973 = vmatprep.subr.bf16.mxu0 0
    %974 = vmatpush1.bf16.xpose.msra.mxu0 0
    %975 = vmatprep.subr.bf16.mxu0 0
    %976 = vmatpush1.bf16.xpose.msra.mxu0 0
    %977 = vmatprep.subr.bf16.mxu0 0
    %978 = vmatpush1.bf16.xpose.msra.mxu0 0
    %979 = vmatprep.subr.bf16.mxu0 0
    %980 = vmatpush1.bf16.xpose.msra.mxu0 0
    %981 = vmatprep.subr.bf16.mxu0 0
    %982 = vmatpush1.bf16.xpose.msra.mxu0 0
    %983 = vmatprep.subr.bf16.mxu0 0
    %984 = vmatpush1.bf16.xpose.msra.mxu0 0
    %985 = vmatprep.subr.bf16.mxu0 0
    %986 = vmatpush1.bf16.xpose.msra.mxu0 0
    %987 = vmatprep.subr.bf16.mxu0 0
    %988 = vmatpush1.bf16.xpose.msra.mxu0 0
    %989 = vmatprep.mubr.bf16.mxu0 0
    %990 = vmatmul.mubr.bf16.gmra.mrb[0].mxu0 %v952
    %v991 = vpop.f32.mrb[0].mxu0
    %v992 = vadd.f32 0.0, %v991
    %v993 = vpop.f32.mrb[0].mxu0
    %v994 = vpop.f32.mrb[0].mxu0
    %v995 = vpop.f32.mrb[0].mxu0
    %996 = vdwg.mxu0
    %v997 = vmul.f32 %v942, 0.17677669
    %v998 = vmul.f32 %v992, 0.17677669
    %v999 = vadd.f32 %v997, %v237
    %v1000 = vadd.f32 %v998, %v237
    %v1001 = vsel %vm357, %v999, -inf
    %1002 = vmax.xlane.f32.xlu0 %v1001
    %v1003 = vpop.xlane.xlu0 %1002
    %v1004 = vsel %vm357, %v1000, -inf
    %1005 = vmax.xlane.f32.xlu0 %v1004
    %v1006 = vpop.xlane.xlu0 %1005
    %v1007 = vsub.f32 %v999, %v1003
    %v1008 = vsub.f32 %v1000, %v1006
    %v1009 = vmul.f32 %v1007, 1.442695
    %v1010 = vpow.pop %v1009
    %v1011 = vmul.f32 %v1008, 1.442695
    %v1012 = vpow.pop %v1011
    %v1013 = vsel %vm357, %v1010, 0.0
    %1014 = vadd.xlane.f32.xlu0 %v1013
    %v1015 = vpop.xlane.xlu0 %1014
    %v1016 = vsel %vm357, %v1012, 0.0
    %1017 = vadd.xlane.f32.xlu0 %v1016
    %v1018 = vpop.xlane.xlu0 %1017
    %v1019 = vrcp.pop %v1015
    %v1020 = vrcp.pop %v1018
    %v1021 = vmul.f32 %v1010, %v1019
    %v1022 = vmul.f32 %v1012, %v1020
    %v1023 = vpack.c.bf16 %v1021, %v1021
    %v1024 = vpack.c.bf16 %v1022, %v1022
    %1025 = vrot.lane.b32.xlu0 %v353, 48
    %v1026 = vpop.permute.xlu0 %1025
    %v1028 = vsel %vm357, %v1023, 0
    %v1031 = vsel %vm485, %v1026, 0
    %1033 = vmatprep.subr.bf16.mxu0 0
    %1034 = vmatpush1.bf16.msra.mxu0 %v1031
    %1035 = vmatprep.subr.bf16.mxu0 0
    %1036 = vmatpush1.bf16.msra.mxu0 0
    %1037 = vmatprep.subr.bf16.mxu0 0
    %1038 = vmatpush1.bf16.msra.mxu0 0
    %1039 = vmatprep.subr.bf16.mxu0 0
    %1040 = vmatpush1.bf16.msra.mxu0 0
    %1041 = vmatprep.subr.bf16.mxu0 0
    %1042 = vmatpush1.bf16.msra.mxu0 0
    %1043 = vmatprep.subr.bf16.mxu0 0
    %1044 = vmatpush1.bf16.msra.mxu0 0
    %1045 = vmatprep.subr.bf16.mxu0 0
    %1046 = vmatpush1.bf16.msra.mxu0 0
    %1047 = vmatprep.subr.bf16.mxu0 0
    %1048 = vmatpush1.bf16.msra.mxu0 0
    %1049 = vmatprep.subr.bf16.mxu0 0
    %1050 = vmatpush1.bf16.msra.mxu0 0
    %1051 = vmatprep.subr.bf16.mxu0 0
    %1052 = vmatpush1.bf16.msra.mxu0 0
    %1053 = vmatprep.subr.bf16.mxu0 0
    %1054 = vmatpush1.bf16.msra.mxu0 0
    %1055 = vmatprep.subr.bf16.mxu0 0
    %1056 = vmatpush1.bf16.msra.mxu0 0
    %1057 = vmatprep.subr.bf16.mxu0 0
    %1058 = vmatpush1.bf16.msra.mxu0 0
    %1059 = vmatprep.subr.bf16.mxu0 0
    %1060 = vmatpush1.bf16.msra.mxu0 0
    %1061 = vmatprep.subr.bf16.mxu0 0
    %1062 = vmatpush1.bf16.msra.mxu0 0
    %1063 = vmatprep.subr.bf16.mxu0 0
    %1064 = vmatpush1.bf16.msra.mxu0 0
    %1065 = vmatprep.mubr.bf16.mxu0 0
    %1066 = vmatmul.mubr.bf16.gmra.mrb[0].mxu0 %v1028
    %v1067 = vpop.f32.mrb[0].mxu0
    %v1068 = vadd.f32 0.0, %v1067
    %v1069 = vpop.f32.mrb[0].mxu0
    %v1070 = vpop.f32.mrb[0].mxu0
    %v1071 = vpop.f32.mrb[0].mxu0
    %1072 = vdwg.mxu0
    %1073 = vrot.lane.b32.xlu0 %v354, 48
    %v1074 = vpop.permute.xlu0 %1073
    %v1076 = vsel %vm357, %v1024, 0
    %v1079 = vsel %vm485, %v1074, 0
    %1081 = vmatprep.subr.bf16.mxu0 0
    %1082 = vmatpush1.bf16.msra.mxu0 %v1079
    %1083 = vmatprep.subr.bf16.mxu0 0
    %1084 = vmatpush1.bf16.msra.mxu0 0
    %1085 = vmatprep.subr.bf16.mxu0 0
    %1086 = vmatpush1.bf16.msra.mxu0 0
    %1087 = vmatprep.subr.bf16.mxu0 0
    %1088 = vmatpush1.bf16.msra.mxu0 0
    %1089 = vmatprep.subr.bf16.mxu0 0
    %1090 = vmatpush1.bf16.msra.mxu0 0
    %1091 = vmatprep.subr.bf16.mxu0 0
    %1092 = vmatpush1.bf16.msra.mxu0 0
    %1093 = vmatprep.subr.bf16.mxu0 0
    %1094 = vmatpush1.bf16.msra.mxu0 0
    %1095 = vmatprep.subr.bf16.mxu0 0
    %1096 = vmatpush1.bf16.msra.mxu0 0
    %1097 = vmatprep.subr.bf16.mxu0 0
    %1098 = vmatpush1.bf16.msra.mxu0 0
    %1099 = vmatprep.subr.bf16.mxu0 0
    %1100 = vmatpush1.bf16.msra.mxu0 0
    %1101 = vmatprep.subr.bf16.mxu0 0
    %1102 = vmatpush1.bf16.msra.mxu0 0
    %1103 = vmatprep.subr.bf16.mxu0 0
    %1104 = vmatpush1.bf16.msra.mxu0 0
    %1105 = vmatprep.subr.bf16.mxu0 0
    %1106 = vmatpush1.bf16.msra.mxu0 0
    %1107 = vmatprep.subr.bf16.mxu0 0
    %1108 = vmatpush1.bf16.msra.mxu0 0
    %1109 = vmatprep.subr.bf16.mxu0 0
    %1110 = vmatpush1.bf16.msra.mxu0 0
    %1111 = vmatprep.subr.bf16.mxu0 0
    %1112 = vmatpush1.bf16.msra.mxu0 0
    %1113 = vmatprep.mubr.bf16.mxu0 0
    %1114 = vmatmul.mubr.bf16.gmra.mrb[0].mxu0 %v1076
    %v1115 = vpop.f32.mrb[0].mxu0
    %v1116 = vadd.f32 0.0, %v1115
    %v1117 = vpop.f32.mrb[0].mxu0
    %v1118 = vpop.f32.mrb[0].mxu0
    %v1119 = vpop.f32.mrb[0].mxu0
    %1120 = vdwg.mxu0
    %v1121 = vpack.c.bf16 %v1116, %v1068
    %v1123 = vsel %vm357, %v1121, 0
    %v1126 = vsel %vm485, %v348, 0
    %1128 = vmatprep.subr.bf16.mxu0 0
    %1129 = vmatpush1.bf16.msra.mxu0 %v1126
    %1130 = vmatprep.subr.bf16.mxu0 0
    %1131 = vmatpush1.bf16.msra.mxu0 0
    %1132 = vmatprep.subr.bf16.mxu0 0
    %1133 = vmatpush1.bf16.msra.mxu0 0
    %1134 = vmatprep.subr.bf16.mxu0 0
    %1135 = vmatpush1.bf16.msra.mxu0 0
    %1136 = vmatprep.subr.bf16.mxu0 0
    %1137 = vmatpush1.bf16.msra.mxu0 0
    %1138 = vmatprep.subr.bf16.mxu0 0
    %1139 = vmatpush1.bf16.msra.mxu0 0
    %1140 = vmatprep.subr.bf16.mxu0 0
    %1141 = vmatpush1.bf16.msra.mxu0 0
    %1142 = vmatprep.subr.bf16.mxu0 0
    %1143 = vmatpush1.bf16.msra.mxu0 0
    %1144 = vmatprep.subr.bf16.mxu0 0
    %1145 = vmatpush1.bf16.msra.mxu0 0
    %1146 = vmatprep.subr.bf16.mxu0 0
    %1147 = vmatpush1.bf16.msra.mxu0 0
    %1148 = vmatprep.subr.bf16.mxu0 0
    %1149 = vmatpush1.bf16.msra.mxu0 0
    %1150 = vmatprep.subr.bf16.mxu0 0
    %1151 = vmatpush1.bf16.msra.mxu0 0
    %1152 = vmatprep.subr.bf16.mxu0 0
    %1153 = vmatpush1.bf16.msra.mxu0 0
    %1154 = vmatprep.subr.bf16.mxu0 0
    %1155 = vmatpush1.bf16.msra.mxu0 0
    %1156 = vmatprep.subr.bf16.mxu0 0
    %1157 = vmatpush1.bf16.msra.mxu0 0
    %1158 = vmatprep.subr.bf16.mxu0 0
    %1159 = vmatpush1.bf16.msra.mxu0 0
    %1160 = vmatprep.mubr.bf16.mxu0 0
    %1161 = vmatmul.mubr.bf16.gmra.mrb[0].mxu0 %v1123
    %v1162 = vpop.f32.mrb[0].mxu0
    %v1163 = vadd.f32 0.0, %v1162
    %v1164 = vpop.f32.mrb[0].mxu0
    %v1165 = vpop.f32.mrb[0].mxu0
    %v1166 = vadd.f32 0.0, %v1165
    %v1167 = vpop.f32.mrb[0].mxu0
    %1168 = vdwg.mxu0
    %v1169 = vadd.f32 %v891, %v1163
    %v1170 = vadd.f32 %v894, %v1166
    %1171 = vrot.lane.b32.xlu0 %v353, 104
    %v1172 = vpop.permute.xlu0 %1171
    %1173 = vrot.lane.b32.xlu0 %v353, 72
    %v1174 = vpop.permute.xlu0 %1173
    %v1176 = vsel %vm357, %v1172, 0
    %v1179 = vsel %vm357, %v1174, 0
    %1181 = vmatprep.subr.bf16.mxu0 0
    %1182 = vmatpush1.bf16.xpose.msra.mxu0 %v1179
    %1183 = vmatprep.subr.bf16.mxu0 0
    %1184 = vmatpush1.bf16.xpose.msra.mxu0 0
    %1185 = vmatprep.subr.bf16.mxu0 0
    %1186 = vmatpush1.bf16.xpose.msra.mxu0 0
    %1187 = vmatprep.subr.bf16.mxu0 0
    %1188 = vmatpush1.bf16.xpose.msra.mxu0 0
    %1189 = vmatprep.subr.bf16.mxu0 0
    %1190 = vmatpush1.bf16.xpose.msra.mxu0 0
    %1191 = vmatprep.subr.bf16.mxu0 0
    %1192 = vmatpush1.bf16.xpose.msra.mxu0 0
    %1193 = vmatprep.subr.bf16.mxu0 0
    %1194 = vmatpush1.bf16.xpose.msra.mxu0 0
    %1195 = vmatprep.subr.bf16.mxu0 0
    %1196 = vmatpush1.bf16.xpose.msra.mxu0 0
    %1197 = vmatprep.subr.bf16.mxu0 0
    %1198 = vmatpush1.bf16.xpose.msra.mxu0 0
    %1199 = vmatprep.subr.bf16.mxu0 0
    %1200 = vmatpush1.bf16.xpose.msra.mxu0 0
    %1201 = vmatprep.subr.bf16.mxu0 0
    %1202 = vmatpush1.bf16.xpose.msra.mxu0 0
    %1203 = vmatprep.subr.bf16.mxu0 0
    %1204 = vmatpush1.bf16.xpose.msra.mxu0 0
    %1205 = vmatprep.subr.bf16.mxu0 0
    %1206 = vmatpush1.bf16.xpose.msra.mxu0 0
    %1207 = vmatprep.subr.bf16.mxu0 0
    %1208 = vmatpush1.bf16.xpose.msra.mxu0 0
    %1209 = vmatprep.subr.bf16.mxu0 0
    %1210 = vmatpush1.bf16.xpose.msra.mxu0 0
    %1211 = vmatprep.subr.bf16.mxu0 0
    %1212 = vmatpush1.bf16.xpose.msra.mxu0 0
    %1213 = vmatprep.mubr.bf16.mxu0 0
    %1214 = vmatmul.mubr.bf16.gmra.mrb[0].mxu0 %v1176
    %v1215 = vpop.f32.mrb[0].mxu0
    %v1216 = vadd.f32 0.0, %v1215
    %v1217 = vpop.f32.mrb[0].mxu0
    %v1218 = vpop.f32.mrb[0].mxu0
    %v1219 = vpop.f32.mrb[0].mxu0
    %1220 = vdwg.mxu0
    %1221 = vrot.lane.b32.xlu0 %v354, 104
    %v1222 = vpop.permute.xlu0 %1221
    %1223 = vrot.lane.b32.xlu0 %v354, 72
    %v1224 = vpop.permute.xlu0 %1223
    %v1226 = vsel %vm357, %v1222, 0
    %v1229 = vsel %vm357, %v1224, 0
    %1231 = vmatprep.subr.bf16.mxu0 0
    %1232 = vmatpush1.bf16.xpose.msra.mxu0 %v1229
    %1233 = vmatprep.subr.bf16.mxu0 0
    %1234 = vmatpush1.bf16.xpose.msra.mxu0 0
    %1235 = vmatprep.subr.bf16.mxu0 0
    %1236 = vmatpush1.bf16.xpose.msra.mxu0 0
    %1237 = vmatprep.subr.bf16.mxu0 0
    %1238 = vmatpush1.bf16.xpose.msra.mxu0 0
    %1239 = vmatprep.subr.bf16.mxu0 0
    %1240 = vmatpush1.bf16.xpose.msra.mxu0 0
    %1241 = vmatprep.subr.bf16.mxu0 0
    %1242 = vmatpush1.bf16.xpose.msra.mxu0 0
    %1243 = vmatprep.subr.bf16.mxu0 0
    %1244 = vmatpush1.bf16.xpose.msra.mxu0 0
    %1245 = vmatprep.subr.bf16.mxu0 0
    %1246 = vmatpush1.bf16.xpose.msra.mxu0 0
    %1247 = vmatprep.subr.bf16.mxu0 0
    %1248 = vmatpush1.bf16.xpose.msra.mxu0 0
    %1249 = vmatprep.subr.bf16.mxu0 0
    %1250 = vmatpush1.bf16.xpose.msra.mxu0 0
    %1251 = vmatprep.subr.bf16.mxu0 0
    %1252 = vmatpush1.bf16.xpose.msra.mxu0 0
    %1253 = vmatprep.subr.bf16.mxu0 0
    %1254 = vmatpush1.bf16.xpose.msra.mxu0 0
    %1255 = vmatprep.subr.bf16.mxu0 0
    %1256 = vmatpush1.bf16.xpose.msra.mxu0 0
    %1257 = vmatprep.subr.bf16.mxu0 0
    %1258 = vmatpush1.bf16.xpose.msra.mxu0 0
    %1259 = vmatprep.subr.bf16.mxu0 0
    %1260 = vmatpush1.bf16.xpose.msra.mxu0 0
    %1261 = vmatprep.subr.bf16.mxu0 0
    %1262 = vmatpush1.bf16.xpose.msra.mxu0 0
    %1263 = vmatprep.mubr.bf16.mxu0 0
    %1264 = vmatmul.mubr.bf16.gmra.mrb[0].mxu0 %v1226
    %v1265 = vpop.f32.mrb[0].mxu0
    %v1266 = vadd.f32 0.0, %v1265
    %v1267 = vpop.f32.mrb[0].mxu0
    %v1268 = vpop.f32.mrb[0].mxu0
    %v1269 = vpop.f32.mrb[0].mxu0
    %1270 = vdwg.mxu0
    %v1271 = vmul.f32 %v1216, 0.17677669
    %v1272 = vmul.f32 %v1266, 0.17677669
    %v1273 = vadd.f32 %v1271, %v237
    %v1274 = vadd.f32 %v1272, %v237
    %v1275 = vsel %vm357, %v1273, -inf
    %1276 = vmax.xlane.f32.xlu0 %v1275
    %v1277 = vpop.xlane.xlu0 %1276
    %v1278 = vsel %vm357, %v1274, -inf
    %1279 = vmax.xlane.f32.xlu0 %v1278
    %v1280 = vpop.xlane.xlu0 %1279
    %v1281 = vsub.f32 %v1273, %v1277
    %v1282 = vsub.f32 %v1274, %v1280
    %v1283 = vmul.f32 %v1281, 1.442695
    %v1284 = vpow.pop %v1283
    %v1285 = vmul.f32 %v1282, 1.442695
    %v1286 = vpow.pop %v1285
    %v1287 = vsel %vm357, %v1284, 0.0
    %1288 = vadd.xlane.f32.xlu0 %v1287
    %v1289 = vpop.xlane.xlu0 %1288
    %v1290 = vsel %vm357, %v1286, 0.0
    %1291 = vadd.xlane.f32.xlu0 %v1290
    %v1292 = vpop.xlane.xlu0 %1291
    %v1293 = vrcp.pop %v1289
    %v1294 = vrcp.pop %v1292
    %v1295 = vmul.f32 %v1284, %v1293
    %v1296 = vmul.f32 %v1286, %v1294
    %v1297 = vpack.c.bf16 %v1295, %v1295
    %v1298 = vpack.c.bf16 %v1296, %v1296
    %1299 = vrot.lane.b32.xlu0 %v353, 40
    %v1300 = vpop.permute.xlu0 %1299
    %v1302 = vsel %vm357, %v1297, 0
    %v1305 = vsel %vm485, %v1300, 0
    %1307 = vmatprep.subr.bf16.mxu0 0
    %1308 = vmatpush1.bf16.msra.mxu0 %v1305
    %1309 = vmatprep.subr.bf16.mxu0 0
    %1310 = vmatpush1.bf16.msra.mxu0 0
    %1311 = vmatprep.subr.bf16.mxu0 0
    %1312 = vmatpush1.bf16.msra.mxu0 0
    %1313 = vmatprep.subr.bf16.mxu0 0
    %1314 = vmatpush1.bf16.msra.mxu0 0
    %1315 = vmatprep.subr.bf16.mxu0 0
    %1316 = vmatpush1.bf16.msra.mxu0 0
    %1317 = vmatprep.subr.bf16.mxu0 0
    %1318 = vmatpush1.bf16.msra.mxu0 0
    %1319 = vmatprep.subr.bf16.mxu0 0
    %1320 = vmatpush1.bf16.msra.mxu0 0
    %1321 = vmatprep.subr.bf16.mxu0 0
    %1322 = vmatpush1.bf16.msra.mxu0 0
    %1323 = vmatprep.subr.bf16.mxu0 0
    %1324 = vmatpush1.bf16.msra.mxu0 0
    %1325 = vmatprep.subr.bf16.mxu0 0
    %1326 = vmatpush1.bf16.msra.mxu0 0
    %1327 = vmatprep.subr.bf16.mxu0 0
    %1328 = vmatpush1.bf16.msra.mxu0 0
    %1329 = vmatprep.subr.bf16.mxu0 0
    %1330 = vmatpush1.bf16.msra.mxu0 0
    %1331 = vmatprep.subr.bf16.mxu0 0
    %1332 = vmatpush1.bf16.msra.mxu0 0
    %1333 = vmatprep.subr.bf16.mxu0 0
    %1334 = vmatpush1.bf16.msra.mxu0 0
    %1335 = vmatprep.subr.bf16.mxu0 0
    %1336 = vmatpush1.bf16.msra.mxu0 0
    %1337 = vmatprep.subr.bf16.mxu0 0
    %1338 = vmatpush1.bf16.msra.mxu0 0
    %1339 = vmatprep.mubr.bf16.mxu0 0
    %1340 = vmatmul.mubr.bf16.gmra.mrb[0].mxu0 %v1302
    %v1341 = vpop.f32.mrb[0].mxu0
    %v1342 = vadd.f32 0.0, %v1341
    %v1343 = vpop.f32.mrb[0].mxu0
    %v1344 = vpop.f32.mrb[0].mxu0
    %v1345 = vpop.f32.mrb[0].mxu0
    %1346 = vdwg.mxu0
    %1347 = vrot.lane.b32.xlu0 %v354, 40
    %v1348 = vpop.permute.xlu0 %1347
    %v1350 = vsel %vm357, %v1298, 0
    %v1353 = vsel %vm485, %v1348, 0
    %1355 = vmatprep.subr.bf16.mxu0 0
    %1356 = vmatpush1.bf16.msra.mxu0 %v1353
    %1357 = vmatprep.subr.bf16.mxu0 0
    %1358 = vmatpush1.bf16.msra.mxu0 0
    %1359 = vmatprep.subr.bf16.mxu0 0
    %1360 = vmatpush1.bf16.msra.mxu0 0
    %1361 = vmatprep.subr.bf16.mxu0 0
    %1362 = vmatpush1.bf16.msra.mxu0 0
    %1363 = vmatprep.subr.bf16.mxu0 0
    %1364 = vmatpush1.bf16.msra.mxu0 0
    %1365 = vmatprep.subr.bf16.mxu0 0
    %1366 = vmatpush1.bf16.msra.mxu0 0
    %1367 = vmatprep.subr.bf16.mxu0 0
    %1368 = vmatpush1.bf16.msra.mxu0 0
    %1369 = vmatprep.subr.bf16.mxu0 0
    %1370 = vmatpush1.bf16.msra.mxu0 0
    %1371 = vmatprep.subr.bf16.mxu0 0
    %1372 = vmatpush1.bf16.msra.mxu0 0
    %1373 = vmatprep.subr.bf16.mxu0 0
    %1374 = vmatpush1.bf16.msra.mxu0 0
    %1375 = vmatprep.subr.bf16.mxu0 0
    %1376 = vmatpush1.bf16.msra.mxu0 0
    %1377 = vmatprep.subr.bf16.mxu0 0
    %1378 = vmatpush1.bf16.msra.mxu0 0
    %1379 = vmatprep.subr.bf16.mxu0 0
    %1380 = vmatpush1.bf16.msra.mxu0 0
    %1381 = vmatprep.subr.bf16.mxu0 0
    %1382 = vmatpush1.bf16.msra.mxu0 0
    %1383 = vmatprep.subr.bf16.mxu0 0
    %1384 = vmatpush1.bf16.msra.mxu0 0
    %1385 = vmatprep.subr.bf16.mxu0 0
    %1386 = vmatpush1.bf16.msra.mxu0 0
    %1387 = vmatprep.mubr.bf16.mxu0 0
    %1388 = vmatmul.mubr.bf16.gmra.mrb[0].mxu0 %v1350
    %v1389 = vpop.f32.mrb[0].mxu0
    %v1390 = vadd.f32 0.0, %v1389
    %v1391 = vpop.f32.mrb[0].mxu0
    %v1392 = vpop.f32.mrb[0].mxu0
    %v1393 = vpop.f32.mrb[0].mxu0
    %1394 = vdwg.mxu0
    %v1395 = vpack.c.bf16 %v1390, %v1342
    %v1397 = vsel %vm357, %v1395, 0
    %v1400 = vsel %vm485, %v349, 0
    %1402 = vmatprep.subr.bf16.mxu0 0
    %1403 = vmatpush1.bf16.msra.mxu0 %v1400
    %1404 = vmatprep.subr.bf16.mxu0 0
    %1405 = vmatpush1.bf16.msra.mxu0 0
    %1406 = vmatprep.subr.bf16.mxu0 0
    %1407 = vmatpush1.bf16.msra.mxu0 0
    %1408 = vmatprep.subr.bf16.mxu0 0
    %1409 = vmatpush1.bf16.msra.mxu0 0
    %1410 = vmatprep.subr.bf16.mxu0 0
    %1411 = vmatpush1.bf16.msra.mxu0 0
    %1412 = vmatprep.subr.bf16.mxu0 0
    %1413 = vmatpush1.bf16.msra.mxu0 0
    %1414 = vmatprep.subr.bf16.mxu0 0
    %1415 = vmatpush1.bf16.msra.mxu0 0
    %1416 = vmatprep.subr.bf16.mxu0 0
    %1417 = vmatpush1.bf16.msra.mxu0 0
    %1418 = vmatprep.subr.bf16.mxu0 0
    %1419 = vmatpush1.bf16.msra.mxu0 0
    %1420 = vmatprep.subr.bf16.mxu0 0
    %1421 = vmatpush1.bf16.msra.mxu0 0
    %1422 = vmatprep.subr.bf16.mxu0 0
    %1423 = vmatpush1.bf16.msra.mxu0 0
    %1424 = vmatprep.subr.bf16.mxu0 0
    %1425 = vmatpush1.bf16.msra.mxu0 0
    %1426 = vmatprep.subr.bf16.mxu0 0
    %1427 = vmatpush1.bf16.msra.mxu0 0
    %1428 = vmatprep.subr.bf16.mxu0 0
    %1429 = vmatpush1.bf16.msra.mxu0 0
    %1430 = vmatprep.subr.bf16.mxu0 0
    %1431 = vmatpush1.bf16.msra.mxu0 0
    %1432 = vmatprep.subr.bf16.mxu0 0
    %1433 = vmatpush1.bf16.msra.mxu0 0
    %1434 = vmatprep.mubr.bf16.mxu0 0
    %1435 = vmatmul.mubr.bf16.gmra.mrb[0].mxu0 %v1397
    %v1436 = vpop.f32.mrb[0].mxu0
    %v1437 = vadd.f32 0.0, %v1436
    %v1438 = vpop.f32.mrb[0].mxu0
    %v1439 = vpop.f32.mrb[0].mxu0
    %v1440 = vadd.f32 0.0, %v1439
    %v1441 = vpop.f32.mrb[0].mxu0
    %1442 = vdwg.mxu0
    %v1443 = vadd.f32 %v1169, %v1437
    %v1444 = vadd.f32 %v1170, %v1440
    %v1445 = vadd.f32 %v232, %v1443
    %v1446 = vadd.f32 %v233, %v1444
    %v1447 = vld [vmem:[%s15] sm:$0x1]
    %v1449 = vlaneseq
    %v1450 = vshrl.u32 %v1449, 7
    %v1451 = vsub.s32 0, %v1450
    %v1452 = vrot.slane %v1447, %v1451
    %v1454 = vadd.f32 %v1445, %v1452
    %v1455 = vadd.f32 %v1446, %v1452
    %v1456 = vld [vmem:[%s17] sm:$0x1]
    %v1457 = vld [vmem:[%s19] sm:$0x1]
    %v1458 = vsel %vm240, %v1454, 0.0
    %1459 = vadd.xlane.f32.xlu0 %v1458
    %v1460 = vpop.xlane.xlu0 %1459
    %v1461 = vsel %vm240, %v1455, 0.0
    %1462 = vadd.xlane.f32.xlu0 %v1461
    %v1463 = vpop.xlane.xlu0 %1462
    %v1464 = vmul.f32 %v1460, %v247
    %v1465 = vmul.f32 %v1463, %v247
    %v1466 = vsub.f32 %v1454, %v1464
    %v1467 = vsub.f32 %v1455, %v1465
    %v1468 = vmul.f32 %v1466, %v1466
    %v1469 = vmul.f32 %v1467, %v1467
    %v1470 = vsel %vm240, %v1468, 0.0
    %1471 = vadd.xlane.f32.xlu0 %v1470
    %v1472 = vpop.xlane.xlu0 %1471
    %v1473 = vsel %vm240, %v1469, 0.0
    %1474 = vadd.xlane.f32.xlu0 %v1473
    %v1475 = vpop.xlane.xlu0 %1474
    %v1476 = vmul.f32 %v1472, %v247
    %v1477 = vmul.f32 %v1475, %v247
    %v1478 = vadd.f32 %v1476, 1e-05
    %v1479 = vadd.f32 %v1477, 1e-05
    %v1480 = vrsqrt.pop %v1478
    %v1481 = vrsqrt.pop %v1479
    %v1482 = vmul.f32 %v1466, %v1480
    %v1483 = vmul.f32 %v1467, %v1481
    %v1485 = vlaneseq
    %v1486 = vshrl.u32 %v1485, 7
    %v1487 = vsub.s32 0, %v1486
    %v1488 = vrot.slane %v1456, %v1487
    %v1490 = vmul.f32 %v1482, %v1488
    %v1491 = vmul.f32 %v1483, %v1488
    %v1493 = vlaneseq
    %v1494 = vshrl.u32 %v1493, 7
    %v1495 = vsub.s32 0, %v1494
    %v1496 = vrot.slane %v1457, %v1495
    %v1498 = vadd.f32 %v1490, %v1496
    %v1499 = vadd.f32 %v1491, %v1496
    %v1500 = vpack.c.bf16 %v1499, %v1498
    %v1501 = vld [vmem:[%s21] sm:$0xf]
    %v1502 = vld [vmem:[%s21 + $0x4] sm:$0xf]
    %v1503 = vld [vmem:[%s21 + $0x8] sm:$0xf]
    %v1504 = vld [vmem:[%s21 + $0xc] sm:$0xf]
    %v1505 = vld [vmem:[%s23] sm:$0x1]
    %v1507 = vlaneseq
    %v1508 = vshrl.u32 %v1507, 7
    %v1509 = vsub.s32 0, %v1508
    %v1510 = vrot.slane %v1505, %v1509
    %v1516 = vunpack.c.l.b16 %v1501
    %v1517 = vunpack.c.l.b16 %v1502
    %v1518 = vunpack.c.l.b16 %v1503
    %v1519 = vunpack.c.l.b16 %v1504
    %v1520 = vpack.c.b16 %v1517, %v1516
    %v1521 = vpack.c.b16 %v1519, %v1518
    %v1525 = vsel %vm240, %v1500, 0
    %1527 = vmatprep.subr.bf16.mxu0 0
    %1528 = vmatpush1.bf16.msra.mxu0 %v1520
    %1529 = vmatprep.subr.bf16.mxu0 0
    %1530 = vmatpush1.bf16.msra.mxu0 %v1521
    %1531 = vmatprep.subr.bf16.mxu0 0
    %1532 = vmatpush1.bf16.msra.mxu0 0
    %1533 = vmatprep.subr.bf16.mxu0 0
    %1534 = vmatpush1.bf16.msra.mxu0 0
    %1535 = vmatprep.subr.bf16.mxu0 0
    %1536 = vmatpush1.bf16.msra.mxu0 0
    %1537 = vmatprep.subr.bf16.mxu0 0
    %1538 = vmatpush1.bf16.msra.mxu0 0
    %1539 = vmatprep.subr.bf16.mxu0 0
    %1540 = vmatpush1.bf16.msra.mxu0 0
    %1541 = vmatprep.subr.bf16.mxu0 0
    %1542 = vmatpush1.bf16.msra.mxu0 0
    %1543 = vmatprep.subr.bf16.mxu0 0
    %1544 = vmatpush1.bf16.msra.mxu0 0
    %1545 = vmatprep.subr.bf16.mxu0 0
    %1546 = vmatpush1.bf16.msra.mxu0 0
    %1547 = vmatprep.subr.bf16.mxu0 0
    %1548 = vmatpush1.bf16.msra.mxu0 0
    %1549 = vmatprep.subr.bf16.mxu0 0
    %1550 = vmatpush1.bf16.msra.mxu0 0
    %1551 = vmatprep.subr.bf16.mxu0 0
    %1552 = vmatpush1.bf16.msra.mxu0 0
    %1553 = vmatprep.subr.bf16.mxu0 0
    %1554 = vmatpush1.bf16.msra.mxu0 0
    %1555 = vmatprep.subr.bf16.mxu0 0
    %1556 = vmatpush1.bf16.msra.mxu0 0
    %1557 = vmatprep.subr.bf16.mxu0 0
    %1558 = vmatpush1.bf16.msra.mxu0 0
    %1559 = vmatprep.mubr.bf16.mxu0 0
    %1560 = vmatmul.mubr.bf16.gmra.mrb[0].mxu0 %v1525
    %v1561 = vpop.f32.mrb[0].mxu0
    %v1562 = vadd.f32 %v1510, %v1561
    %v1563 = vpop.f32.mrb[0].mxu0
    %v1564 = vpop.f32.mrb[0].mxu0
    %v1565 = vadd.f32 %v1510, %v1564
    %v1566 = vpop.f32.mrb[0].mxu0
    %1567 = vdwg.mxu0
    %v1568 = vmax.f32 %v1562, 0.0
    %v1569 = vmax.f32 %v1565, 0.0
    %v1570 = vpack.c.bf16 %v1569, %v1568
    %v1571 = vld [vmem:[%s25] sm:$0xf]
    %v1572 = vld [vmem:[%s25 + $0x4] sm:$0xf]
    %v1573 = vld [vmem:[%s25 + $0x8] sm:$0xf]
    %v1574 = vld [vmem:[%s25 + $0xc] sm:$0xf]
    %v1575 = vld [vmem:[%s25 + $0x10] sm:$0xf]
    %v1576 = vld [vmem:[%s25 + $0x14] sm:$0xf]
    %v1577 = vld [vmem:[%s25 + $0x18] sm:$0xf]
    %v1578 = vld [vmem:[%s25 + $0x1c] sm:$0xf]
    %v1579 = vld [vmem:[%s25 + $0x20] sm:$0xf]
    %v1580 = vld [vmem:[%s25 + $0x24] sm:$0xf]
    %v1581 = vld [vmem:[%s25 + $0x28] sm:$0xf]
    %v1582 = vld [vmem:[%s25 + $0x2c] sm:$0xf]
    %v1583 = vld [vmem:[%s25 + $0x30] sm:$0xf]
    %v1584 = vld [vmem:[%s25 + $0x34] sm:$0xf]
    %v1585 = vld [vmem:[%s25 + $0x38] sm:$0xf]
    %v1586 = vld [vmem:[%s25 + $0x3c] sm:$0xf]
    %v1587 = vld [vmem:[%s27] sm:$0x1]
    %v1589 = vlaneseq
    %v1590 = vshrl.u32 %v1589, 7
    %v1591 = vsub.s32 0, %v1590
    %v1592 = vrot.slane %v1587, %v1591
    %v1610 = vunpack.c.l.b16 %v1571
    %v1611 = vunpack.c.l.b16 %v1572
    %v1612 = vunpack.c.l.b16 %v1573
    %v1613 = vunpack.c.l.b16 %v1574
    %v1614 = vunpack.c.l.b16 %v1575
    %v1615 = vunpack.c.l.b16 %v1576
    %v1616 = vunpack.c.l.b16 %v1577
    %v1617 = vunpack.c.l.b16 %v1578
    %v1618 = vunpack.c.l.b16 %v1579
    %v1619 = vunpack.c.l.b16 %v1580
    %v1620 = vunpack.c.l.b16 %v1581
    %v1621 = vunpack.c.l.b16 %v1582
    %v1622 = vunpack.c.l.b16 %v1583
    %v1623 = vunpack.c.l.b16 %v1584
    %v1624 = vunpack.c.l.b16 %v1585
    %v1625 = vunpack.c.l.b16 %v1586
    %v1626 = vpack.c.b16 %v1611, %v1610
    %v1627 = vpack.c.b16 %v1613, %v1612
    %v1628 = vpack.c.b16 %v1615, %v1614
    %v1629 = vpack.c.b16 %v1617, %v1616
    %v1630 = vpack.c.b16 %v1619, %v1618
    %v1631 = vpack.c.b16 %v1621, %v1620
    %v1632 = vpack.c.b16 %v1623, %v1622
    %v1633 = vpack.c.b16 %v1625, %v1624
    %1642 = vmatprep.subr.bf16.mxu0 0
    %1643 = vmatpush1.bf16.msra.mxu0 %v1626
    %1644 = vmatprep.subr.bf16.mxu0 0
    %1645 = vmatpush1.bf16.msra.mxu0 %v1627
    %1646 = vmatprep.subr.bf16.mxu0 0
    %1647 = vmatpush1.bf16.msra.mxu0 %v1628
    %1648 = vmatprep.subr.bf16.mxu0 0
    %1649 = vmatpush1.bf16.msra.mxu0 %v1629
    %1650 = vmatprep.subr.bf16.mxu0 0
    %1651 = vmatpush1.bf16.msra.mxu0 %v1630
    %1652 = vmatprep.subr.bf16.mxu0 0
    %1653 = vmatpush1.bf16.msra.mxu0 %v1631
    %1654 = vmatprep.subr.bf16.mxu0 0
    %1655 = vmatpush1.bf16.msra.mxu0 %v1632
    %1656 = vmatprep.subr.bf16.mxu0 0
    %1657 = vmatpush1.bf16.msra.mxu0 %v1633
    %1658 = vmatprep.subr.bf16.mxu0 0
    %1659 = vmatpush1.bf16.msra.mxu0 0
    %1660 = vmatprep.subr.bf16.mxu0 0
    %1661 = vmatpush1.bf16.msra.mxu0 0
    %1662 = vmatprep.subr.bf16.mxu0 0
    %1663 = vmatpush1.bf16.msra.mxu0 0
    %1664 = vmatprep.subr.bf16.mxu0 0
    %1665 = vmatpush1.bf16.msra.mxu0 0
    %1666 = vmatprep.subr.bf16.mxu0 0
    %1667 = vmatpush1.bf16.msra.mxu0 0
    %1668 = vmatprep.subr.bf16.mxu0 0
    %1669 = vmatpush1.bf16.msra.mxu0 0
    %1670 = vmatprep.subr.bf16.mxu0 0
    %1671 = vmatpush1.bf16.msra.mxu0 0
    %1672 = vmatprep.subr.bf16.mxu0 0
    %1673 = vmatpush1.bf16.msra.mxu0 0
    %1674 = vmatprep.mubr.bf16.mxu0 0
    %1675 = vmatmul.mubr.bf16.gmra.mrb[0].mxu0 %v1570
    %v1676 = vpop.f32.mrb[0].mxu0
    %v1677 = vadd.f32 %v1592, %v1676
    %v1678 = vpop.f32.mrb[0].mxu0
    %v1679 = vpop.f32.mrb[0].mxu0
    %v1680 = vadd.f32 %v1592, %v1679
    %v1681 = vpop.f32.mrb[0].mxu0
    %1682 = vdwg.mxu0
    %v1683 = vadd.f32 %v1454, %v1677
    %v1684 = vadd.f32 %v1455, %v1680
    %v1685 = vld [vmem:[%s29] sm:$0x1]
    %v1686 = vld [vmem:[%s31] sm:$0x1]
    %v1687 = vsel %vm240, %v1683, 0.0
    %1688 = vadd.xlane.f32.xlu0 %v1687
    %v1689 = vpop.xlane.xlu0 %1688
    %v1690 = vsel %vm240, %v1684, 0.0
    %1691 = vadd.xlane.f32.xlu0 %v1690
    %v1692 = vpop.xlane.xlu0 %1691
    %v1693 = vmul.f32 %v1689, %v247
    %v1694 = vmul.f32 %v1692, %v247
    %v1695 = vsub.f32 %v1683, %v1693
    %v1696 = vsub.f32 %v1684, %v1694
    %v1697 = vmul.f32 %v1695, %v1695
    %v1698 = vmul.f32 %v1696, %v1696
    %v1699 = vsel %vm240, %v1697, 0.0
    %1700 = vadd.xlane.f32.xlu0 %v1699
    %v1701 = vpop.xlane.xlu0 %1700
    %v1702 = vsel %vm240, %v1698, 0.0
    %1703 = vadd.xlane.f32.xlu0 %v1702
    %v1704 = vpop.xlane.xlu0 %1703
    %v1705 = vmul.f32 %v1701, %v247
    %v1706 = vmul.f32 %v1704, %v247
    %v1707 = vadd.f32 %v1705, 1e-05
    %v1708 = vadd.f32 %v1706, 1e-05
    %v1709 = vrsqrt.pop %v1707
    %v1710 = vrsqrt.pop %v1708
    %v1711 = vmul.f32 %v1695, %v1709
    %v1712 = vmul.f32 %v1696, %v1710
    %v1714 = vlaneseq
    %v1715 = vshrl.u32 %v1714, 7
    %v1716 = vsub.s32 0, %v1715
    %v1717 = vrot.slane %v1685, %v1716
    %v1719 = vmul.f32 %v1711, %v1717
    %v1720 = vmul.f32 %v1712, %v1717
    %v1722 = vlaneseq
    %v1723 = vshrl.u32 %v1722, 7
    %v1724 = vsub.s32 0, %v1723
    %v1725 = vrot.slane %v1686, %v1724
    %v1727 = vadd.f32 %v1719, %v1725
    %v1728 = vadd.f32 %v1720, %v1725
    %v1729 = vpack.c.bf16 %v1728, %v1727
    %v1730 = vld [vmem:[%s33] sm:$0xf]
    %v1731 = vld [vmem:[%s33 + $0x4] sm:$0xf]
    %v1732 = vld [vmem:[%s33 + $0x8] sm:$0xf]
    %v1733 = vld [vmem:[%s33 + $0xc] sm:$0xf]
    %v1738 = vunpack.c.l.b16 %v1730
    %v1739 = vunpack.c.l.b16 %v1731
    %v1740 = vunpack.c.l.b16 %v1732
    %v1741 = vunpack.c.l.b16 %v1733
    %v1742 = vpack.c.b16 %v1739, %v1738
    %v1743 = vpack.c.b16 %v1741, %v1740
    %v1747 = vsel %vm240, %v1729, 0
    %1749 = vmatprep.subr.bf16.mxu0 0
    %1750 = vmatpush1.bf16.msra.mxu0 %v1742
    %1751 = vmatprep.subr.bf16.mxu0 0
    %1752 = vmatpush1.bf16.msra.mxu0 %v1743
    %1753 = vmatprep.subr.bf16.mxu0 0
    %1754 = vmatpush1.bf16.msra.mxu0 0
    %1755 = vmatprep.subr.bf16.mxu0 0
    %1756 = vmatpush1.bf16.msra.mxu0 0
    %1757 = vmatprep.subr.bf16.mxu0 0
    %1758 = vmatpush1.bf16.msra.mxu0 0
    %1759 = vmatprep.subr.bf16.mxu0 0
    %1760 = vmatpush1.bf16.msra.mxu0 0
    %1761 = vmatprep.subr.bf16.mxu0 0
    %1762 = vmatpush1.bf16.msra.mxu0 0
    %1763 = vmatprep.subr.bf16.mxu0 0
    %1764 = vmatpush1.bf16.msra.mxu0 0
    %1765 = vmatprep.subr.bf16.mxu0 0
    %1766 = vmatpush1.bf16.msra.mxu0 0
    %1767 = vmatprep.subr.bf16.mxu0 0
    %1768 = vmatpush1.bf16.msra.mxu0 0
    %1769 = vmatprep.subr.bf16.mxu0 0
    %1770 = vmatpush1.bf16.msra.mxu0 0
    %1771 = vmatprep.subr.bf16.mxu0 0
    %1772 = vmatpush1.bf16.msra.mxu0 0
    %1773 = vmatprep.subr.bf16.mxu0 0
    %1774 = vmatpush1.bf16.msra.mxu0 0
    %1775 = vmatprep.subr.bf16.mxu0 0
    %1776 = vmatpush1.bf16.msra.mxu0 0
    %1777 = vmatprep.subr.bf16.mxu0 0
    %1778 = vmatpush1.bf16.msra.mxu0 0
    %1779 = vmatprep.subr.bf16.mxu0 0
    %1780 = vmatpush1.bf16.msra.mxu0 0
    %1781 = vmatprep.mubr.bf16.mxu0 0
    %1782 = vmatmul.mubr.bf16.gmra.mrb[0].mxu0 %v1747
    %v1783 = vpop.f32.mrb[0].mxu0
    %v1784 = vadd.f32 0.0, %v1783
    %v1785 = vpop.f32.mrb[0].mxu0
    %v1786 = vpop.f32.mrb[0].mxu0
    %v1787 = vadd.f32 0.0, %v1786
    %v1788 = vpop.f32.mrb[0].mxu0
    %1789 = vdwg.mxu0
    %v1790 = vpack.c.bf16 %v1787, %v1784
    %v1791 = vld [vmem:[%s35] sm:$0xf]
    %v1792 = vld [vmem:[%s35 + $0x4] sm:$0xf]
    %v1793 = vld [vmem:[%s35 + $0x8] sm:$0xf]
    %v1794 = vld [vmem:[%s35 + $0xc] sm:$0xf]
    %v1796 = vunpack.c.l.b16 %v1790
    %v1797 = vunpack.c.h.b16 %v1790
    %v1798 = vpack.c.b16 %v1796, %v1796
    %v1799 = vpack.c.b16 %v1797, %v1797
    %1800 = vrot.lane.b32.xlu0 %v1798, 96
    %v1801 = vpop.permute.xlu0 %1800
    %v1803 = vsel %vm357, %v1798, 0
    %v1806 = vsel %vm357, %v1801, 0
    %1808 = vmatprep.subr.bf16.mxu0 0
    %1809 = vmatpush1.bf16.xpose.msra.mxu0 %v1806
    %1810 = vmatprep.subr.bf16.mxu0 0
    %1811 = vmatpush1.bf16.xpose.msra.mxu0 0
    %1812 = vmatprep.subr.bf16.mxu0 0
    %1813 = vmatpush1.bf16.xpose.msra.mxu0 0
    %1814 = vmatprep.subr.bf16.mxu0 0
    %1815 = vmatpush1.bf16.xpose.msra.mxu0 0
    %1816 = vmatprep.subr.bf16.mxu0 0
    %1817 = vmatpush1.bf16.xpose.msra.mxu0 0
    %1818 = vmatprep.subr.bf16.mxu0 0
    %1819 = vmatpush1.bf16.xpose.msra.mxu0 0
    %1820 = vmatprep.subr.bf16.mxu0 0
    %1821 = vmatpush1.bf16.xpose.msra.mxu0 0
    %1822 = vmatprep.subr.bf16.mxu0 0
    %1823 = vmatpush1.bf16.xpose.msra.mxu0 0
    %1824 = vmatprep.subr.bf16.mxu0 0
    %1825 = vmatpush1.bf16.xpose.msra.mxu0 0
    %1826 = vmatprep.subr.bf16.mxu0 0
    %1827 = vmatpush1.bf16.xpose.msra.mxu0 0
    %1828 = vmatprep.subr.bf16.mxu0 0
    %1829 = vmatpush1.bf16.xpose.msra.mxu0 0
    %1830 = vmatprep.subr.bf16.mxu0 0
    %1831 = vmatpush1.bf16.xpose.msra.mxu0 0
    %1832 = vmatprep.subr.bf16.mxu0 0
    %1833 = vmatpush1.bf16.xpose.msra.mxu0 0
    %1834 = vmatprep.subr.bf16.mxu0 0
    %1835 = vmatpush1.bf16.xpose.msra.mxu0 0
    %1836 = vmatprep.subr.bf16.mxu0 0
    %1837 = vmatpush1.bf16.xpose.msra.mxu0 0
    %1838 = vmatprep.subr.bf16.mxu0 0
    %1839 = vmatpush1.bf16.xpose.msra.mxu0 0
    %1840 = vmatprep.mubr.bf16.mxu0 0
    %1841 = vmatmul.mubr.bf16.gmra.mrb[0].mxu0 %v1803
    %v1842 = vpop.f32.mrb[0].mxu0
    %v1843 = vadd.f32 0.0, %v1842
    %v1844 = vpop.f32.mrb[0].mxu0
    %v1845 = vpop.f32.mrb[0].mxu0
    %v1846 = vpop.f32.mrb[0].mxu0
    %1847 = vdwg.mxu0
    %1848 = vrot.lane.b32.xlu0 %v1799, 96
    %v1849 = vpop.permute.xlu0 %1848
    %v1851 = vsel %vm357, %v1799, 0
    %v1854 = vsel %vm357, %v1849, 0
    %1856 = vmatprep.subr.bf16.mxu0 0
    %1857 = vmatpush1.bf16.xpose.msra.mxu0 %v1854
    %1858 = vmatprep.subr.bf16.mxu0 0
    %1859 = vmatpush1.bf16.xpose.msra.mxu0 0
    %1860 = vmatprep.subr.bf16.mxu0 0
    %1861 = vmatpush1.bf16.xpose.msra.mxu0 0
    %1862 = vmatprep.subr.bf16.mxu0 0
    %1863 = vmatpush1.bf16.xpose.msra.mxu0 0
    %1864 = vmatprep.subr.bf16.mxu0 0
    %1865 = vmatpush1.bf16.xpose.msra.mxu0 0
    %1866 = vmatprep.subr.bf16.mxu0 0
    %1867 = vmatpush1.bf16.xpose.msra.mxu0 0
    %1868 = vmatprep.subr.bf16.mxu0 0
    %1869 = vmatpush1.bf16.xpose.msra.mxu0 0
    %1870 = vmatprep.subr.bf16.mxu0 0
    %1871 = vmatpush1.bf16.xpose.msra.mxu0 0
    %1872 = vmatprep.subr.bf16.mxu0 0
    %1873 = vmatpush1.bf16.xpose.msra.mxu0 0
    %1874 = vmatprep.subr.bf16.mxu0 0
    %1875 = vmatpush1.bf16.xpose.msra.mxu0 0
    %1876 = vmatprep.subr.bf16.mxu0 0
    %1877 = vmatpush1.bf16.xpose.msra.mxu0 0
    %1878 = vmatprep.subr.bf16.mxu0 0
    %1879 = vmatpush1.bf16.xpose.msra.mxu0 0
    %1880 = vmatprep.subr.bf16.mxu0 0
    %1881 = vmatpush1.bf16.xpose.msra.mxu0 0
    %1882 = vmatprep.subr.bf16.mxu0 0
    %1883 = vmatpush1.bf16.xpose.msra.mxu0 0
    %1884 = vmatprep.subr.bf16.mxu0 0
    %1885 = vmatpush1.bf16.xpose.msra.mxu0 0
    %1886 = vmatprep.subr.bf16.mxu0 0
    %1887 = vmatpush1.bf16.xpose.msra.mxu0 0
    %1888 = vmatprep.mubr.bf16.mxu0 0
    %1889 = vmatmul.mubr.bf16.gmra.mrb[0].mxu0 %v1851
    %v1890 = vpop.f32.mrb[0].mxu0
    %v1891 = vadd.f32 0.0, %v1890
    %v1892 = vpop.f32.mrb[0].mxu0
    %v1893 = vpop.f32.mrb[0].mxu0
    %v1894 = vpop.f32.mrb[0].mxu0
    %1895 = vdwg.mxu0
    %v1896 = vmul.f32 %v1843, 0.17677669
    %v1897 = vmul.f32 %v1891, 0.17677669
    %v1898 = vadd.f32 %v1896, %v237
    %v1899 = vadd.f32 %v1897, %v237
    %v1900 = vsel %vm357, %v1898, -inf
    %1901 = vmax.xlane.f32.xlu0 %v1900
    %v1902 = vpop.xlane.xlu0 %1901
    %v1903 = vsel %vm357, %v1899, -inf
    %1904 = vmax.xlane.f32.xlu0 %v1903
    %v1905 = vpop.xlane.xlu0 %1904
    %v1906 = vsub.f32 %v1898, %v1902
    %v1907 = vsub.f32 %v1899, %v1905
    %v1908 = vmul.f32 %v1906, 1.442695
    %v1909 = vpow.pop %v1908
    %v1910 = vmul.f32 %v1907, 1.442695
    %v1911 = vpow.pop %v1910
    %v1912 = vsel %vm357, %v1909, 0.0
    %1913 = vadd.xlane.f32.xlu0 %v1912
    %v1914 = vpop.xlane.xlu0 %1913
    %v1915 = vsel %vm357, %v1911, 0.0
    %1916 = vadd.xlane.f32.xlu0 %v1915
    %v1917 = vpop.xlane.xlu0 %1916
    %v1918 = vrcp.pop %v1914
    %v1919 = vrcp.pop %v1917
    %v1920 = vmul.f32 %v1909, %v1918
    %v1921 = vmul.f32 %v1911, %v1919
    %v1922 = vpack.c.bf16 %v1920, %v1920
    %v1923 = vpack.c.bf16 %v1921, %v1921
    %1924 = vrot.lane.b32.xlu0 %v1798, 64
    %v1925 = vpop.permute.xlu0 %1924
    %v1927 = vsel %vm357, %v1922, 0
    %v1930 = vsel %vm485, %v1925, 0
    %1932 = vmatprep.subr.bf16.mxu0 0
    %1933 = vmatpush1.bf16.msra.mxu0 %v1930
    %1934 = vmatprep.subr.bf16.mxu0 0
    %1935 = vmatpush1.bf16.msra.mxu0 0
    %1936 = vmatprep.subr.bf16.mxu0 0
    %1937 = vmatpush1.bf16.msra.mxu0 0
    %1938 = vmatprep.subr.bf16.mxu0 0
    %1939 = vmatpush1.bf16.msra.mxu0 0
    %1940 = vmatprep.subr.bf16.mxu0 0
    %1941 = vmatpush1.bf16.msra.mxu0 0
    %1942 = vmatprep.subr.bf16.mxu0 0
    %1943 = vmatpush1.bf16.msra.mxu0 0
    %1944 = vmatprep.subr.bf16.mxu0 0
    %1945 = vmatpush1.bf16.msra.mxu0 0
    %1946 = vmatprep.subr.bf16.mxu0 0
    %1947 = vmatpush1.bf16.msra.mxu0 0
    %1948 = vmatprep.subr.bf16.mxu0 0
    %1949 = vmatpush1.bf16.msra.mxu0 0
    %1950 = vmatprep.subr.bf16.mxu0 0
    %1951 = vmatpush1.bf16.msra.mxu0 0
    %1952 = vmatprep.subr.bf16.mxu0 0
    %1953 = vmatpush1.bf16.msra.mxu0 0
    %1954 = vmatprep.subr.bf16.mxu0 0
    %1955 = vmatpush1.bf16.msra.mxu0 0
    %1956 = vmatprep.subr.bf16.mxu0 0
    %1957 = vmatpush1.bf16.msra.mxu0 0
    %1958 = vmatprep.subr.bf16.mxu0 0
    %1959 = vmatpush1.bf16.msra.mxu0 0
    %1960 = vmatprep.subr.bf16.mxu0 0
    %1961 = vmatpush1.bf16.msra.mxu0 0
    %1962 = vmatprep.subr.bf16.mxu0 0
    %1963 = vmatpush1.bf16.msra.mxu0 0
    %1964 = vmatprep.mubr.bf16.mxu0 0
    %1965 = vmatmul.mubr.bf16.gmra.mrb[0].mxu0 %v1927
    %v1966 = vpop.f32.mrb[0].mxu0
    %v1967 = vadd.f32 0.0, %v1966
    %v1968 = vpop.f32.mrb[0].mxu0
    %v1969 = vpop.f32.mrb[0].mxu0
    %v1970 = vpop.f32.mrb[0].mxu0
    %1971 = vdwg.mxu0
    %1972 = vrot.lane.b32.xlu0 %v1799, 64
    %v1973 = vpop.permute.xlu0 %1972
    %v1975 = vsel %vm357, %v1923, 0
    %v1978 = vsel %vm485, %v1973, 0
    %1980 = vmatprep.subr.bf16.mxu0 0
    %1981 = vmatpush1.bf16.msra.mxu0 %v1978
    %1982 = vmatprep.subr.bf16.mxu0 0
    %1983 = vmatpush1.bf16.msra.mxu0 0
    %1984 = vmatprep.subr.bf16.mxu0 0
    %1985 = vmatpush1.bf16.msra.mxu0 0
    %1986 = vmatprep.subr.bf16.mxu0 0
    %1987 = vmatpush1.bf16.msra.mxu0 0
    %1988 = vmatprep.subr.bf16.mxu0 0
    %1989 = vmatpush1.bf16.msra.mxu0 0
    %1990 = vmatprep.subr.bf16.mxu0 0
    %1991 = vmatpush1.bf16.msra.mxu0 0
    %1992 = vmatprep.subr.bf16.mxu0 0
    %1993 = vmatpush1.bf16.msra.mxu0 0
    %1994 = vmatprep.subr.bf16.mxu0 0
    %1995 = vmatpush1.bf16.msra.mxu0 0
    %1996 = vmatprep.subr.bf16.mxu0 0
    %1997 = vmatpush1.bf16.msra.mxu0 0
    %1998 = vmatprep.subr.bf16.mxu0 0
    %1999 = vmatpush1.bf16.msra.mxu0 0
    %2000 = vmatprep.subr.bf16.mxu0 0
    %2001 = vmatpush1.bf16.msra.mxu0 0
    %2002 = vmatprep.subr.bf16.mxu0 0
    %2003 = vmatpush1.bf16.msra.mxu0 0
    %2004 = vmatprep.subr.bf16.mxu0 0
    %2005 = vmatpush1.bf16.msra.mxu0 0
    %2006 = vmatprep.subr.bf16.mxu0 0
    %2007 = vmatpush1.bf16.msra.mxu0 0
    %2008 = vmatprep.subr.bf16.mxu0 0
    %2009 = vmatpush1.bf16.msra.mxu0 0
    %2010 = vmatprep.subr.bf16.mxu0 0
    %2011 = vmatpush1.bf16.msra.mxu0 0
    %2012 = vmatprep.mubr.bf16.mxu0 0
    %2013 = vmatmul.mubr.bf16.gmra.mrb[0].mxu0 %v1975
    %v2014 = vpop.f32.mrb[0].mxu0
    %v2015 = vadd.f32 0.0, %v2014
    %v2016 = vpop.f32.mrb[0].mxu0
    %v2017 = vpop.f32.mrb[0].mxu0
    %v2018 = vpop.f32.mrb[0].mxu0
    %2019 = vdwg.mxu0
    %v2020 = vpack.c.bf16 %v2015, %v1967
    %2021 = vrot.lane.b32.xlu0 %v1798, 120
    %v2022 = vpop.permute.xlu0 %2021
    %2023 = vrot.lane.b32.xlu0 %v1798, 88
    %v2024 = vpop.permute.xlu0 %2023
    %v2026 = vsel %vm357, %v2022, 0
    %v2029 = vsel %vm357, %v2024, 0
    %2031 = vmatprep.subr.bf16.mxu0 0
    %2032 = vmatpush1.bf16.xpose.msra.mxu0 %v2029
    %2033 = vmatprep.subr.bf16.mxu0 0
    %2034 = vmatpush1.bf16.xpose.msra.mxu0 0
    %2035 = vmatprep.subr.bf16.mxu0 0
    %2036 = vmatpush1.bf16.xpose.msra.mxu0 0
    %2037 = vmatprep.subr.bf16.mxu0 0
    %2038 = vmatpush1.bf16.xpose.msra.mxu0 0
    %2039 = vmatprep.subr.bf16.mxu0 0
    %2040 = vmatpush1.bf16.xpose.msra.mxu0 0
    %2041 = vmatprep.subr.bf16.mxu0 0
    %2042 = vmatpush1.bf16.xpose.msra.mxu0 0
    %2043 = vmatprep.subr.bf16.mxu0 0
    %2044 = vmatpush1.bf16.xpose.msra.mxu0 0
    %2045 = vmatprep.subr.bf16.mxu0 0
    %2046 = vmatpush1.bf16.xpose.msra.mxu0 0
    %2047 = vmatprep.subr.bf16.mxu0 0
    %2048 = vmatpush1.bf16.xpose.msra.mxu0 0
    %2049 = vmatprep.subr.bf16.mxu0 0
    %2050 = vmatpush1.bf16.xpose.msra.mxu0 0
    %2051 = vmatprep.subr.bf16.mxu0 0
    %2052 = vmatpush1.bf16.xpose.msra.mxu0 0
    %2053 = vmatprep.subr.bf16.mxu0 0
    %2054 = vmatpush1.bf16.xpose.msra.mxu0 0
    %2055 = vmatprep.subr.bf16.mxu0 0
    %2056 = vmatpush1.bf16.xpose.msra.mxu0 0
    %2057 = vmatprep.subr.bf16.mxu0 0
    %2058 = vmatpush1.bf16.xpose.msra.mxu0 0
    %2059 = vmatprep.subr.bf16.mxu0 0
    %2060 = vmatpush1.bf16.xpose.msra.mxu0 0
    %2061 = vmatprep.subr.bf16.mxu0 0
    %2062 = vmatpush1.bf16.xpose.msra.mxu0 0
    %2063 = vmatprep.mubr.bf16.mxu0 0
    %2064 = vmatmul.mubr.bf16.gmra.mrb[0].mxu0 %v2026
    %v2065 = vpop.f32.mrb[0].mxu0
    %v2066 = vadd.f32 0.0, %v2065
    %v2067 = vpop.f32.mrb[0].mxu0
    %v2068 = vpop.f32.mrb[0].mxu0
    %v2069 = vpop.f32.mrb[0].mxu0
    %2070 = vdwg.mxu0
    %2071 = vrot.lane.b32.xlu0 %v1799, 120
    %v2072 = vpop.permute.xlu0 %2071
    %2073 = vrot.lane.b32.xlu0 %v1799, 88
    %v2074 = vpop.permute.xlu0 %2073
    %v2076 = vsel %vm357, %v2072, 0
    %v2079 = vsel %vm357, %v2074, 0
    %2081 = vmatprep.subr.bf16.mxu0 0
    %2082 = vmatpush1.bf16.xpose.msra.mxu0 %v2079
    %2083 = vmatprep.subr.bf16.mxu0 0
    %2084 = vmatpush1.bf16.xpose.msra.mxu0 0
    %2085 = vmatprep.subr.bf16.mxu0 0
    %2086 = vmatpush1.bf16.xpose.msra.mxu0 0
    %2087 = vmatprep.subr.bf16.mxu0 0
    %2088 = vmatpush1.bf16.xpose.msra.mxu0 0
    %2089 = vmatprep.subr.bf16.mxu0 0
    %2090 = vmatpush1.bf16.xpose.msra.mxu0 0
    %2091 = vmatprep.subr.bf16.mxu0 0
    %2092 = vmatpush1.bf16.xpose.msra.mxu0 0
    %2093 = vmatprep.subr.bf16.mxu0 0
    %2094 = vmatpush1.bf16.xpose.msra.mxu0 0
    %2095 = vmatprep.subr.bf16.mxu0 0
    %2096 = vmatpush1.bf16.xpose.msra.mxu0 0
    %2097 = vmatprep.subr.bf16.mxu0 0
    %2098 = vmatpush1.bf16.xpose.msra.mxu0 0
    %2099 = vmatprep.subr.bf16.mxu0 0
    %2100 = vmatpush1.bf16.xpose.msra.mxu0 0
    %2101 = vmatprep.subr.bf16.mxu0 0
    %2102 = vmatpush1.bf16.xpose.msra.mxu0 0
    %2103 = vmatprep.subr.bf16.mxu0 0
    %2104 = vmatpush1.bf16.xpose.msra.mxu0 0
    %2105 = vmatprep.subr.bf16.mxu0 0
    %2106 = vmatpush1.bf16.xpose.msra.mxu0 0
    %2107 = vmatprep.subr.bf16.mxu0 0
    %2108 = vmatpush1.bf16.xpose.msra.mxu0 0
    %2109 = vmatprep.subr.bf16.mxu0 0
    %2110 = vmatpush1.bf16.xpose.msra.mxu0 0
    %2111 = vmatprep.subr.bf16.mxu0 0
    %2112 = vmatpush1.bf16.xpose.msra.mxu0 0
    %2113 = vmatprep.mubr.bf16.mxu0 0
    %2114 = vmatmul.mubr.bf16.gmra.mrb[0].mxu0 %v2076
    %v2115 = vpop.f32.mrb[0].mxu0
    %v2116 = vadd.f32 0.0, %v2115
    %v2117 = vpop.f32.mrb[0].mxu0
    %v2118 = vpop.f32.mrb[0].mxu0
    %v2119 = vpop.f32.mrb[0].mxu0
    %2120 = vdwg.mxu0
    %v2121 = vmul.f32 %v2066, 0.17677669
    %v2122 = vmul.f32 %v2116, 0.17677669
    %v2123 = vadd.f32 %v2121, %v237
    %v2124 = vadd.f32 %v2122, %v237
    %v2125 = vsel %vm357, %v2123, -inf
    %2126 = vmax.xlane.f32.xlu0 %v2125
    %v2127 = vpop.xlane.xlu0 %2126
    %v2128 = vsel %vm357, %v2124, -inf
    %2129 = vmax.xlane.f32.xlu0 %v2128
    %v2130 = vpop.xlane.xlu0 %2129
    %v2131 = vsub.f32 %v2123, %v2127
    %v2132 = vsub.f32 %v2124, %v2130
    %v2133 = vmul.f32 %v2131, 1.442695
    %v2134 = vpow.pop %v2133
    %v2135 = vmul.f32 %v2132, 1.442695
    %v2136 = vpow.pop %v2135
    %v2137 = vsel %vm357, %v2134, 0.0
    %2138 = vadd.xlane.f32.xlu0 %v2137
    %v2139 = vpop.xlane.xlu0 %2138
    %v2140 = vsel %vm357, %v2136, 0.0
    %2141 = vadd.xlane.f32.xlu0 %v2140
    %v2142 = vpop.xlane.xlu0 %2141
    %v2143 = vrcp.pop %v2139
    %v2144 = vrcp.pop %v2142
    %v2145 = vmul.f32 %v2134, %v2143
    %v2146 = vmul.f32 %v2136, %v2144
    %v2147 = vpack.c.bf16 %v2145, %v2145
    %v2148 = vpack.c.bf16 %v2146, %v2146
    %2149 = vrot.lane.b32.xlu0 %v1798, 56
    %v2150 = vpop.permute.xlu0 %2149
    %v2152 = vsel %vm357, %v2147, 0
    %v2155 = vsel %vm485, %v2150, 0
    %2157 = vmatprep.subr.bf16.mxu0 0
    %2158 = vmatpush1.bf16.msra.mxu0 %v2155
    %2159 = vmatprep.subr.bf16.mxu0 0
    %2160 = vmatpush1.bf16.msra.mxu0 0
    %2161 = vmatprep.subr.bf16.mxu0 0
    %2162 = vmatpush1.bf16.msra.mxu0 0
    %2163 = vmatprep.subr.bf16.mxu0 0
    %2164 = vmatpush1.bf16.msra.mxu0 0
    %2165 = vmatprep.subr.bf16.mxu0 0
    %2166 = vmatpush1.bf16.msra.mxu0 0
    %2167 = vmatprep.subr.bf16.mxu0 0
    %2168 = vmatpush1.bf16.msra.mxu0 0
    %2169 = vmatprep.subr.bf16.mxu0 0
    %2170 = vmatpush1.bf16.msra.mxu0 0
    %2171 = vmatprep.subr.bf16.mxu0 0
    %2172 = vmatpush1.bf16.msra.mxu0 0
    %2173 = vmatprep.subr.bf16.mxu0 0
    %2174 = vmatpush1.bf16.msra.mxu0 0
    %2175 = vmatprep.subr.bf16.mxu0 0
    %2176 = vmatpush1.bf16.msra.mxu0 0
    %2177 = vmatprep.subr.bf16.mxu0 0
    %2178 = vmatpush1.bf16.msra.mxu0 0
    %2179 = vmatprep.subr.bf16.mxu0 0
    %2180 = vmatpush1.bf16.msra.mxu0 0
    %2181 = vmatprep.subr.bf16.mxu0 0
    %2182 = vmatpush1.bf16.msra.mxu0 0
    %2183 = vmatprep.subr.bf16.mxu0 0
    %2184 = vmatpush1.bf16.msra.mxu0 0
    %2185 = vmatprep.subr.bf16.mxu0 0
    %2186 = vmatpush1.bf16.msra.mxu0 0
    %2187 = vmatprep.subr.bf16.mxu0 0
    %2188 = vmatpush1.bf16.msra.mxu0 0
    %2189 = vmatprep.mubr.bf16.mxu0 0
    %2190 = vmatmul.mubr.bf16.gmra.mrb[0].mxu0 %v2152
    %v2191 = vpop.f32.mrb[0].mxu0
    %v2192 = vadd.f32 0.0, %v2191
    %v2193 = vpop.f32.mrb[0].mxu0
    %v2194 = vpop.f32.mrb[0].mxu0
    %v2195 = vpop.f32.mrb[0].mxu0
    %2196 = vdwg.mxu0
    %2197 = vrot.lane.b32.xlu0 %v1799, 56
    %v2198 = vpop.permute.xlu0 %2197
    %v2200 = vsel %vm357, %v2148, 0
    %v2203 = vsel %vm485, %v2198, 0
    %2205 = vmatprep.subr.bf16.mxu0 0
    %2206 = vmatpush1.bf16.msra.mxu0 %v2203
    %2207 = vmatprep.subr.bf16.mxu0 0
    %2208 = vmatpush1.bf16.msra.mxu0 0
    %2209 = vmatprep.subr.bf16.mxu0 0
    %2210 = vmatpush1.bf16.msra.mxu0 0
    %2211 = vmatprep.subr.bf16.mxu0 0
    %2212 = vmatpush1.bf16.msra.mxu0 0
    %2213 = vmatprep.subr.bf16.mxu0 0
    %2214 = vmatpush1.bf16.msra.mxu0 0
    %2215 = vmatprep.subr.bf16.mxu0 0
    %2216 = vmatpush1.bf16.msra.mxu0 0
    %2217 = vmatprep.subr.bf16.mxu0 0
    %2218 = vmatpush1.bf16.msra.mxu0 0
    %2219 = vmatprep.subr.bf16.mxu0 0
    %2220 = vmatpush1.bf16.msra.mxu0 0
    %2221 = vmatprep.subr.bf16.mxu0 0
    %2222 = vmatpush1.bf16.msra.mxu0 0
    %2223 = vmatprep.subr.bf16.mxu0 0
    %2224 = vmatpush1.bf16.msra.mxu0 0
    %2225 = vmatprep.subr.bf16.mxu0 0
    %2226 = vmatpush1.bf16.msra.mxu0 0
    %2227 = vmatprep.subr.bf16.mxu0 0
    %2228 = vmatpush1.bf16.msra.mxu0 0
    %2229 = vmatprep.subr.bf16.mxu0 0
    %2230 = vmatpush1.bf16.msra.mxu0 0
    %2231 = vmatprep.subr.bf16.mxu0 0
    %2232 = vmatpush1.bf16.msra.mxu0 0
    %2233 = vmatprep.subr.bf16.mxu0 0
    %2234 = vmatpush1.bf16.msra.mxu0 0
    %2235 = vmatprep.subr.bf16.mxu0 0
    %2236 = vmatpush1.bf16.msra.mxu0 0
    %2237 = vmatprep.mubr.bf16.mxu0 0
    %2238 = vmatmul.mubr.bf16.gmra.mrb[0].mxu0 %v2200
    %v2239 = vpop.f32.mrb[0].mxu0
    %v2240 = vadd.f32 0.0, %v2239
    %v2241 = vpop.f32.mrb[0].mxu0
    %v2242 = vpop.f32.mrb[0].mxu0
    %v2243 = vpop.f32.mrb[0].mxu0
    %2244 = vdwg.mxu0
    %v2245 = vpack.c.bf16 %v2240, %v2192
    %v2247 = vsel %vm357, %v2245, 0
    %v2250 = vsel %vm485, %v1792, 0
    %2252 = vmatprep.subr.bf16.mxu0 0
    %2253 = vmatpush1.bf16.msra.mxu0 %v2250
    %2254 = vmatprep.subr.bf16.mxu0 0
    %2255 = vmatpush1.bf16.msra.mxu0 0
    %2256 = vmatprep.subr.bf16.mxu0 0
    %2257 = vmatpush1.bf16.msra.mxu0 0
    %2258 = vmatprep.subr.bf16.mxu0 0
    %2259 = vmatpush1.bf16.msra.mxu0 0
    %2260 = vmatprep.subr.bf16.mxu0 0
    %2261 = vmatpush1.bf16.msra.mxu0 0
    %2262 = vmatprep.subr.bf16.mxu0 0
    %2263 = vmatpush1.bf16.msra.mxu0 0
    %2264 = vmatprep.subr.bf16.mxu0 0
    %2265 = vmatpush1.bf16.msra.mxu0 0
    %2266 = vmatprep.subr.bf16.mxu0 0
    %2267 = vmatpush1.bf16.msra.mxu0 0
    %2268 = vmatprep.subr.bf16.mxu0 0
    %2269 = vmatpush1.bf16.msra.mxu0 0
    %2270 = vmatprep.subr.bf16.mxu0 0
    %2271 = vmatpush1.bf16.msra.mxu0 0
    %2272 = vmatprep.subr.bf16.mxu0 0
    %2273 = vmatpush1.bf16.msra.mxu0 0
    %2274 = vmatprep.subr.bf16.mxu0 0
    %2275 = vmatpush1.bf16.msra.mxu0 0
    %2276 = vmatprep.subr.bf16.mxu0 0
    %2277 = vmatpush1.bf16.msra.mxu0 0
    %2278 = vmatprep.subr.bf16.mxu0 0
    %2279 = vmatpush1.bf16.msra.mxu0 0
    %2280 = vmatprep.subr.bf16.mxu0 0
    %2281 = vmatpush1.bf16.msra.mxu0 0
    %2282 = vmatprep.subr.bf16.mxu0 0
    %2283 = vmatpush1.bf16.msra.mxu0 0
    %2284 = vmatprep.mubr.bf16.mxu0 0
    %2285 = vmatmul.mubr.bf16.gmra.mrb[0].mxu0 %v2247
    %v2286 = vpop.f32.mrb[0].mxu0
    %v2287 = vadd.f32 0.0, %v2286
    %v2288 = vpop.f32.mrb[0].mxu0
    %v2289 = vpop.f32.mrb[0].mxu0
    %v2290 = vadd.f32 0.0, %v2289
    %v2291 = vpop.f32.mrb[0].mxu0
    %2292 = vdwg.mxu0
    %v2294 = vsel %vm357, %v2020, 0
    %v2297 = vsel %vm485, %v1791, 0
    %2299 = vmatprep.subr.bf16.mxu0 0
    %2300 = vmatpush1.bf16.msra.mxu0 %v2297
    %2301 = vmatprep.subr.bf16.mxu0 0
    %2302 = vmatpush1.bf16.msra.mxu0 0
    %2303 = vmatprep.subr.bf16.mxu0 0
    %2304 = vmatpush1.bf16.msra.mxu0 0
    %2305 = vmatprep.subr.bf16.mxu0 0
    %2306 = vmatpush1.bf16.msra.mxu0 0
    %2307 = vmatprep.subr.bf16.mxu0 0
    %2308 = vmatpush1.bf16.msra.mxu0 0
    %2309 = vmatprep.subr.bf16.mxu0 0
    %2310 = vmatpush1.bf16.msra.mxu0 0
    %2311 = vmatprep.subr.bf16.mxu0 0
    %2312 = vmatpush1.bf16.msra.mxu0 0
    %2313 = vmatprep.subr.bf16.mxu0 0
    %2314 = vmatpush1.bf16.msra.mxu0 0
    %2315 = vmatprep.subr.bf16.mxu0 0
    %2316 = vmatpush1.bf16.msra.mxu0 0
    %2317 = vmatprep.subr.bf16.mxu0 0
    %2318 = vmatpush1.bf16.msra.mxu0 0
    %2319 = vmatprep.subr.bf16.mxu0 0
    %2320 = vmatpush1.bf16.msra.mxu0 0
    %2321 = vmatprep.subr.bf16.mxu0 0
    %2322 = vmatpush1.bf16.msra.mxu0 0
    %2323 = vmatprep.subr.bf16.mxu0 0
    %2324 = vmatpush1.bf16.msra.mxu0 0
    %2325 = vmatprep.subr.bf16.mxu0 0
    %2326 = vmatpush1.bf16.msra.mxu0 0
    %2327 = vmatprep.subr.bf16.mxu0 0
    %2328 = vmatpush1.bf16.msra.mxu0 0
    %2329 = vmatprep.subr.bf16.mxu0 0
    %2330 = vmatpush1.bf16.msra.mxu0 0
    %2331 = vmatprep.mubr.bf16.mxu0 0
    %2332 = vmatmul.mubr.bf16.gmra.mrb[0].mxu0 %v2294
    %v2333 = vpop.f32.mrb[0].mxu0
    %v2334 = vadd.f32 %v2287, %v2333
    %v2335 = vpop.f32.mrb[0].mxu0
    %v2336 = vpop.f32.mrb[0].mxu0
    %v2337 = vadd.f32 %v2290, %v2336
    %v2338 = vpop.f32.mrb[0].mxu0
    %2339 = vdwg.mxu0
    %2340 = vrot.lane.b32.xlu0 %v1798, 112
    %v2341 = vpop.permute.xlu0 %2340
    %2342 = vrot.lane.b32.xlu0 %v1798, 80
    %v2343 = vpop.permute.xlu0 %2342
    %v2345 = vsel %vm357, %v2341, 0
    %v2348 = vsel %vm357, %v2343, 0
    %2350 = vmatprep.subr.bf16.mxu0 0
    %2351 = vmatpush1.bf16.xpose.msra.mxu0 %v2348
    %2352 = vmatprep.subr.bf16.mxu0 0
    %2353 = vmatpush1.bf16.xpose.msra.mxu0 0
    %2354 = vmatprep.subr.bf16.mxu0 0
    %2355 = vmatpush1.bf16.xpose.msra.mxu0 0
    %2356 = vmatprep.subr.bf16.mxu0 0
    %2357 = vmatpush1.bf16.xpose.msra.mxu0 0
    %2358 = vmatprep.subr.bf16.mxu0 0
    %2359 = vmatpush1.bf16.xpose.msra.mxu0 0
    %2360 = vmatprep.subr.bf16.mxu0 0
    %2361 = vmatpush1.bf16.xpose.msra.mxu0 0
    %2362 = vmatprep.subr.bf16.mxu0 0
    %2363 = vmatpush1.bf16.xpose.msra.mxu0 0
    %2364 = vmatprep.subr.bf16.mxu0 0
    %2365 = vmatpush1.bf16.xpose.msra.mxu0 0
    %2366 = vmatprep.subr.bf16.mxu0 0
    %2367 = vmatpush1.bf16.xpose.msra.mxu0 0
    %2368 = vmatprep.subr.bf16.mxu0 0
    %2369 = vmatpush1.bf16.xpose.msra.mxu0 0
    %2370 = vmatprep.subr.bf16.mxu0 0
    %2371 = vmatpush1.bf16.xpose.msra.mxu0 0
    %2372 = vmatprep.subr.bf16.mxu0 0
    %2373 = vmatpush1.bf16.xpose.msra.mxu0 0
    %2374 = vmatprep.subr.bf16.mxu0 0
    %2375 = vmatpush1.bf16.xpose.msra.mxu0 0
    %2376 = vmatprep.subr.bf16.mxu0 0
    %2377 = vmatpush1.bf16.xpose.msra.mxu0 0
    %2378 = vmatprep.subr.bf16.mxu0 0
    %2379 = vmatpush1.bf16.xpose.msra.mxu0 0
    %2380 = vmatprep.subr.bf16.mxu0 0
    %2381 = vmatpush1.bf16.xpose.msra.mxu0 0
    %2382 = vmatprep.mubr.bf16.mxu0 0
    %2383 = vmatmul.mubr.bf16.gmra.mrb[0].mxu0 %v2345
    %v2384 = vpop.f32.mrb[0].mxu0
    %v2385 = vadd.f32 0.0, %v2384
    %v2386 = vpop.f32.mrb[0].mxu0
    %v2387 = vpop.f32.mrb[0].mxu0
    %v2388 = vpop.f32.mrb[0].mxu0
    %2389 = vdwg.mxu0
    %2390 = vrot.lane.b32.xlu0 %v1799, 112
    %v2391 = vpop.permute.xlu0 %2390
    %2392 = vrot.lane.b32.xlu0 %v1799, 80
    %v2393 = vpop.permute.xlu0 %2392
    %v2395 = vsel %vm357, %v2391, 0
    %v2398 = vsel %vm357, %v2393, 0
    %2400 = vmatprep.subr.bf16.mxu0 0
    %2401 = vmatpush1.bf16.xpose.msra.mxu0 %v2398
    %2402 = vmatprep.subr.bf16.mxu0 0
    %2403 = vmatpush1.bf16.xpose.msra.mxu0 0
    %2404 = vmatprep.subr.bf16.mxu0 0
    %2405 = vmatpush1.bf16.xpose.msra.mxu0 0
    %2406 = vmatprep.subr.bf16.mxu0 0
    %2407 = vmatpush1.bf16.xpose.msra.mxu0 0
    %2408 = vmatprep.subr.bf16.mxu0 0
    %2409 = vmatpush1.bf16.xpose.msra.mxu0 0
    %2410 = vmatprep.subr.bf16.mxu0 0
    %2411 = vmatpush1.bf16.xpose.msra.mxu0 0
    %2412 = vmatprep.subr.bf16.mxu0 0
    %2413 = vmatpush1.bf16.xpose.msra.mxu0 0
    %2414 = vmatprep.subr.bf16.mxu0 0
    %2415 = vmatpush1.bf16.xpose.msra.mxu0 0
    %2416 = vmatprep.subr.bf16.mxu0 0
    %2417 = vmatpush1.bf16.xpose.msra.mxu0 0
    %2418 = vmatprep.subr.bf16.mxu0 0
    %2419 = vmatpush1.bf16.xpose.msra.mxu0 0
    %2420 = vmatprep.subr.bf16.mxu0 0
    %2421 = vmatpush1.bf16.xpose.msra.mxu0 0
    %2422 = vmatprep.subr.bf16.mxu0 0
    %2423 = vmatpush1.bf16.xpose.msra.mxu0 0
    %2424 = vmatprep.subr.bf16.mxu0 0
    %2425 = vmatpush1.bf16.xpose.msra.mxu0 0
    %2426 = vmatprep.subr.bf16.mxu0 0
    %2427 = vmatpush1.bf16.xpose.msra.mxu0 0
    %2428 = vmatprep.subr.bf16.mxu0 0
    %2429 = vmatpush1.bf16.xpose.msra.mxu0 0
    %2430 = vmatprep.subr.bf16.mxu0 0
    %2431 = vmatpush1.bf16.xpose.msra.mxu0 0
    %2432 = vmatprep.mubr.bf16.mxu0 0
    %2433 = vmatmul.mubr.bf16.gmra.mrb[0].mxu0 %v2395
    %v2434 = vpop.f32.mrb[0].mxu0
    %v2435 = vadd.f32 0.0, %v2434
    %v2436 = vpop.f32.mrb[0].mxu0
    %v2437 = vpop.f32.mrb[0].mxu0
    %v2438 = vpop.f32.mrb[0].mxu0
    %2439 = vdwg.mxu0
    %v2440 = vmul.f32 %v2385, 0.17677669
    %v2441 = vmul.f32 %v2435, 0.17677669
    %v2442 = vadd.f32 %v2440, %v237
    %v2443 = vadd.f32 %v2441, %v237
    %v2444 = vsel %vm357, %v2442, -inf
    %2445 = vmax.xlane.f32.xlu0 %v2444
    %v2446 = vpop.xlane.xlu0 %2445
    %v2447 = vsel %vm357, %v2443, -inf
    %2448 = vmax.xlane.f32.xlu0 %v2447
    %v2449 = vpop.xlane.xlu0 %2448
    %v2450 = vsub.f32 %v2442, %v2446
    %v2451 = vsub.f32 %v2443, %v2449
    %v2452 = vmul.f32 %v2450, 1.442695
    %v2453 = vpow.pop %v2452
    %v2454 = vmul.f32 %v2451, 1.442695
    %v2455 = vpow.pop %v2454
    %v2456 = vsel %vm357, %v2453, 0.0
    %2457 = vadd.xlane.f32.xlu0 %v2456
    %v2458 = vpop.xlane.xlu0 %2457
    %v2459 = vsel %vm357, %v2455, 0.0
    %2460 = vadd.xlane.f32.xlu0 %v2459
    %v2461 = vpop.xlane.xlu0 %2460
    %v2462 = vrcp.pop %v2458
    %v2463 = vrcp.pop %v2461
    %v2464 = vmul.f32 %v2453, %v2462
    %v2465 = vmul.f32 %v2455, %v2463
    %v2466 = vpack.c.bf16 %v2464, %v2464
    %v2467 = vpack.c.bf16 %v2465, %v2465
    %2468 = vrot.lane.b32.xlu0 %v1798, 48
    %v2469 = vpop.permute.xlu0 %2468
    %v2471 = vsel %vm357, %v2466, 0
    %v2474 = vsel %vm485, %v2469, 0
    %2476 = vmatprep.subr.bf16.mxu0 0
    %2477 = vmatpush1.bf16.msra.mxu0 %v2474
    %2478 = vmatprep.subr.bf16.mxu0 0
    %2479 = vmatpush1.bf16.msra.mxu0 0
    %2480 = vmatprep.subr.bf16.mxu0 0
    %2481 = vmatpush1.bf16.msra.mxu0 0
    %2482 = vmatprep.subr.bf16.mxu0 0
    %2483 = vmatpush1.bf16.msra.mxu0 0
    %2484 = vmatprep.subr.bf16.mxu0 0
    %2485 = vmatpush1.bf16.msra.mxu0 0
    %2486 = vmatprep.subr.bf16.mxu0 0
    %2487 = vmatpush1.bf16.msra.mxu0 0
    %2488 = vmatprep.subr.bf16.mxu0 0
    %2489 = vmatpush1.bf16.msra.mxu0 0
    %2490 = vmatprep.subr.bf16.mxu0 0
    %2491 = vmatpush1.bf16.msra.mxu0 0
    %2492 = vmatprep.subr.bf16.mxu0 0
    %2493 = vmatpush1.bf16.msra.mxu0 0
    %2494 = vmatprep.subr.bf16.mxu0 0
    %2495 = vmatpush1.bf16.msra.mxu0 0
    %2496 = vmatprep.subr.bf16.mxu0 0
    %2497 = vmatpush1.bf16.msra.mxu0 0
    %2498 = vmatprep.subr.bf16.mxu0 0
    %2499 = vmatpush1.bf16.msra.mxu0 0
    %2500 = vmatprep.subr.bf16.mxu0 0
    %2501 = vmatpush1.bf16.msra.mxu0 0
    %2502 = vmatprep.subr.bf16.mxu0 0
    %2503 = vmatpush1.bf16.msra.mxu0 0
    %2504 = vmatprep.subr.bf16.mxu0 0
    %2505 = vmatpush1.bf16.msra.mxu0 0
    %2506 = vmatprep.subr.bf16.mxu0 0
    %2507 = vmatpush1.bf16.msra.mxu0 0
    %2508 = vmatprep.mubr.bf16.mxu0 0
    %2509 = vmatmul.mubr.bf16.gmra.mrb[0].mxu0 %v2471
    %v2510 = vpop.f32.mrb[0].mxu0
    %v2511 = vadd.f32 0.0, %v2510
    %v2512 = vpop.f32.mrb[0].mxu0
    %v2513 = vpop.f32.mrb[0].mxu0
    %v2514 = vpop.f32.mrb[0].mxu0
    %2515 = vdwg.mxu0
    %2516 = vrot.lane.b32.xlu0 %v1799, 48
    %v2517 = vpop.permute.xlu0 %2516
    %v2519 = vsel %vm357, %v2467, 0
    %v2522 = vsel %vm485, %v2517, 0
    %2524 = vmatprep.subr.bf16.mxu0 0
    %2525 = vmatpush1.bf16.msra.mxu0 %v2522
    %2526 = vmatprep.subr.bf16.mxu0 0
    %2527 = vmatpush1.bf16.msra.mxu0 0
    %2528 = vmatprep.subr.bf16.mxu0 0
    %2529 = vmatpush1.bf16.msra.mxu0 0
    %2530 = vmatprep.subr.bf16.mxu0 0
    %2531 = vmatpush1.bf16.msra.mxu0 0
    %2532 = vmatprep.subr.bf16.mxu0 0
    %2533 = vmatpush1.bf16.msra.mxu0 0
    %2534 = vmatprep.subr.bf16.mxu0 0
    %2535 = vmatpush1.bf16.msra.mxu0 0
    %2536 = vmatprep.subr.bf16.mxu0 0
    %2537 = vmatpush1.bf16.msra.mxu0 0
    %2538 = vmatprep.subr.bf16.mxu0 0
    %2539 = vmatpush1.bf16.msra.mxu0 0
    %2540 = vmatprep.subr.bf16.mxu0 0
    %2541 = vmatpush1.bf16.msra.mxu0 0
    %2542 = vmatprep.subr.bf16.mxu0 0
    %2543 = vmatpush1.bf16.msra.mxu0 0
    %2544 = vmatprep.subr.bf16.mxu0 0
    %2545 = vmatpush1.bf16.msra.mxu0 0
    %2546 = vmatprep.subr.bf16.mxu0 0
    %2547 = vmatpush1.bf16.msra.mxu0 0
    %2548 = vmatprep.subr.bf16.mxu0 0
    %2549 = vmatpush1.bf16.msra.mxu0 0
    %2550 = vmatprep.subr.bf16.mxu0 0
    %2551 = vmatpush1.bf16.msra.mxu0 0
    %2552 = vmatprep.subr.bf16.mxu0 0
    %2553 = vmatpush1.bf16.msra.mxu0 0
    %2554 = vmatprep.subr.bf16.mxu0 0
    %2555 = vmatpush1.bf16.msra.mxu0 0
    %2556 = vmatprep.mubr.bf16.mxu0 0
    %2557 = vmatmul.mubr.bf16.gmra.mrb[0].mxu0 %v2519
    %v2558 = vpop.f32.mrb[0].mxu0
    %v2559 = vadd.f32 0.0, %v2558
    %v2560 = vpop.f32.mrb[0].mxu0
    %v2561 = vpop.f32.mrb[0].mxu0
    %v2562 = vpop.f32.mrb[0].mxu0
    %2563 = vdwg.mxu0
    %v2564 = vpack.c.bf16 %v2559, %v2511
    %v2566 = vsel %vm357, %v2564, 0
    %v2569 = vsel %vm485, %v1793, 0
    %2571 = vmatprep.subr.bf16.mxu0 0
    %2572 = vmatpush1.bf16.msra.mxu0 %v2569
    %2573 = vmatprep.subr.bf16.mxu0 0
    %2574 = vmatpush1.bf16.msra.mxu0 0
    %2575 = vmatprep.subr.bf16.mxu0 0
    %2576 = vmatpush1.bf16.msra.mxu0 0
    %2577 = vmatprep.subr.bf16.mxu0 0
    %2578 = vmatpush1.bf16.msra.mxu0 0
    %2579 = vmatprep.subr.bf16.mxu0 0
    %2580 = vmatpush1.bf16.msra.mxu0 0
    %2581 = vmatprep.subr.bf16.mxu0 0
    %2582 = vmatpush1.bf16.msra.mxu0 0
    %2583 = vmatprep.subr.bf16.mxu0 0
    %2584 = vmatpush1.bf16.msra.mxu0 0
    %2585 = vmatprep.subr.bf16.mxu0 0
    %2586 = vmatpush1.bf16.msra.mxu0 0
    %2587 = vmatprep.subr.bf16.mxu0 0
    %2588 = vmatpush1.bf16.msra.mxu0 0
    %2589 = vmatprep.subr.bf16.mxu0 0
    %2590 = vmatpush1.bf16.msra.mxu0 0
    %2591 = vmatprep.subr.bf16.mxu0 0
    %2592 = vmatpush1.bf16.msra.mxu0 0
    %2593 = vmatprep.subr.bf16.mxu0 0
    %2594 = vmatpush1.bf16.msra.mxu0 0
    %2595 = vmatprep.subr.bf16.mxu0 0
    %2596 = vmatpush1.bf16.msra.mxu0 0
    %2597 = vmatprep.subr.bf16.mxu0 0
    %2598 = vmatpush1.bf16.msra.mxu0 0
    %2599 = vmatprep.subr.bf16.mxu0 0
    %2600 = vmatpush1.bf16.msra.mxu0 0
    %2601 = vmatprep.subr.bf16.mxu0 0
    %2602 = vmatpush1.bf16.msra.mxu0 0
    %2603 = vmatprep.mubr.bf16.mxu0 0
    %2604 = vmatmul.mubr.bf16.gmra.mrb[0].mxu0 %v2566
    %v2605 = vpop.f32.mrb[0].mxu0
    %v2606 = vadd.f32 0.0, %v2605
    %v2607 = vpop.f32.mrb[0].mxu0
    %v2608 = vpop.f32.mrb[0].mxu0
    %v2609 = vadd.f32 0.0, %v2608
    %v2610 = vpop.f32.mrb[0].mxu0
    %2611 = vdwg.mxu0
    %v2612 = vadd.f32 %v2334, %v2606
    %v2613 = vadd.f32 %v2337, %v2609
    %2614 = vrot.lane.b32.xlu0 %v1798, 104
    %v2615 = vpop.permute.xlu0 %2614
    %2616 = vrot.lane.b32.xlu0 %v1798, 72
    %v2617 = vpop.permute.xlu0 %2616
    %v2619 = vsel %vm357, %v2615, 0
    %v2622 = vsel %vm357, %v2617, 0
    %2624 = vmatprep.subr.bf16.mxu0 0
    %2625 = vmatpush1.bf16.xpose.msra.mxu0 %v2622
    %2626 = vmatprep.subr.bf16.mxu0 0
    %2627 = vmatpush1.bf16.xpose.msra.mxu0 0
    %2628 = vmatprep.subr.bf16.mxu0 0
    %2629 = vmatpush1.bf16.xpose.msra.mxu0 0
    %2630 = vmatprep.subr.bf16.mxu0 0
    %2631 = vmatpush1.bf16.xpose.msra.mxu0 0
    %2632 = vmatprep.subr.bf16.mxu0 0
    %2633 = vmatpush1.bf16.xpose.msra.mxu0 0
    %2634 = vmatprep.subr.bf16.mxu0 0
    %2635 = vmatpush1.bf16.xpose.msra.mxu0 0
    %2636 = vmatprep.subr.bf16.mxu0 0
    %2637 = vmatpush1.bf16.xpose.msra.mxu0 0
    %2638 = vmatprep.subr.bf16.mxu0 0
    %2639 = vmatpush1.bf16.xpose.msra.mxu0 0
    %2640 = vmatprep.subr.bf16.mxu0 0
    %2641 = vmatpush1.bf16.xpose.msra.mxu0 0
    %2642 = vmatprep.subr.bf16.mxu0 0
    %2643 = vmatpush1.bf16.xpose.msra.mxu0 0
    %2644 = vmatprep.subr.bf16.mxu0 0
    %2645 = vmatpush1.bf16.xpose.msra.mxu0 0
    %2646 = vmatprep.subr.bf16.mxu0 0
    %2647 = vmatpush1.bf16.xpose.msra.mxu0 0
    %2648 = vmatprep.subr.bf16.mxu0 0
    %2649 = vmatpush1.bf16.xpose.msra.mxu0 0
    %2650 = vmatprep.subr.bf16.mxu0 0
    %2651 = vmatpush1.bf16.xpose.msra.mxu0 0
    %2652 = vmatprep.subr.bf16.mxu0 0
    %2653 = vmatpush1.bf16.xpose.msra.mxu0 0
    %2654 = vmatprep.subr.bf16.mxu0 0
    %2655 = vmatpush1.bf16.xpose.msra.mxu0 0
    %2656 = vmatprep.mubr.bf16.mxu0 0
    %2657 = vmatmul.mubr.bf16.gmra.mrb[0].mxu0 %v2619
    %v2658 = vpop.f32.mrb[0].mxu0
    %v2659 = vadd.f32 0.0, %v2658
    %v2660 = vpop.f32.mrb[0].mxu0
    %v2661 = vpop.f32.mrb[0].mxu0
    %v2662 = vpop.f32.mrb[0].mxu0
    %2663 = vdwg.mxu0
    %2664 = vrot.lane.b32.xlu0 %v1799, 104
    %v2665 = vpop.permute.xlu0 %2664
    %2666 = vrot.lane.b32.xlu0 %v1799, 72
    %v2667 = vpop.permute.xlu0 %2666
    %v2669 = vsel %vm357, %v2665, 0
    %v2672 = vsel %vm357, %v2667, 0
    %2674 = vmatprep.subr.bf16.mxu0 0
    %2675 = vmatpush1.bf16.xpose.msra.mxu0 %v2672
    %2676 = vmatprep.subr.bf16.mxu0 0
    %2677 = vmatpush1.bf16.xpose.msra.mxu0 0
    %2678 = vmatprep.subr.bf16.mxu0 0
    %2679 = vmatpush1.bf16.xpose.msra.mxu0 0
    %2680 = vmatprep.subr.bf16.mxu0 0
    %2681 = vmatpush1.bf16.xpose.msra.mxu0 0
    %2682 = vmatprep.subr.bf16.mxu0 0
    %2683 = vmatpush1.bf16.xpose.msra.mxu0 0
    %2684 = vmatprep.subr.bf16.mxu0 0
    %2685 = vmatpush1.bf16.xpose.msra.mxu0 0
    %2686 = vmatprep.subr.bf16.mxu0 0
    %2687 = vmatpush1.bf16.xpose.msra.mxu0 0
    %2688 = vmatprep.subr.bf16.mxu0 0
    %2689 = vmatpush1.bf16.xpose.msra.mxu0 0
    %2690 = vmatprep.subr.bf16.mxu0 0
    %2691 = vmatpush1.bf16.xpose.msra.mxu0 0
    %2692 = vmatprep.subr.bf16.mxu0 0
    %2693 = vmatpush1.bf16.xpose.msra.mxu0 0
    %2694 = vmatprep.subr.bf16.mxu0 0
    %2695 = vmatpush1.bf16.xpose.msra.mxu0 0
    %2696 = vmatprep.subr.bf16.mxu0 0
    %2697 = vmatpush1.bf16.xpose.msra.mxu0 0
    %2698 = vmatprep.subr.bf16.mxu0 0
    %2699 = vmatpush1.bf16.xpose.msra.mxu0 0
    %2700 = vmatprep.subr.bf16.mxu0 0
    %2701 = vmatpush1.bf16.xpose.msra.mxu0 0
    %2702 = vmatprep.subr.bf16.mxu0 0
    %2703 = vmatpush1.bf16.xpose.msra.mxu0 0
    %2704 = vmatprep.subr.bf16.mxu0 0
    %2705 = vmatpush1.bf16.xpose.msra.mxu0 0
    %2706 = vmatprep.mubr.bf16.mxu0 0
    %2707 = vmatmul.mubr.bf16.gmra.mrb[0].mxu0 %v2669
    %v2708 = vpop.f32.mrb[0].mxu0
    %v2709 = vadd.f32 0.0, %v2708
    %v2710 = vpop.f32.mrb[0].mxu0
    %v2711 = vpop.f32.mrb[0].mxu0
    %v2712 = vpop.f32.mrb[0].mxu0
    %2713 = vdwg.mxu0
    %v2714 = vmul.f32 %v2659, 0.17677669
    %v2715 = vmul.f32 %v2709, 0.17677669
    %v2716 = vadd.f32 %v2714, %v237
    %v2717 = vadd.f32 %v2715, %v237
    %v2718 = vsel %vm357, %v2716, -inf
    %2719 = vmax.xlane.f32.xlu0 %v2718
    %v2720 = vpop.xlane.xlu0 %2719
    %v2721 = vsel %vm357, %v2717, -inf
    %2722 = vmax.xlane.f32.xlu0 %v2721
    %v2723 = vpop.xlane.xlu0 %2722
    %v2724 = vsub.f32 %v2716, %v2720
    %v2725 = vsub.f32 %v2717, %v2723
    %v2726 = vmul.f32 %v2724, 1.442695
    %v2727 = vpow.pop %v2726
    %v2728 = vmul.f32 %v2725, 1.442695
    %v2729 = vpow.pop %v2728
    %v2730 = vsel %vm357, %v2727, 0.0
    %2731 = vadd.xlane.f32.xlu0 %v2730
    %v2732 = vpop.xlane.xlu0 %2731
    %v2733 = vsel %vm357, %v2729, 0.0
    %2734 = vadd.xlane.f32.xlu0 %v2733
    %v2735 = vpop.xlane.xlu0 %2734
    %v2736 = vrcp.pop %v2732
    %v2737 = vrcp.pop %v2735
    %v2738 = vmul.f32 %v2727, %v2736
    %v2739 = vmul.f32 %v2729, %v2737
    %v2740 = vpack.c.bf16 %v2738, %v2738
    %v2741 = vpack.c.bf16 %v2739, %v2739
    %2742 = vrot.lane.b32.xlu0 %v1798, 40
    %v2743 = vpop.permute.xlu0 %2742
    %v2745 = vsel %vm357, %v2740, 0
    %v2748 = vsel %vm485, %v2743, 0
    %2750 = vmatprep.subr.bf16.mxu0 0
    %2751 = vmatpush1.bf16.msra.mxu0 %v2748
    %2752 = vmatprep.subr.bf16.mxu0 0
    %2753 = vmatpush1.bf16.msra.mxu0 0
    %2754 = vmatprep.subr.bf16.mxu0 0
    %2755 = vmatpush1.bf16.msra.mxu0 0
    %2756 = vmatprep.subr.bf16.mxu0 0
    %2757 = vmatpush1.bf16.msra.mxu0 0
    %2758 = vmatprep.subr.bf16.mxu0 0
    %2759 = vmatpush1.bf16.msra.mxu0 0
    %2760 = vmatprep.subr.bf16.mxu0 0
    %2761 = vmatpush1.bf16.msra.mxu0 0
    %2762 = vmatprep.subr.bf16.mxu0 0
    %2763 = vmatpush1.bf16.msra.mxu0 0
    %2764 = vmatprep.subr.bf16.mxu0 0
    %2765 = vmatpush1.bf16.msra.mxu0 0
    %2766 = vmatprep.subr.bf16.mxu0 0
    %2767 = vmatpush1.bf16.msra.mxu0 0
    %2768 = vmatprep.subr.bf16.mxu0 0
    %2769 = vmatpush1.bf16.msra.mxu0 0
    %2770 = vmatprep.subr.bf16.mxu0 0
    %2771 = vmatpush1.bf16.msra.mxu0 0
    %2772 = vmatprep.subr.bf16.mxu0 0
    %2773 = vmatpush1.bf16.msra.mxu0 0
    %2774 = vmatprep.subr.bf16.mxu0 0
    %2775 = vmatpush1.bf16.msra.mxu0 0
    %2776 = vmatprep.subr.bf16.mxu0 0
    %2777 = vmatpush1.bf16.msra.mxu0 0
    %2778 = vmatprep.subr.bf16.mxu0 0
    %2779 = vmatpush1.bf16.msra.mxu0 0
    %2780 = vmatprep.subr.bf16.mxu0 0
    %2781 = vmatpush1.bf16.msra.mxu0 0
    %2782 = vmatprep.mubr.bf16.mxu0 0
    %2783 = vmatmul.mubr.bf16.gmra.mrb[0].mxu0 %v2745
    %v2784 = vpop.f32.mrb[0].mxu0
    %v2785 = vadd.f32 0.0, %v2784
    %v2786 = vpop.f32.mrb[0].mxu0
    %v2787 = vpop.f32.mrb[0].mxu0
    %v2788 = vpop.f32.mrb[0].mxu0
    %2789 = vdwg.mxu0
    %2790 = vrot.lane.b32.xlu0 %v1799, 40
    %v2791 = vpop.permute.xlu0 %2790
    %v2793 = vsel %vm357, %v2741, 0
    %v2796 = vsel %vm485, %v2791, 0
    %2798 = vmatprep.subr.bf16.mxu0 0
    %2799 = vmatpush1.bf16.msra.mxu0 %v2796
    %2800 = vmatprep.subr.bf16.mxu0 0
    %2801 = vmatpush1.bf16.msra.mxu0 0
    %2802 = vmatprep.subr.bf16.mxu0 0
    %2803 = vmatpush1.bf16.msra.mxu0 0
    %2804 = vmatprep.subr.bf16.mxu0 0
    %2805 = vmatpush1.bf16.msra.mxu0 0
    %2806 = vmatprep.subr.bf16.mxu0 0
    %2807 = vmatpush1.bf16.msra.mxu0 0
    %2808 = vmatprep.subr.bf16.mxu0 0
    %2809 = vmatpush1.bf16.msra.mxu0 0
    %2810 = vmatprep.subr.bf16.mxu0 0
    %2811 = vmatpush1.bf16.msra.mxu0 0
    %2812 = vmatprep.subr.bf16.mxu0 0
    %2813 = vmatpush1.bf16.msra.mxu0 0
    %2814 = vmatprep.subr.bf16.mxu0 0
    %2815 = vmatpush1.bf16.msra.mxu0 0
    %2816 = vmatprep.subr.bf16.mxu0 0
    %2817 = vmatpush1.bf16.msra.mxu0 0
    %2818 = vmatprep.subr.bf16.mxu0 0
    %2819 = vmatpush1.bf16.msra.mxu0 0
    %2820 = vmatprep.subr.bf16.mxu0 0
    %2821 = vmatpush1.bf16.msra.mxu0 0
    %2822 = vmatprep.subr.bf16.mxu0 0
    %2823 = vmatpush1.bf16.msra.mxu0 0
    %2824 = vmatprep.subr.bf16.mxu0 0
    %2825 = vmatpush1.bf16.msra.mxu0 0
    %2826 = vmatprep.subr.bf16.mxu0 0
    %2827 = vmatpush1.bf16.msra.mxu0 0
    %2828 = vmatprep.subr.bf16.mxu0 0
    %2829 = vmatpush1.bf16.msra.mxu0 0
    %2830 = vmatprep.mubr.bf16.mxu0 0
    %2831 = vmatmul.mubr.bf16.gmra.mrb[0].mxu0 %v2793
    %v2832 = vpop.f32.mrb[0].mxu0
    %v2833 = vadd.f32 0.0, %v2832
    %v2834 = vpop.f32.mrb[0].mxu0
    %v2835 = vpop.f32.mrb[0].mxu0
    %v2836 = vpop.f32.mrb[0].mxu0
    %2837 = vdwg.mxu0
    %v2838 = vpack.c.bf16 %v2833, %v2785
    %v2840 = vsel %vm357, %v2838, 0
    %v2843 = vsel %vm485, %v1794, 0
    %2845 = vmatprep.subr.bf16.mxu0 0
    %2846 = vmatpush1.bf16.msra.mxu0 %v2843
    %2847 = vmatprep.subr.bf16.mxu0 0
    %2848 = vmatpush1.bf16.msra.mxu0 0
    %2849 = vmatprep.subr.bf16.mxu0 0
    %2850 = vmatpush1.bf16.msra.mxu0 0
    %2851 = vmatprep.subr.bf16.mxu0 0
    %2852 = vmatpush1.bf16.msra.mxu0 0
    %2853 = vmatprep.subr.bf16.mxu0 0
    %2854 = vmatpush1.bf16.msra.mxu0 0
    %2855 = vmatprep.subr.bf16.mxu0 0
    %2856 = vmatpush1.bf16.msra.mxu0 0
    %2857 = vmatprep.subr.bf16.mxu0 0
    %2858 = vmatpush1.bf16.msra.mxu0 0
    %2859 = vmatprep.subr.bf16.mxu0 0
    %2860 = vmatpush1.bf16.msra.mxu0 0
    %2861 = vmatprep.subr.bf16.mxu0 0
    %2862 = vmatpush1.bf16.msra.mxu0 0
    %2863 = vmatprep.subr.bf16.mxu0 0
    %2864 = vmatpush1.bf16.msra.mxu0 0
    %2865 = vmatprep.subr.bf16.mxu0 0
    %2866 = vmatpush1.bf16.msra.mxu0 0
    %2867 = vmatprep.subr.bf16.mxu0 0
    %2868 = vmatpush1.bf16.msra.mxu0 0
    %2869 = vmatprep.subr.bf16.mxu0 0
    %2870 = vmatpush1.bf16.msra.mxu0 0
    %2871 = vmatprep.subr.bf16.mxu0 0
    %2872 = vmatpush1.bf16.msra.mxu0 0
    %2873 = vmatprep.subr.bf16.mxu0 0
    %2874 = vmatpush1.bf16.msra.mxu0 0
    %2875 = vmatprep.subr.bf16.mxu0 0
    %2876 = vmatpush1.bf16.msra.mxu0 0
    %2877 = vmatprep.mubr.bf16.mxu0 0
    %2878 = vmatmul.mubr.bf16.gmra.mrb[0].mxu0 %v2840
    %v2879 = vpop.f32.mrb[0].mxu0
    %v2880 = vadd.f32 0.0, %v2879
    %v2881 = vpop.f32.mrb[0].mxu0
    %v2882 = vpop.f32.mrb[0].mxu0
    %v2883 = vadd.f32 0.0, %v2882
    %v2884 = vpop.f32.mrb[0].mxu0
    %2885 = vdwg.mxu0
    %v2886 = vadd.f32 %v2612, %v2880
    %v2887 = vadd.f32 %v2613, %v2883
    %v2888 = vadd.f32 %v1683, %v2886
    %v2889 = vadd.f32 %v1684, %v2887
    %v2890 = vld [vmem:[%s37] sm:$0x1]
    %v2892 = vlaneseq
    %v2893 = vshrl.u32 %v2892, 7
    %v2894 = vsub.s32 0, %v2893
    %v2895 = vrot.slane %v2890, %v2894
    %v2897 = vadd.f32 %v2888, %v2895
    %v2898 = vadd.f32 %v2889, %v2895
    %v2899 = vld [vmem:[%s39] sm:$0x1]
    %v2900 = vld [vmem:[%s41] sm:$0x1]
    %v2901 = vsel %vm240, %v2897, 0.0
    %2902 = vadd.xlane.f32.xlu0 %v2901
    %v2903 = vpop.xlane.xlu0 %2902
    %v2904 = vsel %vm240, %v2898, 0.0
    %2905 = vadd.xlane.f32.xlu0 %v2904
    %v2906 = vpop.xlane.xlu0 %2905
    %v2907 = vmul.f32 %v2903, %v247
    %v2908 = vmul.f32 %v2906, %v247
    %v2909 = vsub.f32 %v2897, %v2907
    %v2910 = vsub.f32 %v2898, %v2908
    %v2911 = vmul.f32 %v2909, %v2909
    %v2912 = vmul.f32 %v2910, %v2910
    %v2913 = vsel %vm240, %v2911, 0.0
    %2914 = vadd.xlane.f32.xlu0 %v2913
    %v2915 = vpop.xlane.xlu0 %2914
    %v2916 = vsel %vm240, %v2912, 0.0
    %2917 = vadd.xlane.f32.xlu0 %v2916
    %v2918 = vpop.xlane.xlu0 %2917
    %v2919 = vmul.f32 %v2915, %v247
    %v2920 = vmul.f32 %v2918, %v247
    %v2921 = vadd.f32 %v2919, 1e-05
    %v2922 = vadd.f32 %v2920, 1e-05
    %v2923 = vrsqrt.pop %v2921
    %v2924 = vrsqrt.pop %v2922
    %v2925 = vmul.f32 %v2909, %v2923
    %v2926 = vmul.f32 %v2910, %v2924
    %v2928 = vlaneseq
    %v2929 = vshrl.u32 %v2928, 7
    %v2930 = vsub.s32 0, %v2929
    %v2931 = vrot.slane %v2899, %v2930
    %v2933 = vmul.f32 %v2925, %v2931
    %v2934 = vmul.f32 %v2926, %v2931
    %v2936 = vlaneseq
    %v2937 = vshrl.u32 %v2936, 7
    %v2938 = vsub.s32 0, %v2937
    %v2939 = vrot.slane %v2900, %v2938
    %v2941 = vadd.f32 %v2933, %v2939
    %v2942 = vadd.f32 %v2934, %v2939
    %v2943 = vpack.c.bf16 %v2942, %v2941
    %v2944 = vld [vmem:[%s43] sm:$0xf]
    %v2945 = vld [vmem:[%s43 + $0x4] sm:$0xf]
    %v2946 = vld [vmem:[%s43 + $0x8] sm:$0xf]
    %v2947 = vld [vmem:[%s43 + $0xc] sm:$0xf]
    %v2948 = vld [vmem:[%s45] sm:$0x1]
    %v2950 = vlaneseq
    %v2951 = vshrl.u32 %v2950, 7
    %v2952 = vsub.s32 0, %v2951
    %v2953 = vrot.slane %v2948, %v2952
    %v2959 = vunpack.c.l.b16 %v2944
    %v2960 = vunpack.c.l.b16 %v2945
    %v2961 = vunpack.c.l.b16 %v2946
    %v2962 = vunpack.c.l.b16 %v2947
    %v2963 = vpack.c.b16 %v2960, %v2959
    %v2964 = vpack.c.b16 %v2962, %v2961
    %v2968 = vsel %vm240, %v2943, 0
    %2970 = vmatprep.subr.bf16.mxu0 0
    %2971 = vmatpush1.bf16.msra.mxu0 %v2963
    %2972 = vmatprep.subr.bf16.mxu0 0
    %2973 = vmatpush1.bf16.msra.mxu0 %v2964
    %2974 = vmatprep.subr.bf16.mxu0 0
    %2975 = vmatpush1.bf16.msra.mxu0 0
    %2976 = vmatprep.subr.bf16.mxu0 0
    %2977 = vmatpush1.bf16.msra.mxu0 0
    %2978 = vmatprep.subr.bf16.mxu0 0
    %2979 = vmatpush1.bf16.msra.mxu0 0
    %2980 = vmatprep.subr.bf16.mxu0 0
    %2981 = vmatpush1.bf16.msra.mxu0 0
    %2982 = vmatprep.subr.bf16.mxu0 0
    %2983 = vmatpush1.bf16.msra.mxu0 0
    %2984 = vmatprep.subr.bf16.mxu0 0
    %2985 = vmatpush1.bf16.msra.mxu0 0
    %2986 = vmatprep.subr.bf16.mxu0 0
    %2987 = vmatpush1.bf16.msra.mxu0 0
    %2988 = vmatprep.subr.bf16.mxu0 0
    %2989 = vmatpush1.bf16.msra.mxu0 0
    %2990 = vmatprep.subr.bf16.mxu0 0
    %2991 = vmatpush1.bf16.msra.mxu0 0
    %2992 = vmatprep.subr.bf16.mxu0 0
    %2993 = vmatpush1.bf16.msra.mxu0 0
    %2994 = vmatprep.subr.bf16.mxu0 0
    %2995 = vmatpush1.bf16.msra.mxu0 0
    %2996 = vmatprep.subr.bf16.mxu0 0
    %2997 = vmatpush1.bf16.msra.mxu0 0
    %2998 = vmatprep.subr.bf16.mxu0 0
    %2999 = vmatpush1.bf16.msra.mxu0 0
    %3000 = vmatprep.subr.bf16.mxu0 0
    %3001 = vmatpush1.bf16.msra.mxu0 0
    %3002 = vmatprep.mubr.bf16.mxu0 0
    %3003 = vmatmul.mubr.bf16.gmra.mrb[0].mxu0 %v2968
    %v3004 = vpop.f32.mrb[0].mxu0
    %v3005 = vadd.f32 %v2953, %v3004
    %v3006 = vpop.f32.mrb[0].mxu0
    %v3007 = vpop.f32.mrb[0].mxu0
    %v3008 = vadd.f32 %v2953, %v3007
    %v3009 = vpop.f32.mrb[0].mxu0
    %3010 = vdwg.mxu0
    %v3011 = vmax.f32 %v3005, 0.0
    %v3012 = vmax.f32 %v3008, 0.0
    %v3013 = vpack.c.bf16 %v3012, %v3011
    %v3014 = vld [vmem:[%s47] sm:$0xf]
    %v3015 = vld [vmem:[%s47 + $0x4] sm:$0xf]
    %v3016 = vld [vmem:[%s47 + $0x8] sm:$0xf]
    %v3017 = vld [vmem:[%s47 + $0xc] sm:$0xf]
    %v3018 = vld [vmem:[%s47 + $0x10] sm:$0xf]
    %v3019 = vld [vmem:[%s47 + $0x14] sm:$0xf]
    %v3020 = vld [vmem:[%s47 + $0x18] sm:$0xf]
    %v3021 = vld [vmem:[%s47 + $0x1c] sm:$0xf]
    %v3022 = vld [vmem:[%s47 + $0x20] sm:$0xf]
    %v3023 = vld [vmem:[%s47 + $0x24] sm:$0xf]
    %v3024 = vld [vmem:[%s47 + $0x28] sm:$0xf]
    %v3025 = vld [vmem:[%s47 + $0x2c] sm:$0xf]
    %v3026 = vld [vmem:[%s47 + $0x30] sm:$0xf]
    %v3027 = vld [vmem:[%s47 + $0x34] sm:$0xf]
    %v3028 = vld [vmem:[%s47 + $0x38] sm:$0xf]
    %v3029 = vld [vmem:[%s47 + $0x3c] sm:$0xf]
    %v3030 = vld [vmem:[%s49] sm:$0x1]
    %v3032 = vlaneseq
    %v3033 = vshrl.u32 %v3032, 7
    %v3034 = vsub.s32 0, %v3033
    %v3035 = vrot.slane %v3030, %v3034
    %v3053 = vunpack.c.l.b16 %v3014
    %v3054 = vunpack.c.l.b16 %v3015
    %v3055 = vunpack.c.l.b16 %v3016
    %v3056 = vunpack.c.l.b16 %v3017
    %v3057 = vunpack.c.l.b16 %v3018
    %v3058 = vunpack.c.l.b16 %v3019
    %v3059 = vunpack.c.l.b16 %v3020
    %v3060 = vunpack.c.l.b16 %v3021
    %v3061 = vunpack.c.l.b16 %v3022
    %v3062 = vunpack.c.l.b16 %v3023
    %v3063 = vunpack.c.l.b16 %v3024
    %v3064 = vunpack.c.l.b16 %v3025
    %v3065 = vunpack.c.l.b16 %v3026
    %v3066 = vunpack.c.l.b16 %v3027
    %v3067 = vunpack.c.l.b16 %v3028
    %v3068 = vunpack.c.l.b16 %v3029
    %v3069 = vpack.c.b16 %v3054, %v3053
    %v3070 = vpack.c.b16 %v3056, %v3055
    %v3071 = vpack.c.b16 %v3058, %v3057
    %v3072 = vpack.c.b16 %v3060, %v3059
    %v3073 = vpack.c.b16 %v3062, %v3061
    %v3074 = vpack.c.b16 %v3064, %v3063
    %v3075 = vpack.c.b16 %v3066, %v3065
    %v3076 = vpack.c.b16 %v3068, %v3067
    %3085 = vmatprep.subr.bf16.mxu0 0
    %3086 = vmatpush1.bf16.msra.mxu0 %v3069
    %3087 = vmatprep.subr.bf16.mxu0 0
    %3088 = vmatpush1.bf16.msra.mxu0 %v3070
    %3089 = vmatprep.subr.bf16.mxu0 0
    %3090 = vmatpush1.bf16.msra.mxu0 %v3071
    %3091 = vmatprep.subr.bf16.mxu0 0
    %3092 = vmatpush1.bf16.msra.mxu0 %v3072
    %3093 = vmatprep.subr.bf16.mxu0 0
    %3094 = vmatpush1.bf16.msra.mxu0 %v3073
    %3095 = vmatprep.subr.bf16.mxu0 0
    %3096 = vmatpush1.bf16.msra.mxu0 %v3074
    %3097 = vmatprep.subr.bf16.mxu0 0
    %3098 = vmatpush1.bf16.msra.mxu0 %v3075
    %3099 = vmatprep.subr.bf16.mxu0 0
    %3100 = vmatpush1.bf16.msra.mxu0 %v3076
    %3101 = vmatprep.subr.bf16.mxu0 0
    %3102 = vmatpush1.bf16.msra.mxu0 0
    %3103 = vmatprep.subr.bf16.mxu0 0
    %3104 = vmatpush1.bf16.msra.mxu0 0
    %3105 = vmatprep.subr.bf16.mxu0 0
    %3106 = vmatpush1.bf16.msra.mxu0 0
    %3107 = vmatprep.subr.bf16.mxu0 0
    %3108 = vmatpush1.bf16.msra.mxu0 0
    %3109 = vmatprep.subr.bf16.mxu0 0
    %3110 = vmatpush1.bf16.msra.mxu0 0
    %3111 = vmatprep.subr.bf16.mxu0 0
    %3112 = vmatpush1.bf16.msra.mxu0 0
    %3113 = vmatprep.subr.bf16.mxu0 0
    %3114 = vmatpush1.bf16.msra.mxu0 0
    %3115 = vmatprep.subr.bf16.mxu0 0
    %3116 = vmatpush1.bf16.msra.mxu0 0
    %3117 = vmatprep.mubr.bf16.mxu0 0
    %3118 = vmatmul.mubr.bf16.gmra.mrb[0].mxu0 %v3013
    %v3119 = vpop.f32.mrb[0].mxu0
    %v3120 = vadd.f32 %v3035, %v3119
    %v3121 = vpop.f32.mrb[0].mxu0
    %v3122 = vpop.f32.mrb[0].mxu0
    %v3123 = vadd.f32 %v3035, %v3122
    %v3124 = vpop.f32.mrb[0].mxu0
    %3125 = vdwg.mxu0
    %v3126 = vadd.f32 %v2897, %v3120
    %v3127 = vadd.f32 %v2898, %v3123
    %v3128 = vld [vmem:[%s51] sm:$0x1]
    %v3129 = vld [vmem:[%s53] sm:$0x1]
    %v3130 = vsel %vm240, %v3126, 0.0
    %3131 = vadd.xlane.f32.xlu0 %v3130
    %v3132 = vpop.xlane.xlu0 %3131
    %v3133 = vsel %vm240, %v3127, 0.0
    %3134 = vadd.xlane.f32.xlu0 %v3133
    %v3135 = vpop.xlane.xlu0 %3134
    %v3136 = vmul.f32 %v3132, %v247
    %v3137 = vmul.f32 %v3135, %v247
    %v3138 = vsub.f32 %v3126, %v3136
    %v3139 = vsub.f32 %v3127, %v3137
    %v3140 = vmul.f32 %v3138, %v3138
    %v3141 = vmul.f32 %v3139, %v3139
    %v3142 = vsel %vm240, %v3140, 0.0
    %3143 = vadd.xlane.f32.xlu0 %v3142
    %v3144 = vpop.xlane.xlu0 %3143
    %v3145 = vsel %vm240, %v3141, 0.0
    %3146 = vadd.xlane.f32.xlu0 %v3145
    %v3147 = vpop.xlane.xlu0 %3146
    %v3148 = vmul.f32 %v3144, %v247
    %v3149 = vmul.f32 %v3147, %v247
    %v3150 = vadd.f32 %v3148, 1e-05
    %v3151 = vadd.f32 %v3149, 1e-05
    %v3152 = vrsqrt.pop %v3150
    %v3153 = vrsqrt.pop %v3151
    %v3154 = vmul.f32 %v3138, %v3152
    %v3155 = vmul.f32 %v3139, %v3153
    %v3157 = vlaneseq
    %v3158 = vshrl.u32 %v3157, 7
    %v3159 = vsub.s32 0, %v3158
    %v3160 = vrot.slane %v3128, %v3159
    %v3162 = vmul.f32 %v3154, %v3160
    %v3163 = vmul.f32 %v3155, %v3160
    %v3165 = vlaneseq
    %v3166 = vshrl.u32 %v3165, 7
    %v3167 = vsub.s32 0, %v3166
    %v3168 = vrot.slane %v3129, %v3167
    %v3170 = vadd.f32 %v3162, %v3168
    %v3171 = vadd.f32 %v3163, %v3168
    %v3172 = vpack.c.bf16 %v3171, %v3170
    %v3173 = vld [vmem:[%s55] sm:$0xf]
    %v3174 = vld [vmem:[%s55 + $0x4] sm:$0xf]
    %v3175 = vld [vmem:[%s55 + $0x8] sm:$0xf]
    %v3176 = vld [vmem:[%s55 + $0xc] sm:$0xf]
    %v3177 = vld [vmem:[%s57] sm:$0x1]
    %v3179 = vlaneseq
    %v3180 = vshrl.u32 %v3179, 7
    %v3181 = vsub.s32 0, %v3180
    %v3182 = vrot.slane %v3177, %v3181
    %v3188 = vunpack.c.l.b16 %v3173
    %v3189 = vunpack.c.l.b16 %v3174
    %v3190 = vunpack.c.l.b16 %v3175
    %v3191 = vunpack.c.l.b16 %v3176
    %v3192 = vpack.c.b16 %v3189, %v3188
    %v3193 = vpack.c.b16 %v3191, %v3190
    %v3197 = vsel %vm240, %v3172, 0
    %3199 = vmatprep.subr.bf16.mxu0 0
    %3200 = vmatpush1.bf16.msra.mxu0 %v3192
    %3201 = vmatprep.subr.bf16.mxu0 0
    %3202 = vmatpush1.bf16.msra.mxu0 %v3193
    %3203 = vmatprep.subr.bf16.mxu0 0
    %3204 = vmatpush1.bf16.msra.mxu0 0
    %3205 = vmatprep.subr.bf16.mxu0 0
    %3206 = vmatpush1.bf16.msra.mxu0 0
    %3207 = vmatprep.subr.bf16.mxu0 0
    %3208 = vmatpush1.bf16.msra.mxu0 0
    %3209 = vmatprep.subr.bf16.mxu0 0
    %3210 = vmatpush1.bf16.msra.mxu0 0
    %3211 = vmatprep.subr.bf16.mxu0 0
    %3212 = vmatpush1.bf16.msra.mxu0 0
    %3213 = vmatprep.subr.bf16.mxu0 0
    %3214 = vmatpush1.bf16.msra.mxu0 0
    %3215 = vmatprep.subr.bf16.mxu0 0
    %3216 = vmatpush1.bf16.msra.mxu0 0
    %3217 = vmatprep.subr.bf16.mxu0 0
    %3218 = vmatpush1.bf16.msra.mxu0 0
    %3219 = vmatprep.subr.bf16.mxu0 0
    %3220 = vmatpush1.bf16.msra.mxu0 0
    %3221 = vmatprep.subr.bf16.mxu0 0
    %3222 = vmatpush1.bf16.msra.mxu0 0
    %3223 = vmatprep.subr.bf16.mxu0 0
    %3224 = vmatpush1.bf16.msra.mxu0 0
    %3225 = vmatprep.subr.bf16.mxu0 0
    %3226 = vmatpush1.bf16.msra.mxu0 0
    %3227 = vmatprep.subr.bf16.mxu0 0
    %3228 = vmatpush1.bf16.msra.mxu0 0
    %3229 = vmatprep.subr.bf16.mxu0 0
    %3230 = vmatpush1.bf16.msra.mxu0 0
    %3231 = vmatprep.mubr.bf16.mxu0 0
    %3232 = vmatmul.mubr.bf16.gmra.mrb[0].mxu0 %v3197
    %v3233 = vpop.f32.mrb[0].mxu0
    %v3234 = vadd.f32 %v3182, %v3233
    %v3235 = vpop.f32.mrb[0].mxu0
    %v3236 = vpop.f32.mrb[0].mxu0
    %v3237 = vadd.f32 %v3182, %v3236
    %v3238 = vpop.f32.mrb[0].mxu0
    %3239 = vdwg.mxu0
    %3240 = vst [vmem:[#allocation2] sm:$0xff] %v3234
    %3241 = vst [vmem:[#allocation2 + $0x8] sm:$0xff] %v3237
    // Predicated region
    $region118: #{tpu_custom_call.1} parent=1 // pred_check
      _
    $region119: #{tpu_custom_call.1} parent=1 // pred_check_branch
      %3243 = sbr.rel (0) target = $region121
    $region120: #{tpu_custom_call.1} parent=1 // pred_region
      %s3245 = ssub.s32 256, 256
      %3246 = vsyncadd [#allocation3], %s3245
      %s3247 = sshll.u32 [#allocation2], 4
      %s3248 = int_to_ptr.vmem [resolvable:$true] %s3247
      %3253 = dma.vmem_to_hbm [thread:$0]  %s3248, 256, %s59, [#allocation3], 128, 128, 8
    $region121: #{tpu_custom_call.1} parent=1 // pred_fallthru
      _
    // Predicated region
    $region122: #{tpu_custom_call.1} parent=1 // pred_check
      _
    $region123: #{tpu_custom_call.1} parent=1 // pred_check_branch
      %3255 = sbr.rel (0) target = $region125
    $region124: #{tpu_custom_call.1} parent=1 // pred_region
      %3256 = dma.done [#allocation3], 256
    $region125: #{tpu_custom_call.1} parent=1 // pred_fallthru
      _
    %3257 = vsyncpa [#allocation3], 1

</llo_original>
